<compile_context>
chip_gen: v7x
topology: tpu7x:2x2x1
jax: 0.10.0
libtpu: 0.0.40
codegen_flags: <defaults>
</compile_context>

<pallas_src>
import functools

import jax
import jax.numpy as jnp
from jax import lax
from jax.experimental import pallas as pl
from jax.experimental.pallas import tpu as pltpu


# -----------------------------------------------------------------------------
# Fused kernel: detector head + bbox post-proc + crop-weight gen + crop/resize.
# Refs:
#   x_det_ref : (nb, C*H*W)      image rows for the (folded) detector matmul
#   x_rows_ref: (nb*C, H, W)     image planes for the crop matmuls
#   a_ref     : (C*H*W, 128)     in_resizer folded into detector weight (padded)
#   b_ref     : (1, 128)         detector bias (padded, f32)
#   o_ref     : (nb*C, out, out) cropped + resized faces
# -----------------------------------------------------------------------------
def _cropface_kernel(x_det_ref, x_rows_ref, a_ref, b_ref, o_ref, *,
                     channels, scale, mm_dtype):
    nb = x_det_ref.shape[0]
    C = channels
    H, W = x_rows_ref.shape[1], x_rows_ref.shape[2]
    out_h, out_w = o_ref.shape[1], o_ref.shape[2]

    # ---- 1. detector head (in_resizer already folded into a_ref at init) ----
    logits = jnp.dot(x_det_ref[...], a_ref[...],
                     preferred_element_type=jnp.float32) + b_ref[...]
    preds = jax.nn.sigmoid(logits)                  # (nb, 128); cols 0..4 are real

    # ---- 2. bbox post-processing (mirrors _compute_bboxes) ----
    # Synthetic detector never outputs exactly 1.0, so threshold at 0.5 as the
    # stand-in for `if has_face == 1` (values near 0.5 can flip vs. the reference).
    has_face = (preds[:, 0:1] > 0.5).astype(jnp.float32)        # (nb, 1)
    pa = preds[:, 1:3]                                          # point a = (x, y)
    pb = preds[:, 3:5]                                          # point b = (x, y)
    lo = jnp.minimum(pa, pb)                                    # bboxes.sort(-2)[0]
    hi = jnp.maximum(pa, pb)
    ctr = 0.5 * (lo + hi)
    lo = jnp.maximum((lo - ctr) * scale + ctr, 0.0)             # bboxes[:,0][<0] = 0
    hi = jnp.minimum((hi - ctr) * scale + ctr, 1.0)             # bboxes[:,1][>1] = 1
    # pixel bounds; .long() truncation == floor for non-negative values
    xmin = jnp.floor(lo[:, 0:1] * W)[:, :, None]                # (nb, 1, 1)
    xmax = jnp.floor(hi[:, 0:1] * W)[:, :, None]
    ymin = jnp.floor(lo[:, 1:2] * H)[:, :, None]
    ymax = jnp.floor(hi[:, 1:2] * H)[:, :, None]

    # ---- 3. per-image crop+resize weights, built on the VPU in f32 ----
    # Antialiased triangle filter restricted to the crop window [lo, hi), then
    # renormalized.  Degenerate boxes (lo==hi) give all-zero weights -> zero output.
    # TODO(synk): torchvision crop-then-resize clamps taps at the crop edge
    # (edge replication) instead of dropping + renormalizing; border pixels differ.
    def tri_weights(lo1, hi1, in_len, n_out, out_axis):
        shape = (nb, n_out, in_len) if out_axis == 1 else (nb, in_len, n_out)
        in_axis = 2 if out_axis == 1 else 1
        j = lax.broadcasted_iota(jnp.int32, shape, out_axis).astype(jnp.float32)
        k = lax.broadcasted_iota(jnp.int32, shape, in_axis).astype(jnp.float32)
        step = (hi1 - lo1) / n_out
        support = jnp.maximum(step, 1.0)
        centers = lo1 + (j + 0.5) * step
        w = jnp.maximum(0.0, 1.0 - jnp.abs((k + 0.5 - centers) / support))
        w = w * ((k >= lo1) & (k < hi1)).astype(jnp.float32)
        norm = jnp.maximum(jnp.sum(w, axis=in_axis, keepdims=True), 1e-12)
        return w / norm

    wy = tri_weights(ymin, ymax, H, out_h, out_axis=1)          # (nb, out_h, H)
    wx = tri_weights(xmin, xmax, W, out_w, out_axis=2)          # (nb, W, out_w)  (pre-transposed)
    wy = wy * has_face[:, :, None]          # no face -> zeros(C, out, out), as in torch

    # ---- 4. crop + out_resizer as two batched MXU matmuls (no kron(I_C, Wy)) ----
    x6 = x_rows_ref[...]                                                    # (nb*C, H, W)
    wx6 = jnp.broadcast_to(wx[:, None], (nb, C, W, out_w)).reshape(nb * C, W, out_w)
    wy6 = jnp.broadcast_to(wy[:, None], (nb, C, out_h, H)).reshape(nb * C, out_h, H)
    u = jnp.einsum('bhw,bws->bhs', x6.astype(mm_dtype), wx6.astype(mm_dtype),
                   preferred_element_type=jnp.float32)                      # (nb*C, H, out_w)
    out = jnp.einsum('boh,bhs->bos', wy6.astype(mm_dtype), u.astype(mm_dtype),
                     preferred_element_type=jnp.float32)                    # (nb*C, out_h, out_w)
    o_ref[...] = out.astype(o_ref.dtype)


# -----------------------------------------------------------------------------
# Host-side helpers
# -----------------------------------------------------------------------------
def _host_tri_weights(in_len, out_len):
    """Full-range antialiased triangle resize weights (out_len, in_len), f32."""
    step = in_len / out_len
    support = max(step, 1.0)
    j = jnp.arange(out_len, dtype=jnp.float32)
    k = jnp.arange(in_len, dtype=jnp.float32)
    centers = (j + 0.5) * step
    w = jnp.maximum(0.0, 1.0 - jnp.abs((k[None, :] + 0.5 - centers[:, None]) / support))
    return w / jnp.sum(w, axis=-1, keepdims=True)


def _pick_block_n(n, block_n):
    # `nb` images per grid step.  nb must divide N and, when < N, be a multiple
    # of 8 so the 2-D detector block keeps a legal (8,128)-aligned sublane extent.
    if n <= block_n:
        return n
    for nb in range(block_n, 7, -1):
        if n % nb == 0 and nb % 8 == 0:
            return nb
    return n


class CropFaceJAX:
    """JAX/Pallas port of CropFace.forward with a synthetic linear+sigmoid detector."""

    def __init__(self, det_w, det_b, img_hw, channels=3, in_size=16, out_size=16,
                 scale=1.5, compute_dtype=jnp.bfloat16, block_n=8):
        H, W = img_hw
        C = channels
        self.channels = C
        self.out_size = out_size
        self.scale = float(scale)
        self.compute_dtype = compute_dtype   # matmul-operand dtype; accumulation stays f32
        self.block_n = block_n

        # Fold the (input-independent) in_resizer into the detector weight ONCE:
        #   logits = vec(Resize_in(img)) @ det_w == vec(img) @ A
        #   A[(c,h,w), j] = sum_{o,s} Wy_in[o,h] * Wx_in[s,w] * det_w[(c,o,s), j]
        # This is a one-time algebraic fusion of two static linear maps (not a
        # per-call wrapper op); it removes the in-resize stage and its intermediate.
        wy_in = _host_tri_weights(H, in_size)                          # (in, H)
        wx_in = _host_tri_weights(W, in_size)                          # (in, W)
        n_det = det_w.shape[-1]
        det_w4 = det_w.astype(jnp.float32).reshape(C, in_size, in_size, n_det)
        a = jnp.einsum('oh,sw,cosj->chwj', wy_in, wx_in, det_w4).reshape(C * H * W, n_det)
        jp = 128  # pad detector outputs to a full 128-lane slab (unmasked stores)
        self.a_pad = (jnp.zeros((C * H * W, jp), compute_dtype)
                      .at[:, :n_det].set(a.astype(compute_dtype)))
        self.b_pad = (jnp.zeros((1, jp), jnp.float32)
                      .at[:, :n_det].set(det_b.reshape(1, -1).astype(jnp.float32)))

    def __call__(self, imgs):
        # TODO(synk): at production image sizes (e.g. 256x256) tile H/W inside the
        # step (separable in-resize instead of the folded operator) and shrink nb so
        # the per-step working set respects v7x's 64 MiB VMEM / 32 MiB scoped default.
        N, C, H, W = imgs.shape
        assert C == self.channels
        out_s = self.out_size
        nb = _pick_block_n(N, self.block_n)
        chw = C * H * W

        imgs_c = imgs.astype(self.compute_dtype)   # cast the image path once (halves DMA)
        x_det = imgs_c.reshape(N, chw)             # rows for the folded detector matmul
        x_rows = imgs_c.reshape(N * C, H, W)       # planes for the crop matmuls

        flops = 2 * N * chw * 128 + 2 * N * C * (H * W * out_s + out_s * H * out_s)
        bytes_acc = int(2 * x_det.size * x_det.dtype.itemsize
                        + self.a_pad.size * self.a_pad.dtype.itemsize
                        + self.b_pad.size * 4
                        + N * C * out_s * out_s * imgs.dtype.itemsize)

        out = pl.pallas_call(
            functools.partial(_cropface_kernel, channels=C, scale=self.scale,
                              mm_dtype=self.compute_dtype),
            out_shape=jax.ShapeDtypeStruct((N * C, out_s, out_s), imgs.dtype),
            grid=(N // nb,),
            in_specs=[
                pl.BlockSpec((nb, chw), lambda i: (i, 0)),
                pl.BlockSpec((nb * C, H, W), lambda i: (i, 0, 0)),
                pl.BlockSpec((chw, 128), lambda i: (0, 0)),   # resident across steps
                pl.BlockSpec((1, 128), lambda i: (0, 0)),     # resident across steps
            ],
            out_specs=pl.BlockSpec((nb * C, out_s, out_s), lambda i: (i, 0, 0)),
            compiler_params=pltpu.CompilerParams(
                dimension_semantics=("parallel",)),           # v7x: steps shard across TCs
            cost_estimate=pl.CostEstimate(flops=int(flops),
                                          transcendentals=int(N * 128),
                                          bytes_accessed=bytes_acc),
        )(x_det, x_rows, self.a_pad, self.b_pad)
        return out.reshape(N, C, out_s, out_s)


if __name__ == "__main__":
    N, C, H, W = 2, 3, 32, 32
    IN_SIZE, OUT_SIZE = 16, 16

    key = jax.random.PRNGKey(0)
    imgs = jax.random.uniform(key, (N, C, H, W), dtype=jnp.float32)

    # deterministic synthetic face-detector parameters (linear + sigmoid head)
    K = C * IN_SIZE * IN_SIZE
    det_w = jax.random.normal(jax.random.PRNGKey(1), (K, 5), dtype=jnp.float32) * 0.02
    det_b = jnp.array([[2.0, -1.0, -1.0, 1.0, 1.0]], dtype=jnp.float32)

    model = CropFaceJAX(det_w, det_b, img_hw=(H, W), channels=C,
                        in_size=IN_SIZE, out_size=OUT_SIZE, scale=1.5)
    out = jax.jit(model.__call__)(imgs)
    jax.block_until_ready(out)
    assert out.shape == (N, C, OUT_SIZE, OUT_SIZE), out.shape
    assert out.dtype == imgs.dtype
    assert bool(jnp.all(jnp.isfinite(out)))
    print("KERNEL_OK")
</pallas_src>

<mosaic_0001>
module attributes {stable_mosaic.version = 11 : i64} {
  func.func @_cropface_kernel(%arg0: i32, %arg1: memref<2x3072xbf16, #tpu.memory_space<vmem>>, %arg2: memref<6x32x32xbf16, #tpu.memory_space<vmem>>, %arg3: memref<3072x128xbf16, #tpu.memory_space<vmem>>, %arg4: memref<1x128xf32, #tpu.memory_space<vmem>>, %arg5: memref<6x16x16xf32, #tpu.memory_space<vmem>>) attributes {dimension_semantics = [#tpu.dimension_semantics<parallel>], iteration_bounds = array<i64: 1>, scalar_prefetch = 0 : i64, scratch_operands = 0 : i64, tpu.core_type = #tpu.core_type<tc>, window_params = [{transform_indices = @transform_0, window_bounds = array<i64: 2, 3072>}, {transform_indices = @transform_1, window_bounds = array<i64: 6, 32, 32>}, {pipeline_mode = #tpu.pipeline_mode<synchronous>, transform_indices = @transform_2, window_bounds = array<i64: 3072, 128>}, {pipeline_mode = #tpu.pipeline_mode<synchronous>, transform_indices = @transform_3, window_bounds = array<i64: 1, 128>}, {transform_indices = @transform_4, window_bounds = array<i64: 6, 16, 16>}]} {
    %c0 = arith.constant 0 : index
    %c0_0 = arith.constant 0 : index
    %0 = vector.load %arg1[%c0, %c0_0] : memref<2x3072xbf16, #tpu.memory_space<vmem>>, vector<2x3072xbf16>
    %c0_1 = arith.constant 0 : index
    %c0_2 = arith.constant 0 : index
    %1 = vector.load %arg3[%c0_1, %c0_2] : memref<3072x128xbf16, #tpu.memory_space<vmem>>, vector<3072x128xbf16>
    %cst = arith.constant dense<0.000000e+00> : vector<2x128xf32>
    %2 = tpu.matmul %0, %1, %cst {dimension_numbers = #tpu.dot_dimension_numbers<[1], [0], [0], [1], [0, 0, 1, 1], [], []>} : vector<2x3072xbf16>, vector<3072x128xbf16>, vector<2x128xf32> -> vector<2x128xf32>
    %c0_3 = arith.constant 0 : index
    %c0_4 = arith.constant 0 : index
    %3 = vector.load %arg4[%c0_3, %c0_4] : memref<1x128xf32, #tpu.memory_space<vmem>>, vector<1x128xf32>
    %4 = vector.broadcast %3 : vector<1x128xf32> to vector<2x128xf32>
    %5 = arith.addf %2, %4 : vector<2x128xf32>
    %6 = arith.negf %5 : vector<2x128xf32>
    %7 = math.exp %6 : vector<2x128xf32>
    %cst_5 = arith.constant 1.000000e+00 : f32
    %8 = vector.broadcast %cst_5 : f32 to vector<2x128xf32>
    %9 = arith.addf %8, %7 : vector<2x128xf32>
    %10 = arith.divf %8, %9 : vector<2x128xf32>
    %11 = vector.extract_strided_slice %10 {offsets = [0, 0], sizes = [2, 1], strides = [1, 1]} : vector<2x128xf32> to vector<2x1xf32>
    %cst_6 = arith.constant 5.000000e-01 : f32
    %12 = vector.broadcast %cst_6 : f32 to vector<2x1xf32>
    %13 = arith.cmpf ogt, %11, %12 : vector<2x1xf32>
    %14 = arith.extui %13 : vector<2x1xi1> to vector<2x1xi32>
    %15 = arith.sitofp %14 : vector<2x1xi32> to vector<2x1xf32>
    %16 = vector.extract_strided_slice %10 {offsets = [0, 1], sizes = [2, 2], strides = [1, 1]} : vector<2x128xf32> to vector<2x2xf32>
    %17 = vector.extract_strided_slice %10 {offsets = [0, 3], sizes = [2, 2], strides = [1, 1]} : vector<2x128xf32> to vector<2x2xf32>
    %18 = arith.minimumf %16, %17 : vector<2x2xf32>
    %19 = arith.maximumf %16, %17 : vector<2x2xf32>
    %20 = arith.addf %18, %19 : vector<2x2xf32>
    %cst_7 = arith.constant 5.000000e-01 : f32
    %21 = vector.broadcast %cst_7 : f32 to vector<2x2xf32>
    %22 = arith.mulf %21, %20 : vector<2x2xf32>
    %23 = arith.subf %18, %22 : vector<2x2xf32>
    %cst_8 = arith.constant 1.500000e+00 : f32
    %24 = vector.broadcast %cst_8 : f32 to vector<2x2xf32>
    %25 = arith.mulf %23, %24 : vector<2x2xf32>
    %26 = arith.addf %25, %22 : vector<2x2xf32>
    %cst_9 = arith.constant 0.000000e+00 : f32
    %27 = vector.broadcast %cst_9 : f32 to vector<2x2xf32>
    %28 = arith.maximumf %26, %27 : vector<2x2xf32>
    %29 = arith.subf %19, %22 : vector<2x2xf32>
    %cst_10 = arith.constant 1.500000e+00 : f32
    %30 = vector.broadcast %cst_10 : f32 to vector<2x2xf32>
    %31 = arith.mulf %29, %30 : vector<2x2xf32>
    %32 = arith.addf %31, %22 : vector<2x2xf32>
    %cst_11 = arith.constant 1.000000e+00 : f32
    %33 = vector.broadcast %cst_11 : f32 to vector<2x2xf32>
    %34 = arith.minimumf %32, %33 : vector<2x2xf32>
    %35 = vector.extract_strided_slice %28 {offsets = [0, 0], sizes = [2, 1], strides = [1, 1]} : vector<2x2xf32> to vector<2x1xf32>
    %cst_12 = arith.constant 3.200000e+01 : f32
    %36 = vector.broadcast %cst_12 : f32 to vector<2x1xf32>
    %37 = arith.mulf %35, %36 : vector<2x1xf32>
    %38 = math.floor %37 : vector<2x1xf32>
    %39 = vector.shape_cast %38 : vector<2x1xf32> to vector<2x1x1xf32>
    %40 = vector.extract_strided_slice %34 {offsets = [0, 0], sizes = [2, 1], strides = [1, 1]} : vector<2x2xf32> to vector<2x1xf32>
    %cst_13 = arith.constant 3.200000e+01 : f32
    %41 = vector.broadcast %cst_13 : f32 to vector<2x1xf32>
    %42 = arith.mulf %40, %41 : vector<2x1xf32>
    %43 = math.floor %42 : vector<2x1xf32>
    %44 = vector.shape_cast %43 : vector<2x1xf32> to vector<2x1x1xf32>
    %45 = vector.extract_strided_slice %28 {offsets = [0, 1], sizes = [2, 1], strides = [1, 1]} : vector<2x2xf32> to vector<2x1xf32>
    %cst_14 = arith.constant 3.200000e+01 : f32
    %46 = vector.broadcast %cst_14 : f32 to vector<2x1xf32>
    %47 = arith.mulf %45, %46 : vector<2x1xf32>
    %48 = math.floor %47 : vector<2x1xf32>
    %49 = vector.shape_cast %48 : vector<2x1xf32> to vector<2x1x1xf32>
    %50 = vector.extract_strided_slice %34 {offsets = [0, 1], sizes = [2, 1], strides = [1, 1]} : vector<2x2xf32> to vector<2x1xf32>
    %cst_15 = arith.constant 3.200000e+01 : f32
    %51 = vector.broadcast %cst_15 : f32 to vector<2x1xf32>
    %52 = arith.mulf %50, %51 : vector<2x1xf32>
    %53 = math.floor %52 : vector<2x1xf32>
    %54 = vector.shape_cast %53 : vector<2x1xf32> to vector<2x1x1xf32>
    %55 = tpu.iota {dimensions = array<i32: 1>} : vector<2x16x32xi32>
    %56 = arith.sitofp %55 : vector<2x16x32xi32> to vector<2x16x32xf32>
    %57 = tpu.iota {dimensions = array<i32: 2>} : vector<2x16x32xi32>
    %58 = arith.sitofp %57 : vector<2x16x32xi32> to vector<2x16x32xf32>
    %59 = arith.subf %54, %49 : vector<2x1x1xf32>
    %cst_16 = arith.constant 1.600000e+01 : f32
    %60 = vector.broadcast %cst_16 : f32 to vector<2x1x1xf32>
    %61 = arith.divf %59, %60 : vector<2x1x1xf32>
    %cst_17 = arith.constant 1.000000e+00 : f32
    %62 = vector.broadcast %cst_17 : f32 to vector<2x1x1xf32>
    %63 = arith.maximumf %61, %62 : vector<2x1x1xf32>
    %cst_18 = arith.constant 5.000000e-01 : f32
    %64 = vector.broadcast %cst_18 : f32 to vector<2x16x32xf32>
    %65 = arith.addf %56, %64 : vector<2x16x32xf32>
    %66 = vector.broadcast %61 : vector<2x1x1xf32> to vector<2x16x32xf32>
    %67 = arith.mulf %65, %66 : vector<2x16x32xf32>
    %68 = vector.broadcast %49 : vector<2x1x1xf32> to vector<2x16x32xf32>
    %69 = arith.addf %68, %67 : vector<2x16x32xf32>
    %cst_19 = arith.constant 5.000000e-01 : f32
    %70 = vector.broadcast %cst_19 : f32 to vector<2x16x32xf32>
    %71 = arith.addf %58, %70 : vector<2x16x32xf32>
    %72 = arith.subf %71, %69 : vector<2x16x32xf32>
    %73 = vector.broadcast %63 : vector<2x1x1xf32> to vector<2x16x32xf32>
    %74 = arith.divf %72, %73 : vector<2x16x32xf32>
    %75 = math.absf %74 : vector<2x16x32xf32>
    %cst_20 = arith.constant 1.000000e+00 : f32
    %76 = vector.broadcast %cst_20 : f32 to vector<2x16x32xf32>
    %77 = arith.subf %76, %75 : vector<2x16x32xf32>
    %cst_21 = arith.constant 0.000000e+00 : f32
    %78 = vector.broadcast %cst_21 : f32 to vector<2x16x32xf32>
    %79 = arith.maximumf %78, %77 : vector<2x16x32xf32>
    %80 = vector.broadcast %49 : vector<2x1x1xf32> to vector<2x16x32xf32>
    %81 = arith.cmpf oge, %58, %80 : vector<2x16x32xf32>
    %82 = vector.broadcast %54 : vector<2x1x1xf32> to vector<2x16x32xf32>
    %83 = arith.cmpf olt, %58, %82 : vector<2x16x32xf32>
    %84 = arith.andi %81, %83 : vector<2x16x32xi1>
    %85 = arith.extui %84 : vector<2x16x32xi1> to vector<2x16x32xi32>
    %86 = arith.sitofp %85 : vector<2x16x32xi32> to vector<2x16x32xf32>
    %87 = arith.mulf %79, %86 : vector<2x16x32xf32>
    %cst_22 = arith.constant dense<0.000000e+00> : vector<2x16xf32>
    %88 = vector.multi_reduction <add>, %87, %cst_22 [2] : vector<2x16x32xf32> to vector<2x16xf32>
    %89 = vector.shape_cast %88 : vector<2x16xf32> to vector<2x16x1xf32>
    %cst_23 = arith.constant 9.99999996E-13 : f32
    %90 = vector.broadcast %cst_23 : f32 to vector<2x16x1xf32>
    %91 = arith.maximumf %89, %90 : vector<2x16x1xf32>
    %92 = vector.broadcast %91 : vector<2x16x1xf32> to vector<2x16x32xf32>
    %93 = arith.divf %87, %92 : vector<2x16x32xf32>
    %94 = tpu.iota {dimensions = array<i32: 2>} : vector<2x32x16xi32>
    %95 = arith.sitofp %94 : vector<2x32x16xi32> to vector<2x32x16xf32>
    %96 = tpu.iota {dimensions = array<i32: 1>} : vector<2x32x16xi32>
    %97 = arith.sitofp %96 : vector<2x32x16xi32> to vector<2x32x16xf32>
    %98 = arith.subf %44, %39 : vector<2x1x1xf32>
    %cst_24 = arith.constant 1.600000e+01 : f32
    %99 = vector.broadcast %cst_24 : f32 to vector<2x1x1xf32>
    %100 = arith.divf %98, %99 : vector<2x1x1xf32>
    %cst_25 = arith.constant 1.000000e+00 : f32
    %101 = vector.broadcast %cst_25 : f32 to vector<2x1x1xf32>
    %102 = arith.maximumf %100, %101 : vector<2x1x1xf32>
    %cst_26 = arith.constant 5.000000e-01 : f32
    %103 = vector.broadcast %cst_26 : f32 to vector<2x32x16xf32>
    %104 = arith.addf %95, %103 : vector<2x32x16xf32>
    %105 = vector.broadcast %100 : vector<2x1x1xf32> to vector<2x32x16xf32>
    %106 = arith.mulf %104, %105 : vector<2x32x16xf32>
    %107 = vector.broadcast %39 : vector<2x1x1xf32> to vector<2x32x16xf32>
    %108 = arith.addf %107, %106 : vector<2x32x16xf32>
    %cst_27 = arith.constant 5.000000e-01 : f32
    %109 = vector.broadcast %cst_27 : f32 to vector<2x32x16xf32>
    %110 = arith.addf %97, %109 : vector<2x32x16xf32>
    %111 = arith.subf %110, %108 : vector<2x32x16xf32>
    %112 = vector.broadcast %102 : vector<2x1x1xf32> to vector<2x32x16xf32>
    %113 = arith.divf %111, %112 : vector<2x32x16xf32>
    %114 = math.absf %113 : vector<2x32x16xf32>
    %cst_28 = arith.constant 1.000000e+00 : f32
    %115 = vector.broadcast %cst_28 : f32 to vector<2x32x16xf32>
    %116 = arith.subf %115, %114 : vector<2x32x16xf32>
    %cst_29 = arith.constant 0.000000e+00 : f32
    %117 = vector.broadcast %cst_29 : f32 to vector<2x32x16xf32>
    %118 = arith.maximumf %117, %116 : vector<2x32x16xf32>
    %119 = vector.broadcast %39 : vector<2x1x1xf32> to vector<2x32x16xf32>
    %120 = arith.cmpf oge, %97, %119 : vector<2x32x16xf32>
    %121 = vector.broadcast %44 : vector<2x1x1xf32> to vector<2x32x16xf32>
    %122 = arith.cmpf olt, %97, %121 : vector<2x32x16xf32>
    %123 = arith.andi %120, %122 : vector<2x32x16xi1>
    %124 = arith.extui %123 : vector<2x32x16xi1> to vector<2x32x16xi32>
    %125 = arith.sitofp %124 : vector<2x32x16xi32> to vector<2x32x16xf32>
    %126 = arith.mulf %118, %125 : vector<2x32x16xf32>
    %cst_30 = arith.constant dense<0.000000e+00> : vector<2x16xf32>
    %127 = vector.multi_reduction <add>, %126, %cst_30 [1] : vector<2x32x16xf32> to vector<2x16xf32>
    %128 = vector.shape_cast %127 : vector<2x16xf32> to vector<2x1x16xf32>
    %cst_31 = arith.constant 9.99999996E-13 : f32
    %129 = vector.broadcast %cst_31 : f32 to vector<2x1x16xf32>
    %130 = arith.maximumf %128, %129 : vector<2x1x16xf32>
    %131 = vector.broadcast %130 : vector<2x1x16xf32> to vector<2x32x16xf32>
    %132 = arith.divf %126, %131 : vector<2x32x16xf32>
    %133 = vector.shape_cast %15 : vector<2x1xf32> to vector<2x1x1xf32>
    %134 = vector.broadcast %133 : vector<2x1x1xf32> to vector<2x16x32xf32>
    %135 = arith.mulf %93, %134 : vector<2x16x32xf32>
    %c0_32 = arith.constant 0 : index
    %c0_33 = arith.constant 0 : index
    %c0_34 = arith.constant 0 : index
    %136 = vector.load %arg2[%c0_32, %c0_33, %c0_34] : memref<6x32x32xbf16, #tpu.memory_space<vmem>>, vector<6x32x32xbf16>
    %137 = vector.shape_cast %132 : vector<2x32x16xf32> to vector<2x1x32x16xf32>
    %138 = vector.shape_cast %137 : vector<2x1x32x16xf32> to vector<2x1x32x16xf32>
    %139 = vector.broadcast %138 : vector<2x1x32x16xf32> to vector<2x3x32x16xf32>
    %140 = vector.shape_cast %139 : vector<2x3x32x16xf32> to vector<6x32x16xf32>
    %141 = vector.shape_cast %135 : vector<2x16x32xf32> to vector<2x1x16x32xf32>
    %142 = vector.shape_cast %141 : vector<2x1x16x32xf32> to vector<2x1x16x32xf32>
    %143 = vector.broadcast %142 : vector<2x1x16x32xf32> to vector<2x3x16x32xf32>
    %144 = vector.shape_cast %143 : vector<2x3x16x32xf32> to vector<6x16x32xf32>
    %145 = arith.truncf %140 : vector<6x32x16xf32> to vector<6x32x16xbf16>
    "tpu.trace_start"() <{level = 10 : i32, message = "bhw,bws->bhs"}> : () -> ()
    %cst_35 = arith.constant dense<0.000000e+00> : vector<6x32x16xf32>
    %146 = tpu.matmul %136, %145, %cst_35 {dimension_numbers = #tpu.dot_dimension_numbers<[2], [1], [1], [2], [0, 0, 0, 1, 1, 2], [0], [0]>} : vector<6x32x32xbf16>, vector<6x32x16xbf16>, vector<6x32x16xf32> -> vector<6x32x16xf32>
    "tpu.trace_stop"() : () -> ()
    %147 = arith.truncf %144 : vector<6x16x32xf32> to vector<6x16x32xbf16>
    %148 = arith.truncf %146 : vector<6x32x16xf32> to vector<6x32x16xbf16>
    "tpu.trace_start"() <{level = 10 : i32, message = "boh,bhs->bos"}> : () -> ()
    %cst_36 = arith.constant dense<0.000000e+00> : vector<6x16x16xf32>
    %149 = tpu.matmul %147, %148, %cst_36 {dimension_numbers = #tpu.dot_dimension_numbers<[2], [1], [1], [2], [0, 0, 0, 1, 1, 2], [0], [0]>} : vector<6x16x32xbf16>, vector<6x32x16xbf16>, vector<6x16x16xf32> -> vector<6x16x16xf32>
    "tpu.trace_stop"() : () -> ()
    %c0_37 = arith.constant 0 : index
    %c0_38 = arith.constant 0 : index
    %c0_39 = arith.constant 0 : index
    %150 = vector.load %arg5[%c0_37, %c0_38, %c0_39] : memref<6x16x16xf32, #tpu.memory_space<vmem>>, vector<6x16x16xf32>
    tpu.vector_store %arg5[%c0_37, %c0_38, %c0_39], %149 {strides = array<i32>} : memref<6x16x16xf32, #tpu.memory_space<vmem>>, vector<6x16x16xf32>,
    return
  }
  func.func @transform_0(%arg0: i32) -> (i32, i32) {
    %c0_i32 = arith.constant 0 : i32
    %c0_i32_0 = arith.constant 0 : i32
    return %arg0, %c0_i32 : i32, i32
  }
  func.func @transform_1(%arg0: i32) -> (i32, i32, i32) {
    %c0_i32 = arith.constant 0 : i32
    %c0_i32_0 = arith.constant 0 : i32
    %c0_i32_1 = arith.constant 0 : i32
    return %arg0, %c0_i32, %c0_i32_0 : i32, i32, i32
  }
  func.func @transform_2(%arg0: i32) -> (i32, i32) {
    %c0_i32 = arith.constant 0 : i32
    %c0_i32_0 = arith.constant 0 : i32
    %c0_i32_1 = arith.constant 0 : i32
    return %c0_i32, %c0_i32_0 : i32, i32
  }
  func.func @transform_3(%arg0: i32) -> (i32, i32) {
    %c0_i32 = arith.constant 0 : i32
    %c0_i32_0 = arith.constant 0 : i32
    %c0_i32_1 = arith.constant 0 : i32
    return %c0_i32, %c0_i32_0 : i32, i32
  }
  func.func @transform_4(%arg0: i32) -> (i32, i32, i32) {
    %c0_i32 = arith.constant 0 : i32
    %c0_i32_0 = arith.constant 0 : i32
    %c0_i32_1 = arith.constant 0 : i32
    return %arg0, %c0_i32, %c0_i32_0 : i32, i32, i32
  }
}

</mosaic_0001>

<llo_original>
// kernel: a_call__.1
$region0: #{a_call__.1}
  #allocation0 [shape = 'u32[]', space=smem, size = 0x4, offset = 0x4, fixed_abs, tag = 'smem constant byte address 0x4 - core index']
  #allocation1 [shape = 'u32[144,128]{1,0:T(1,128)}', space=vmem, size = 0x12000, scoped, tag = 'internal scratch']
  %s0 = inlined_call_operand.vmem [shape: bf16[2,3072], index: 0, kind: input, shape index: {}]
  %s1 = inlined_call_operand.vmem [shape: bf16[6,32,32], index: 1, kind: input, shape index: {}]
  %s2 = inlined_call_operand.hbm [shape: bf16[3072,128], index: 2, kind: input, shape index: {}]
  %s3 = inlined_call_operand.vmem [shape: f32[1,128], index: 3, kind: input, shape index: {}]
  %s4 = inlined_call_operand.hbm [shape: f32[6,16,16], index: 4, kind: output, shape index: {}]
  %s5 = sld [smem:[#allocation0]]
  $region30: #{a_call__.1} parent=0
    _
  %s7 = ssub.s32 1, %s5
  %s8 = scalar_select 0, %s7, %s5
  $region1: #{a_call__.1} parent=0
    #allocation2 [shape = 'u8[786432]{0}', space=vmem, size = 0xc0000, scoped, tag = 'input window, operand 2, single buffered']
    #allocation3 [shape = 's32[1]{0}', space=sflag, size = 0x4, scoped, tag = 'scoped memory for a_call__.1']
    #allocation4 [shape = 's32[1]{0}', space=sflag, size = 0x4, scoped, tag = 'scoped memory for a_call__.1']
    #allocation5 [shape = 'u8[49152]{0}', space=vmem, size = 0xc000, scoped, tag = 'output window, operand 0, single buffered']
    %9 = vsyncpa [#allocation3], 0
    %10 = vsyncpa [#allocation4], 0
    // Predicated region
    $region2: #{a_call__.1} parent=1 // pred_check
      _
    $region3: #{a_call__.1} parent=1 // pred_check_branch
      %12 = sbr.rel (0) target = $region5
    $region4: #{a_call__.1} parent=1 // pred_region
      _
    $region5: #{a_call__.1} parent=1 // pred_fallthru
      _
    // Predicated region
    $region6: #{a_call__.1} parent=1 // pred_check
      _
    $region7: #{a_call__.1} parent=1 // pred_check_branch
      %14 = sbr.rel (0) target = $region9
    $region8: #{a_call__.1} parent=1 // pred_region
      _
    $region9: #{a_call__.1} parent=1 // pred_fallthru
      _
    // Predicated region
    $region10: #{a_call__.1} parent=1 // pred_check
      _
    $region11: #{a_call__.1} parent=1 // pred_check_branch
      %16 = sbr.rel (0) target = $region13
    $region12: #{a_call__.1} parent=1 // pred_region
      %s18 = ssub.s32 24576, 24576
      %19 = vsyncadd [#allocation3], %s18
      %s20 = sshll.u32 [#allocation2], 4
      %s21 = int_to_ptr.vmem [resolvable:$true] %s20
      %26 = dma.hbm_to_vmem [thread:$0]  %s2, 24576, %s21, [#allocation3], 64, 64, 4
    $region13: #{a_call__.1} parent=1 // pred_fallthru
      _
    // Predicated region
    $region14: #{a_call__.1} parent=1 // pred_check
      _
    $region15: #{a_call__.1} parent=1 // pred_check_branch
      %28 = sbr.rel (0) target = $region17
    $region16: #{a_call__.1} parent=1 // pred_region
      _
    $region17: #{a_call__.1} parent=1 // pred_fallthru
      _
    // Predicated region
    $region18: #{a_call__.1} parent=1 // pred_check
      _
    $region19: #{a_call__.1} parent=1 // pred_check_branch
      %30 = sbr.rel (0) target = $region21
    $region20: #{a_call__.1} parent=1 // pred_region
      %31 = dma.done [#allocation3], 24576
    $region21: #{a_call__.1} parent=1 // pred_fallthru
      _
    %v33 = vld [vmem:[%s0] sm:$0xff]
    %v34 = vld [vmem:[%s0 + $0x8] sm:$0xff]
    %v35 = vld [vmem:[%s0 + $0x10] sm:$0xff]
    %v36 = vld [vmem:[#allocation2] sm:$0xf]
    %v37 = vld [vmem:[#allocation2 + $0x4] sm:$0xf]
    %v38 = vld [vmem:[#allocation2 + $0x8] sm:$0xf]
    %v39 = vld [vmem:[#allocation2 + $0xc] sm:$0xf]
    %v40 = vld [vmem:[#allocation2 + $0x10] sm:$0xf]
    %v41 = vld [vmem:[#allocation2 + $0x14] sm:$0xf]
    %v42 = vld [vmem:[#allocation2 + $0x18] sm:$0xf]
    %v43 = vld [vmem:[#allocation2 + $0x1c] sm:$0xf]
    %v44 = vld [vmem:[#allocation2 + $0x20] sm:$0xf]
    %v45 = vld [vmem:[#allocation2 + $0x24] sm:$0xf]
    %v46 = vld [vmem:[#allocation2 + $0x28] sm:$0xf]
    %v47 = vld [vmem:[#allocation2 + $0x2c] sm:$0xf]
    %v48 = vld [vmem:[#allocation2 + $0x30] sm:$0xf]
    %v49 = vld [vmem:[#allocation2 + $0x34] sm:$0xf]
    %v50 = vld [vmem:[#allocation2 + $0x38] sm:$0xf]
    %v51 = vld [vmem:[#allocation2 + $0x3c] sm:$0xf]
    %v52 = vld [vmem:[#allocation2 + $0x40] sm:$0xf]
    %v53 = vld [vmem:[#allocation2 + $0x44] sm:$0xf]
    %v54 = vld [vmem:[#allocation2 + $0x48] sm:$0xf]
    %v55 = vld [vmem:[#allocation2 + $0x4c] sm:$0xf]
    %v56 = vld [vmem:[#allocation2 + $0x50] sm:$0xf]
    %v57 = vld [vmem:[#allocation2 + $0x54] sm:$0xf]
    %v58 = vld [vmem:[#allocation2 + $0x58] sm:$0xf]
    %v59 = vld [vmem:[#allocation2 + $0x5c] sm:$0xf]
    %v60 = vld [vmem:[#allocation2 + $0x60] sm:$0xf]
    %v61 = vld [vmem:[#allocation2 + $0x64] sm:$0xf]
    %v62 = vld [vmem:[#allocation2 + $0x68] sm:$0xf]
    %v63 = vld [vmem:[#allocation2 + $0x6c] sm:$0xf]
    %v64 = vld [vmem:[#allocation2 + $0x70] sm:$0xf]
    %v65 = vld [vmem:[#allocation2 + $0x74] sm:$0xf]
    %v66 = vld [vmem:[#allocation2 + $0x78] sm:$0xf]
    %v67 = vld [vmem:[#allocation2 + $0x7c] sm:$0xf]
    %v68 = vld [vmem:[#allocation2 + $0x80] sm:$0xf]
    %v69 = vld [vmem:[#allocation2 + $0x84] sm:$0xf]
    %v70 = vld [vmem:[#allocation2 + $0x88] sm:$0xf]
    %v71 = vld [vmem:[#allocation2 + $0x8c] sm:$0xf]
    %v72 = vld [vmem:[#allocation2 + $0x90] sm:$0xf]
    %v73 = vld [vmem:[#allocation2 + $0x94] sm:$0xf]
    %v74 = vld [vmem:[#allocation2 + $0x98] sm:$0xf]
    %v75 = vld [vmem:[#allocation2 + $0x9c] sm:$0xf]
    %v76 = vld [vmem:[#allocation2 + $0xa0] sm:$0xf]
    %v77 = vld [vmem:[#allocation2 + $0xa4] sm:$0xf]
    %v78 = vld [vmem:[#allocation2 + $0xa8] sm:$0xf]
    %v79 = vld [vmem:[#allocation2 + $0xac] sm:$0xf]
    %v80 = vld [vmem:[#allocation2 + $0xb0] sm:$0xf]
    %v81 = vld [vmem:[#allocation2 + $0xb4] sm:$0xf]
    %v82 = vld [vmem:[#allocation2 + $0xb8] sm:$0xf]
    %v83 = vld [vmem:[#allocation2 + $0xbc] sm:$0xf]
    %v84 = vld [vmem:[#allocation2 + $0xc0] sm:$0xf]
    %v85 = vld [vmem:[#allocation2 + $0xc4] sm:$0xf]
    %v86 = vld [vmem:[#allocation2 + $0xc8] sm:$0xf]
    %v87 = vld [vmem:[#allocation2 + $0xcc] sm:$0xf]
    %v88 = vld [vmem:[#allocation2 + $0xd0] sm:$0xf]
    %v89 = vld [vmem:[#allocation2 + $0xd4] sm:$0xf]
    %v90 = vld [vmem:[#allocation2 + $0xd8] sm:$0xf]
    %v91 = vld [vmem:[#allocation2 + $0xdc] sm:$0xf]
    %v92 = vld [vmem:[#allocation2 + $0xe0] sm:$0xf]
    %v93 = vld [vmem:[#allocation2 + $0xe4] sm:$0xf]
    %v94 = vld [vmem:[#allocation2 + $0xe8] sm:$0xf]
    %v95 = vld [vmem:[#allocation2 + $0xec] sm:$0xf]
    %v96 = vld [vmem:[#allocation2 + $0xf0] sm:$0xf]
    %v97 = vld [vmem:[#allocation2 + $0xf4] sm:$0xf]
    %v98 = vld [vmem:[#allocation2 + $0xf8] sm:$0xf]
    %v99 = vld [vmem:[#allocation2 + $0xfc] sm:$0xf]
    %v100 = vld [vmem:[#allocation2 + $0x100] sm:$0xf]
    %v101 = vld [vmem:[#allocation2 + $0x104] sm:$0xf]
    %v102 = vld [vmem:[#allocation2 + $0x108] sm:$0xf]
    %v103 = vld [vmem:[#allocation2 + $0x10c] sm:$0xf]
    %v104 = vld [vmem:[#allocation2 + $0x110] sm:$0xf]
    %v105 = vld [vmem:[#allocation2 + $0x114] sm:$0xf]
    %v106 = vld [vmem:[#allocation2 + $0x118] sm:$0xf]
    %v107 = vld [vmem:[#allocation2 + $0x11c] sm:$0xf]
    %v108 = vld [vmem:[#allocation2 + $0x120] sm:$0xf]
    %v109 = vld [vmem:[#allocation2 + $0x124] sm:$0xf]
    %v110 = vld [vmem:[#allocation2 + $0x128] sm:$0xf]
    %v111 = vld [vmem:[#allocation2 + $0x12c] sm:$0xf]
    %v112 = vld [vmem:[#allocation2 + $0x130] sm:$0xf]
    %v113 = vld [vmem:[#allocation2 + $0x134] sm:$0xf]
    %v114 = vld [vmem:[#allocation2 + $0x138] sm:$0xf]
    %v115 = vld [vmem:[#allocation2 + $0x13c] sm:$0xf]
    %v116 = vld [vmem:[#allocation2 + $0x140] sm:$0xf]
    %v117 = vld [vmem:[#allocation2 + $0x144] sm:$0xf]
    %v118 = vld [vmem:[#allocation2 + $0x148] sm:$0xf]
    %v119 = vld [vmem:[#allocation2 + $0x14c] sm:$0xf]
    %v120 = vld [vmem:[#allocation2 + $0x150] sm:$0xf]
    %v121 = vld [vmem:[#allocation2 + $0x154] sm:$0xf]
    %v122 = vld [vmem:[#allocation2 + $0x158] sm:$0xf]
    %v123 = vld [vmem:[#allocation2 + $0x15c] sm:$0xf]
    %v124 = vld [vmem:[#allocation2 + $0x160] sm:$0xf]
    %v125 = vld [vmem:[#allocation2 + $0x164] sm:$0xf]
    %v126 = vld [vmem:[#allocation2 + $0x168] sm:$0xf]
    %v127 = vld [vmem:[#allocation2 + $0x16c] sm:$0xf]
    %v128 = vld [vmem:[#allocation2 + $0x170] sm:$0xf]
    %v129 = vld [vmem:[#allocation2 + $0x174] sm:$0xf]
    %v130 = vld [vmem:[#allocation2 + $0x178] sm:$0xf]
    %v131 = vld [vmem:[#allocation2 + $0x17c] sm:$0xf]
    %v132 = vld [vmem:[#allocation2 + $0x180] sm:$0xf]
    %v133 = vld [vmem:[#allocation2 + $0x184] sm:$0xf]
    %v134 = vld [vmem:[#allocation2 + $0x188] sm:$0xf]
    %v135 = vld [vmem:[#allocation2 + $0x18c] sm:$0xf]
    %v136 = vld [vmem:[#allocation2 + $0x190] sm:$0xf]
    %v137 = vld [vmem:[#allocation2 + $0x194] sm:$0xf]
    %v138 = vld [vmem:[#allocation2 + $0x198] sm:$0xf]
    %v139 = vld [vmem:[#allocation2 + $0x19c] sm:$0xf]
    %v140 = vld [vmem:[#allocation2 + $0x1a0] sm:$0xf]
    %v141 = vld [vmem:[#allocation2 + $0x1a4] sm:$0xf]
    %v142 = vld [vmem:[#allocation2 + $0x1a8] sm:$0xf]
    %v143 = vld [vmem:[#allocation2 + $0x1ac] sm:$0xf]
    %v144 = vld [vmem:[#allocation2 + $0x1b0] sm:$0xf]
    %v145 = vld [vmem:[#allocation2 + $0x1b4] sm:$0xf]
    %v146 = vld [vmem:[#allocation2 + $0x1b8] sm:$0xf]
    %v147 = vld [vmem:[#allocation2 + $0x1bc] sm:$0xf]
    %v148 = vld [vmem:[#allocation2 + $0x1c0] sm:$0xf]
    %v149 = vld [vmem:[#allocation2 + $0x1c4] sm:$0xf]
    %v150 = vld [vmem:[#allocation2 + $0x1c8] sm:$0xf]
    %v151 = vld [vmem:[#allocation2 + $0x1cc] sm:$0xf]
    %v152 = vld [vmem:[#allocation2 + $0x1d0] sm:$0xf]
    %v153 = vld [vmem:[#allocation2 + $0x1d4] sm:$0xf]
    %v154 = vld [vmem:[#allocation2 + $0x1d8] sm:$0xf]
    %v155 = vld [vmem:[#allocation2 + $0x1dc] sm:$0xf]
    %v156 = vld [vmem:[#allocation2 + $0x1e0] sm:$0xf]
    %v157 = vld [vmem:[#allocation2 + $0x1e4] sm:$0xf]
    %v158 = vld [vmem:[#allocation2 + $0x1e8] sm:$0xf]
    %v159 = vld [vmem:[#allocation2 + $0x1ec] sm:$0xf]
    %v160 = vld [vmem:[#allocation2 + $0x1f0] sm:$0xf]
    %v161 = vld [vmem:[#allocation2 + $0x1f4] sm:$0xf]
    %v162 = vld [vmem:[#allocation2 + $0x1f8] sm:$0xf]
    %v163 = vld [vmem:[#allocation2 + $0x1fc] sm:$0xf]
    %v164 = vld [vmem:[#allocation2 + $0x200] sm:$0xf]
    %v165 = vld [vmem:[#allocation2 + $0x204] sm:$0xf]
    %v166 = vld [vmem:[#allocation2 + $0x208] sm:$0xf]
    %v167 = vld [vmem:[#allocation2 + $0x20c] sm:$0xf]
    %v168 = vld [vmem:[#allocation2 + $0x210] sm:$0xf]
    %v169 = vld [vmem:[#allocation2 + $0x214] sm:$0xf]
    %v170 = vld [vmem:[#allocation2 + $0x218] sm:$0xf]
    %v171 = vld [vmem:[#allocation2 + $0x21c] sm:$0xf]
    %v172 = vld [vmem:[#allocation2 + $0x220] sm:$0xf]
    %v173 = vld [vmem:[#allocation2 + $0x224] sm:$0xf]
    %v174 = vld [vmem:[#allocation2 + $0x228] sm:$0xf]
    %v175 = vld [vmem:[#allocation2 + $0x22c] sm:$0xf]
    %v176 = vld [vmem:[#allocation2 + $0x230] sm:$0xf]
    %v177 = vld [vmem:[#allocation2 + $0x234] sm:$0xf]
    %v178 = vld [vmem:[#allocation2 + $0x238] sm:$0xf]
    %v179 = vld [vmem:[#allocation2 + $0x23c] sm:$0xf]
    %v180 = vld [vmem:[#allocation2 + $0x240] sm:$0xf]
    %v181 = vld [vmem:[#allocation2 + $0x244] sm:$0xf]
    %v182 = vld [vmem:[#allocation2 + $0x248] sm:$0xf]
    %v183 = vld [vmem:[#allocation2 + $0x24c] sm:$0xf]
    %v184 = vld [vmem:[#allocation2 + $0x250] sm:$0xf]
    %v185 = vld [vmem:[#allocation2 + $0x254] sm:$0xf]
    %v186 = vld [vmem:[#allocation2 + $0x258] sm:$0xf]
    %v187 = vld [vmem:[#allocation2 + $0x25c] sm:$0xf]
    %v188 = vld [vmem:[#allocation2 + $0x260] sm:$0xf]
    %v189 = vld [vmem:[#allocation2 + $0x264] sm:$0xf]
    %v190 = vld [vmem:[#allocation2 + $0x268] sm:$0xf]
    %v191 = vld [vmem:[#allocation2 + $0x26c] sm:$0xf]
    %v192 = vld [vmem:[#allocation2 + $0x270] sm:$0xf]
    %v193 = vld [vmem:[#allocation2 + $0x274] sm:$0xf]
    %v194 = vld [vmem:[#allocation2 + $0x278] sm:$0xf]
    %v195 = vld [vmem:[#allocation2 + $0x27c] sm:$0xf]
    %v196 = vld [vmem:[#allocation2 + $0x280] sm:$0xf]
    %v197 = vld [vmem:[#allocation2 + $0x284] sm:$0xf]
    %v198 = vld [vmem:[#allocation2 + $0x288] sm:$0xf]
    %v199 = vld [vmem:[#allocation2 + $0x28c] sm:$0xf]
    %v200 = vld [vmem:[#allocation2 + $0x290] sm:$0xf]
    %v201 = vld [vmem:[#allocation2 + $0x294] sm:$0xf]
    %v202 = vld [vmem:[#allocation2 + $0x298] sm:$0xf]
    %v203 = vld [vmem:[#allocation2 + $0x29c] sm:$0xf]
    %v204 = vld [vmem:[#allocation2 + $0x2a0] sm:$0xf]
    %v205 = vld [vmem:[#allocation2 + $0x2a4] sm:$0xf]
    %v206 = vld [vmem:[#allocation2 + $0x2a8] sm:$0xf]
    %v207 = vld [vmem:[#allocation2 + $0x2ac] sm:$0xf]
    %v208 = vld [vmem:[#allocation2 + $0x2b0] sm:$0xf]
    %v209 = vld [vmem:[#allocation2 + $0x2b4] sm:$0xf]
    %v210 = vld [vmem:[#allocation2 + $0x2b8] sm:$0xf]
    %v211 = vld [vmem:[#allocation2 + $0x2bc] sm:$0xf]
    %v212 = vld [vmem:[#allocation2 + $0x2c0] sm:$0xf]
    %v213 = vld [vmem:[#allocation2 + $0x2c4] sm:$0xf]
    %v214 = vld [vmem:[#allocation2 + $0x2c8] sm:$0xf]
    %v215 = vld [vmem:[#allocation2 + $0x2cc] sm:$0xf]
    %v216 = vld [vmem:[#allocation2 + $0x2d0] sm:$0xf]
    %v217 = vld [vmem:[#allocation2 + $0x2d4] sm:$0xf]
    %v218 = vld [vmem:[#allocation2 + $0x2d8] sm:$0xf]
    %v219 = vld [vmem:[#allocation2 + $0x2dc] sm:$0xf]
    %v220 = vld [vmem:[#allocation2 + $0x2e0] sm:$0xf]
    %v221 = vld [vmem:[#allocation2 + $0x2e4] sm:$0xf]
    %v222 = vld [vmem:[#allocation2 + $0x2e8] sm:$0xf]
    %v223 = vld [vmem:[#allocation2 + $0x2ec] sm:$0xf]
    %v224 = vld [vmem:[#allocation2 + $0x2f0] sm:$0xf]
    %v225 = vld [vmem:[#allocation2 + $0x2f4] sm:$0xf]
    %v226 = vld [vmem:[#allocation2 + $0x2f8] sm:$0xf]
    %v227 = vld [vmem:[#allocation2 + $0x2fc] sm:$0xf]
    %v228 = vld [vmem:[#allocation2 + $0x300] sm:$0xf]
    %v229 = vld [vmem:[#allocation2 + $0x304] sm:$0xf]
    %v230 = vld [vmem:[#allocation2 + $0x308] sm:$0xf]
    %v231 = vld [vmem:[#allocation2 + $0x30c] sm:$0xf]
    %v232 = vld [vmem:[#allocation2 + $0x310] sm:$0xf]
    %v233 = vld [vmem:[#allocation2 + $0x314] sm:$0xf]
    %v234 = vld [vmem:[#allocation2 + $0x318] sm:$0xf]
    %v235 = vld [vmem:[#allocation2 + $0x31c] sm:$0xf]
    %v236 = vld [vmem:[#allocation2 + $0x320] sm:$0xf]
    %v237 = vld [vmem:[#allocation2 + $0x324] sm:$0xf]
    %v238 = vld [vmem:[#allocation2 + $0x328] sm:$0xf]
    %v239 = vld [vmem:[#allocation2 + $0x32c] sm:$0xf]
    %v240 = vld [vmem:[#allocation2 + $0x330] sm:$0xf]
    %v241 = vld [vmem:[#allocation2 + $0x334] sm:$0xf]
    %v242 = vld [vmem:[#allocation2 + $0x338] sm:$0xf]
    %v243 = vld [vmem:[#allocation2 + $0x33c] sm:$0xf]
    %v244 = vld [vmem:[#allocation2 + $0x340] sm:$0xf]
    %v245 = vld [vmem:[#allocation2 + $0x344] sm:$0xf]
    %v246 = vld [vmem:[#allocation2 + $0x348] sm:$0xf]
    %v247 = vld [vmem:[#allocation2 + $0x34c] sm:$0xf]
    %v248 = vld [vmem:[#allocation2 + $0x350] sm:$0xf]
    %v249 = vld [vmem:[#allocation2 + $0x354] sm:$0xf]
    %v250 = vld [vmem:[#allocation2 + $0x358] sm:$0xf]
    %v251 = vld [vmem:[#allocation2 + $0x35c] sm:$0xf]
    %v252 = vld [vmem:[#allocation2 + $0x360] sm:$0xf]
    %v253 = vld [vmem:[#allocation2 + $0x364] sm:$0xf]
    %v254 = vld [vmem:[#allocation2 + $0x368] sm:$0xf]
    %v255 = vld [vmem:[#allocation2 + $0x36c] sm:$0xf]
    %v256 = vld [vmem:[#allocation2 + $0x370] sm:$0xf]
    %v257 = vld [vmem:[#allocation2 + $0x374] sm:$0xf]
    %v258 = vld [vmem:[#allocation2 + $0x378] sm:$0xf]
    %v259 = vld [vmem:[#allocation2 + $0x37c] sm:$0xf]
    %v260 = vld [vmem:[#allocation2 + $0x380] sm:$0xf]
    %v261 = vld [vmem:[#allocation2 + $0x384] sm:$0xf]
    %v262 = vld [vmem:[#allocation2 + $0x388] sm:$0xf]
    %v263 = vld [vmem:[#allocation2 + $0x38c] sm:$0xf]
    %v264 = vld [vmem:[#allocation2 + $0x390] sm:$0xf]
    %v265 = vld [vmem:[#allocation2 + $0x394] sm:$0xf]
    %v266 = vld [vmem:[#allocation2 + $0x398] sm:$0xf]
    %v267 = vld [vmem:[#allocation2 + $0x39c] sm:$0xf]
    %v268 = vld [vmem:[#allocation2 + $0x3a0] sm:$0xf]
    %v269 = vld [vmem:[#allocation2 + $0x3a4] sm:$0xf]
    %v270 = vld [vmem:[#allocation2 + $0x3a8] sm:$0xf]
    %v271 = vld [vmem:[#allocation2 + $0x3ac] sm:$0xf]
    %v272 = vld [vmem:[#allocation2 + $0x3b0] sm:$0xf]
    %v273 = vld [vmem:[#allocation2 + $0x3b4] sm:$0xf]
    %v274 = vld [vmem:[#allocation2 + $0x3b8] sm:$0xf]
    %v275 = vld [vmem:[#allocation2 + $0x3bc] sm:$0xf]
    %v276 = vld [vmem:[#allocation2 + $0x3c0] sm:$0xf]
    %v277 = vld [vmem:[#allocation2 + $0x3c4] sm:$0xf]
    %v278 = vld [vmem:[#allocation2 + $0x3c8] sm:$0xf]
    %v279 = vld [vmem:[#allocation2 + $0x3cc] sm:$0xf]
    %v280 = vld [vmem:[#allocation2 + $0x3d0] sm:$0xf]
    %v281 = vld [vmem:[#allocation2 + $0x3d4] sm:$0xf]
    %v282 = vld [vmem:[#allocation2 + $0x3d8] sm:$0xf]
    %v283 = vld [vmem:[#allocation2 + $0x3dc] sm:$0xf]
    %v284 = vld [vmem:[#allocation2 + $0x3e0] sm:$0xf]
    %v285 = vld [vmem:[#allocation2 + $0x3e4] sm:$0xf]
    %v286 = vld [vmem:[#allocation2 + $0x3e8] sm:$0xf]
    %v287 = vld [vmem:[#allocation2 + $0x3ec] sm:$0xf]
    %v288 = vld [vmem:[#allocation2 + $0x3f0] sm:$0xf]
    %v289 = vld [vmem:[#allocation2 + $0x3f4] sm:$0xf]
    %v290 = vld [vmem:[#allocation2 + $0x3f8] sm:$0xf]
    %v291 = vld [vmem:[#allocation2 + $0x3fc] sm:$0xf]
    %v292 = vld [vmem:[#allocation2 + $0x400] sm:$0xf]
    %v293 = vld [vmem:[#allocation2 + $0x404] sm:$0xf]
    %v294 = vld [vmem:[#allocation2 + $0x408] sm:$0xf]
    %v295 = vld [vmem:[#allocation2 + $0x40c] sm:$0xf]
    %v296 = vld [vmem:[#allocation2 + $0x410] sm:$0xf]
    %v297 = vld [vmem:[#allocation2 + $0x414] sm:$0xf]
    %v298 = vld [vmem:[#allocation2 + $0x418] sm:$0xf]
    %v299 = vld [vmem:[#allocation2 + $0x41c] sm:$0xf]
    %v300 = vld [vmem:[#allocation2 + $0x420] sm:$0xf]
    %v301 = vld [vmem:[#allocation2 + $0x424] sm:$0xf]
    %v302 = vld [vmem:[#allocation2 + $0x428] sm:$0xf]
    %v303 = vld [vmem:[#allocation2 + $0x42c] sm:$0xf]
    %v304 = vld [vmem:[#allocation2 + $0x430] sm:$0xf]
    %v305 = vld [vmem:[#allocation2 + $0x434] sm:$0xf]
    %v306 = vld [vmem:[#allocation2 + $0x438] sm:$0xf]
    %v307 = vld [vmem:[#allocation2 + $0x43c] sm:$0xf]
    %v308 = vld [vmem:[#allocation2 + $0x440] sm:$0xf]
    %v309 = vld [vmem:[#allocation2 + $0x444] sm:$0xf]
    %v310 = vld [vmem:[#allocation2 + $0x448] sm:$0xf]
    %v311 = vld [vmem:[#allocation2 + $0x44c] sm:$0xf]
    %v312 = vld [vmem:[#allocation2 + $0x450] sm:$0xf]
    %v313 = vld [vmem:[#allocation2 + $0x454] sm:$0xf]
    %v314 = vld [vmem:[#allocation2 + $0x458] sm:$0xf]
    %v315 = vld [vmem:[#allocation2 + $0x45c] sm:$0xf]
    %v316 = vld [vmem:[#allocation2 + $0x460] sm:$0xf]
    %v317 = vld [vmem:[#allocation2 + $0x464] sm:$0xf]
    %v318 = vld [vmem:[#allocation2 + $0x468] sm:$0xf]
    %v319 = vld [vmem:[#allocation2 + $0x46c] sm:$0xf]
    %v320 = vld [vmem:[#allocation2 + $0x470] sm:$0xf]
    %v321 = vld [vmem:[#allocation2 + $0x474] sm:$0xf]
    %v322 = vld [vmem:[#allocation2 + $0x478] sm:$0xf]
    %v323 = vld [vmem:[#allocation2 + $0x47c] sm:$0xf]
    %v324 = vld [vmem:[#allocation2 + $0x480] sm:$0xf]
    %v325 = vld [vmem:[#allocation2 + $0x484] sm:$0xf]
    %v326 = vld [vmem:[#allocation2 + $0x488] sm:$0xf]
    %v327 = vld [vmem:[#allocation2 + $0x48c] sm:$0xf]
    %v328 = vld [vmem:[#allocation2 + $0x490] sm:$0xf]
    %v329 = vld [vmem:[#allocation2 + $0x494] sm:$0xf]
    %v330 = vld [vmem:[#allocation2 + $0x498] sm:$0xf]
    %v331 = vld [vmem:[#allocation2 + $0x49c] sm:$0xf]
    %v332 = vld [vmem:[#allocation2 + $0x4a0] sm:$0xf]
    %v333 = vld [vmem:[#allocation2 + $0x4a4] sm:$0xf]
    %v334 = vld [vmem:[#allocation2 + $0x4a8] sm:$0xf]
    %v335 = vld [vmem:[#allocation2 + $0x4ac] sm:$0xf]
    %v336 = vld [vmem:[#allocation2 + $0x4b0] sm:$0xf]
    %v337 = vld [vmem:[#allocation2 + $0x4b4] sm:$0xf]
    %v338 = vld [vmem:[#allocation2 + $0x4b8] sm:$0xf]
    %v339 = vld [vmem:[#allocation2 + $0x4bc] sm:$0xf]
    %v340 = vld [vmem:[#allocation2 + $0x4c0] sm:$0xf]
    %v341 = vld [vmem:[#allocation2 + $0x4c4] sm:$0xf]
    %v342 = vld [vmem:[#allocation2 + $0x4c8] sm:$0xf]
    %v343 = vld [vmem:[#allocation2 + $0x4cc] sm:$0xf]
    %v344 = vld [vmem:[#allocation2 + $0x4d0] sm:$0xf]
    %v345 = vld [vmem:[#allocation2 + $0x4d4] sm:$0xf]
    %v346 = vld [vmem:[#allocation2 + $0x4d8] sm:$0xf]
    %v347 = vld [vmem:[#allocation2 + $0x4dc] sm:$0xf]
    %v348 = vld [vmem:[#allocation2 + $0x4e0] sm:$0xf]
    %v349 = vld [vmem:[#allocation2 + $0x4e4] sm:$0xf]
    %v350 = vld [vmem:[#allocation2 + $0x4e8] sm:$0xf]
    %v351 = vld [vmem:[#allocation2 + $0x4ec] sm:$0xf]
    %v352 = vld [vmem:[#allocation2 + $0x4f0] sm:$0xf]
    %v353 = vld [vmem:[#allocation2 + $0x4f4] sm:$0xf]
    %v354 = vld [vmem:[#allocation2 + $0x4f8] sm:$0xf]
    %v355 = vld [vmem:[#allocation2 + $0x4fc] sm:$0xf]
    %v356 = vld [vmem:[#allocation2 + $0x500] sm:$0xf]
    %v357 = vld [vmem:[#allocation2 + $0x504] sm:$0xf]
    %v358 = vld [vmem:[#allocation2 + $0x508] sm:$0xf]
    %v359 = vld [vmem:[#allocation2 + $0x50c] sm:$0xf]
    %v360 = vld [vmem:[#allocation2 + $0x510] sm:$0xf]
    %v361 = vld [vmem:[#allocation2 + $0x514] sm:$0xf]
    %v362 = vld [vmem:[#allocation2 + $0x518] sm:$0xf]
    %v363 = vld [vmem:[#allocation2 + $0x51c] sm:$0xf]
    %v364 = vld [vmem:[#allocation2 + $0x520] sm:$0xf]
    %v365 = vld [vmem:[#allocation2 + $0x524] sm:$0xf]
    %v366 = vld [vmem:[#allocation2 + $0x528] sm:$0xf]
    %v367 = vld [vmem:[#allocation2 + $0x52c] sm:$0xf]
    %v368 = vld [vmem:[#allocation2 + $0x530] sm:$0xf]
    %v369 = vld [vmem:[#allocation2 + $0x534] sm:$0xf]
    %v370 = vld [vmem:[#allocation2 + $0x538] sm:$0xf]
    %v371 = vld [vmem:[#allocation2 + $0x53c] sm:$0xf]
    %v372 = vld [vmem:[#allocation2 + $0x540] sm:$0xf]
    %v373 = vld [vmem:[#allocation2 + $0x544] sm:$0xf]
    %v374 = vld [vmem:[#allocation2 + $0x548] sm:$0xf]
    %v375 = vld [vmem:[#allocation2 + $0x54c] sm:$0xf]
    %v376 = vld [vmem:[#allocation2 + $0x550] sm:$0xf]
    %v377 = vld [vmem:[#allocation2 + $0x554] sm:$0xf]
    %v378 = vld [vmem:[#allocation2 + $0x558] sm:$0xf]
    %v379 = vld [vmem:[#allocation2 + $0x55c] sm:$0xf]
    %v380 = vld [vmem:[#allocation2 + $0x560] sm:$0xf]
    %v381 = vld [vmem:[#allocation2 + $0x564] sm:$0xf]
    %v382 = vld [vmem:[#allocation2 + $0x568] sm:$0xf]
    %v383 = vld [vmem:[#allocation2 + $0x56c] sm:$0xf]
    %v384 = vld [vmem:[#allocation2 + $0x570] sm:$0xf]
    %v385 = vld [vmem:[#allocation2 + $0x574] sm:$0xf]
    %v386 = vld [vmem:[#allocation2 + $0x578] sm:$0xf]
    %v387 = vld [vmem:[#allocation2 + $0x57c] sm:$0xf]
    %v388 = vld [vmem:[#allocation2 + $0x580] sm:$0xf]
    %v389 = vld [vmem:[#allocation2 + $0x584] sm:$0xf]
    %v390 = vld [vmem:[#allocation2 + $0x588] sm:$0xf]
    %v391 = vld [vmem:[#allocation2 + $0x58c] sm:$0xf]
    %v392 = vld [vmem:[#allocation2 + $0x590] sm:$0xf]
    %v393 = vld [vmem:[#allocation2 + $0x594] sm:$0xf]
    %v394 = vld [vmem:[#allocation2 + $0x598] sm:$0xf]
    %v395 = vld [vmem:[#allocation2 + $0x59c] sm:$0xf]
    %v396 = vld [vmem:[#allocation2 + $0x5a0] sm:$0xf]
    %v397 = vld [vmem:[#allocation2 + $0x5a4] sm:$0xf]
    %v398 = vld [vmem:[#allocation2 + $0x5a8] sm:$0xf]
    %v399 = vld [vmem:[#allocation2 + $0x5ac] sm:$0xf]
    %v400 = vld [vmem:[#allocation2 + $0x5b0] sm:$0xf]
    %v401 = vld [vmem:[#allocation2 + $0x5b4] sm:$0xf]
    %v402 = vld [vmem:[#allocation2 + $0x5b8] sm:$0xf]
    %v403 = vld [vmem:[#allocation2 + $0x5bc] sm:$0xf]
    %v404 = vld [vmem:[#allocation2 + $0x5c0] sm:$0xf]
    %v405 = vld [vmem:[#allocation2 + $0x5c4] sm:$0xf]
    %v406 = vld [vmem:[#allocation2 + $0x5c8] sm:$0xf]
    %v407 = vld [vmem:[#allocation2 + $0x5cc] sm:$0xf]
    %v408 = vld [vmem:[#allocation2 + $0x5d0] sm:$0xf]
    %v409 = vld [vmem:[#allocation2 + $0x5d4] sm:$0xf]
    %v410 = vld [vmem:[#allocation2 + $0x5d8] sm:$0xf]
    %v411 = vld [vmem:[#allocation2 + $0x5dc] sm:$0xf]
    %v412 = vld [vmem:[#allocation2 + $0x5e0] sm:$0xf]
    %v413 = vld [vmem:[#allocation2 + $0x5e4] sm:$0xf]
    %v414 = vld [vmem:[#allocation2 + $0x5e8] sm:$0xf]
    %v415 = vld [vmem:[#allocation2 + $0x5ec] sm:$0xf]
    %v416 = vld [vmem:[#allocation2 + $0x5f0] sm:$0xf]
    %v417 = vld [vmem:[#allocation2 + $0x5f4] sm:$0xf]
    %v418 = vld [vmem:[#allocation2 + $0x5f8] sm:$0xf]
    %v419 = vld [vmem:[#allocation2 + $0x5fc] sm:$0xf]
    %v420 = vld [vmem:[%s3] sm:$0x1]
    %v422 = vlaneseq
    %v423 = vshrl.u32 %v422, 7
    %v424 = vsub.s32 0, %v423
    %v425 = vrot.slane %v420, %v424
    %v430 = vcombine.high %v33, %v33
    %v432 = vunpack.c.l.s4 1966171168
    %v433 = vunpack.c.0.s8 %v432
    %v434 = vlaneseq
    %v435 = vshrl.u32 %v434, 7
    %v436 = vsub.s32 %v433, %v435
    %v437 = vrot.slane %v33, %v436
    %v439 = vunpack.c.l.s4 1966171168
    %v440 = vunpack.c.0.s8 %v439
    %v441 = vlaneseq
    %v442 = vshrl.u32 %v441, 7
    %v443 = vsub.s32 %v440, %v442
    %v444 = vrot.slane %v430, %v443
    %v445 = vcombine.high %v437, %v437
    %v446 = vcombine.high %v444, %v444
    %v448 = vunpack.c.l.s4 1966171168
    %v449 = vunpack.c.0.s8 %v448
    %v450 = vlaneseq
    %v451 = vshrl.u32 %v450, 7
    %v452 = vsub.s32 %v449, %v451
    %v453 = vrot.slane %v437, %v452
    %v455 = vunpack.c.l.s4 1966171168
    %v456 = vunpack.c.0.s8 %v455
    %v457 = vlaneseq
    %v458 = vshrl.u32 %v457, 7
    %v459 = vsub.s32 %v456, %v458
    %v460 = vrot.slane %v444, %v459
    %v462 = vunpack.c.l.s4 1966171168
    %v463 = vunpack.c.0.s8 %v462
    %v464 = vlaneseq
    %v465 = vshrl.u32 %v464, 7
    %v466 = vsub.s32 %v463, %v465
    %v467 = vrot.slane %v445, %v466
    %v469 = vunpack.c.l.s4 1966171168
    %v470 = vunpack.c.0.s8 %v469
    %v471 = vlaneseq
    %v472 = vshrl.u32 %v471, 7
    %v473 = vsub.s32 %v470, %v472
    %v474 = vrot.slane %v446, %v473
    %v475 = vcombine.high %v453, %v453
    %v476 = vcombine.high %v460, %v460
    %v477 = vcombine.high %v467, %v467
    %v478 = vcombine.high %v474, %v474
    %v479 = vcombine.high %v34, %v34
    %v481 = vunpack.c.l.s4 1966171168
    %v482 = vunpack.c.0.s8 %v481
    %v483 = vlaneseq
    %v484 = vshrl.u32 %v483, 7
    %v485 = vsub.s32 %v482, %v484
    %v486 = vrot.slane %v34, %v485
    %v488 = vunpack.c.l.s4 1966171168
    %v489 = vunpack.c.0.s8 %v488
    %v490 = vlaneseq
    %v491 = vshrl.u32 %v490, 7
    %v492 = vsub.s32 %v489, %v491
    %v493 = vrot.slane %v479, %v492
    %v494 = vcombine.high %v486, %v486
    %v495 = vcombine.high %v493, %v493
    %v497 = vunpack.c.l.s4 1966171168
    %v498 = vunpack.c.0.s8 %v497
    %v499 = vlaneseq
    %v500 = vshrl.u32 %v499, 7
    %v501 = vsub.s32 %v498, %v500
    %v502 = vrot.slane %v486, %v501
    %v504 = vunpack.c.l.s4 1966171168
    %v505 = vunpack.c.0.s8 %v504
    %v506 = vlaneseq
    %v507 = vshrl.u32 %v506, 7
    %v508 = vsub.s32 %v505, %v507
    %v509 = vrot.slane %v493, %v508
    %v511 = vunpack.c.l.s4 1966171168
    %v512 = vunpack.c.0.s8 %v511
    %v513 = vlaneseq
    %v514 = vshrl.u32 %v513, 7
    %v515 = vsub.s32 %v512, %v514
    %v516 = vrot.slane %v494, %v515
    %v518 = vunpack.c.l.s4 1966171168
    %v519 = vunpack.c.0.s8 %v518
    %v520 = vlaneseq
    %v521 = vshrl.u32 %v520, 7
    %v522 = vsub.s32 %v519, %v521
    %v523 = vrot.slane %v495, %v522
    %v524 = vcombine.high %v502, %v502
    %v525 = vcombine.high %v509, %v509
    %v526 = vcombine.high %v516, %v516
    %v527 = vcombine.high %v523, %v523
    %v528 = vcombine.high %v35, %v35
    %v530 = vunpack.c.l.s4 1966171168
    %v531 = vunpack.c.0.s8 %v530
    %v532 = vlaneseq
    %v533 = vshrl.u32 %v532, 7
    %v534 = vsub.s32 %v531, %v533
    %v535 = vrot.slane %v35, %v534
    %v537 = vunpack.c.l.s4 1966171168
    %v538 = vunpack.c.0.s8 %v537
    %v539 = vlaneseq
    %v540 = vshrl.u32 %v539, 7
    %v541 = vsub.s32 %v538, %v540
    %v542 = vrot.slane %v528, %v541
    %v543 = vcombine.high %v535, %v535
    %v544 = vcombine.high %v542, %v542
    %v546 = vunpack.c.l.s4 1966171168
    %v547 = vunpack.c.0.s8 %v546
    %v548 = vlaneseq
    %v549 = vshrl.u32 %v548, 7
    %v550 = vsub.s32 %v547, %v549
    %v551 = vrot.slane %v535, %v550
    %v553 = vunpack.c.l.s4 1966171168
    %v554 = vunpack.c.0.s8 %v553
    %v555 = vlaneseq
    %v556 = vshrl.u32 %v555, 7
    %v557 = vsub.s32 %v554, %v556
    %v558 = vrot.slane %v542, %v557
    %v560 = vunpack.c.l.s4 1966171168
    %v561 = vunpack.c.0.s8 %v560
    %v562 = vlaneseq
    %v563 = vshrl.u32 %v562, 7
    %v564 = vsub.s32 %v561, %v563
    %v565 = vrot.slane %v543, %v564
    %v567 = vunpack.c.l.s4 1966171168
    %v568 = vunpack.c.0.s8 %v567
    %v569 = vlaneseq
    %v570 = vshrl.u32 %v569, 7
    %v571 = vsub.s32 %v568, %v570
    %v572 = vrot.slane %v544, %v571
    %v573 = vcombine.high %v551, %v551
    %v574 = vcombine.high %v558, %v558
    %v575 = vcombine.high %v565, %v565
    %v576 = vcombine.high %v572, %v572
    %v985 = vunpack.c.l.b16 %v36
    %v986 = vunpack.c.l.b16 %v37
    %v987 = vunpack.c.l.b16 %v38
    %v988 = vunpack.c.l.b16 %v39
    %v989 = vunpack.c.l.b16 %v40
    %v990 = vunpack.c.l.b16 %v41
    %v991 = vunpack.c.l.b16 %v42
    %v992 = vunpack.c.l.b16 %v43
    %v993 = vunpack.c.l.b16 %v44
    %v994 = vunpack.c.l.b16 %v45
    %v995 = vunpack.c.l.b16 %v46
    %v996 = vunpack.c.l.b16 %v47
    %v997 = vunpack.c.l.b16 %v48
    %v998 = vunpack.c.l.b16 %v49
    %v999 = vunpack.c.l.b16 %v50
    %v1000 = vunpack.c.l.b16 %v51
    %v1001 = vunpack.c.l.b16 %v52
    %v1002 = vunpack.c.l.b16 %v53
    %v1003 = vunpack.c.l.b16 %v54
    %v1004 = vunpack.c.l.b16 %v55
    %v1005 = vunpack.c.l.b16 %v56
    %v1006 = vunpack.c.l.b16 %v57
    %v1007 = vunpack.c.l.b16 %v58
    %v1008 = vunpack.c.l.b16 %v59
    %v1009 = vunpack.c.l.b16 %v60
    %v1010 = vunpack.c.l.b16 %v61
    %v1011 = vunpack.c.l.b16 %v62
    %v1012 = vunpack.c.l.b16 %v63
    %v1013 = vunpack.c.l.b16 %v64
    %v1014 = vunpack.c.l.b16 %v65
    %v1015 = vunpack.c.l.b16 %v66
    %v1016 = vunpack.c.l.b16 %v67
    %v1017 = vunpack.c.l.b16 %v68
    %v1018 = vunpack.c.l.b16 %v69
    %v1019 = vunpack.c.l.b16 %v70
    %v1020 = vunpack.c.l.b16 %v71
    %v1021 = vunpack.c.l.b16 %v72
    %v1022 = vunpack.c.l.b16 %v73
    %v1023 = vunpack.c.l.b16 %v74
    %v1024 = vunpack.c.l.b16 %v75
    %v1025 = vunpack.c.l.b16 %v76
    %v1026 = vunpack.c.l.b16 %v77
    %v1027 = vunpack.c.l.b16 %v78
    %v1028 = vunpack.c.l.b16 %v79
    %v1029 = vunpack.c.l.b16 %v80
    %v1030 = vunpack.c.l.b16 %v81
    %v1031 = vunpack.c.l.b16 %v82
    %v1032 = vunpack.c.l.b16 %v83
    %v1033 = vunpack.c.l.b16 %v84
    %v1034 = vunpack.c.l.b16 %v85
    %v1035 = vunpack.c.l.b16 %v86
    %v1036 = vunpack.c.l.b16 %v87
    %v1037 = vunpack.c.l.b16 %v88
    %v1038 = vunpack.c.l.b16 %v89
    %v1039 = vunpack.c.l.b16 %v90
    %v1040 = vunpack.c.l.b16 %v91
    %v1041 = vunpack.c.l.b16 %v92
    %v1042 = vunpack.c.l.b16 %v93
    %v1043 = vunpack.c.l.b16 %v94
    %v1044 = vunpack.c.l.b16 %v95
    %v1045 = vunpack.c.l.b16 %v96
    %v1046 = vunpack.c.l.b16 %v97
    %v1047 = vunpack.c.l.b16 %v98
    %v1048 = vunpack.c.l.b16 %v99
    %v1049 = vunpack.c.l.b16 %v100
    %v1050 = vunpack.c.l.b16 %v101
    %v1051 = vunpack.c.l.b16 %v102
    %v1052 = vunpack.c.l.b16 %v103
    %v1053 = vunpack.c.l.b16 %v104
    %v1054 = vunpack.c.l.b16 %v105
    %v1055 = vunpack.c.l.b16 %v106
    %v1056 = vunpack.c.l.b16 %v107
    %v1057 = vunpack.c.l.b16 %v108
    %v1058 = vunpack.c.l.b16 %v109
    %v1059 = vunpack.c.l.b16 %v110
    %v1060 = vunpack.c.l.b16 %v111
    %v1061 = vunpack.c.l.b16 %v112
    %v1062 = vunpack.c.l.b16 %v113
    %v1063 = vunpack.c.l.b16 %v114
    %v1064 = vunpack.c.l.b16 %v115
    %v1065 = vunpack.c.l.b16 %v116
    %v1066 = vunpack.c.l.b16 %v117
    %v1067 = vunpack.c.l.b16 %v118
    %v1068 = vunpack.c.l.b16 %v119
    %v1069 = vunpack.c.l.b16 %v120
    %v1070 = vunpack.c.l.b16 %v121
    %v1071 = vunpack.c.l.b16 %v122
    %v1072 = vunpack.c.l.b16 %v123
    %v1073 = vunpack.c.l.b16 %v124
    %v1074 = vunpack.c.l.b16 %v125
    %v1075 = vunpack.c.l.b16 %v126
    %v1076 = vunpack.c.l.b16 %v127
    %v1077 = vunpack.c.l.b16 %v128
    %v1078 = vunpack.c.l.b16 %v129
    %v1079 = vunpack.c.l.b16 %v130
    %v1080 = vunpack.c.l.b16 %v131
    %v1081 = vunpack.c.l.b16 %v132
    %v1082 = vunpack.c.l.b16 %v133
    %v1083 = vunpack.c.l.b16 %v134
    %v1084 = vunpack.c.l.b16 %v135
    %v1085 = vunpack.c.l.b16 %v136
    %v1086 = vunpack.c.l.b16 %v137
    %v1087 = vunpack.c.l.b16 %v138
    %v1088 = vunpack.c.l.b16 %v139
    %v1089 = vunpack.c.l.b16 %v140
    %v1090 = vunpack.c.l.b16 %v141
    %v1091 = vunpack.c.l.b16 %v142
    %v1092 = vunpack.c.l.b16 %v143
    %v1093 = vunpack.c.l.b16 %v144
    %v1094 = vunpack.c.l.b16 %v145
    %v1095 = vunpack.c.l.b16 %v146
    %v1096 = vunpack.c.l.b16 %v147
    %v1097 = vunpack.c.l.b16 %v148
    %v1098 = vunpack.c.l.b16 %v149
    %v1099 = vunpack.c.l.b16 %v150
    %v1100 = vunpack.c.l.b16 %v151
    %v1101 = vunpack.c.l.b16 %v152
    %v1102 = vunpack.c.l.b16 %v153
    %v1103 = vunpack.c.l.b16 %v154
    %v1104 = vunpack.c.l.b16 %v155
    %v1105 = vunpack.c.l.b16 %v156
    %v1106 = vunpack.c.l.b16 %v157
    %v1107 = vunpack.c.l.b16 %v158
    %v1108 = vunpack.c.l.b16 %v159
    %v1109 = vunpack.c.l.b16 %v160
    %v1110 = vunpack.c.l.b16 %v161
    %v1111 = vunpack.c.l.b16 %v162
    %v1112 = vunpack.c.l.b16 %v163
    %v1113 = vunpack.c.l.b16 %v164
    %v1114 = vunpack.c.l.b16 %v165
    %v1115 = vunpack.c.l.b16 %v166
    %v1116 = vunpack.c.l.b16 %v167
    %v1117 = vunpack.c.l.b16 %v168
    %v1118 = vunpack.c.l.b16 %v169
    %v1119 = vunpack.c.l.b16 %v170
    %v1120 = vunpack.c.l.b16 %v171
    %v1121 = vunpack.c.l.b16 %v172
    %v1122 = vunpack.c.l.b16 %v173
    %v1123 = vunpack.c.l.b16 %v174
    %v1124 = vunpack.c.l.b16 %v175
    %v1125 = vunpack.c.l.b16 %v176
    %v1126 = vunpack.c.l.b16 %v177
    %v1127 = vunpack.c.l.b16 %v178
    %v1128 = vunpack.c.l.b16 %v179
    %v1129 = vunpack.c.l.b16 %v180
    %v1130 = vunpack.c.l.b16 %v181
    %v1131 = vunpack.c.l.b16 %v182
    %v1132 = vunpack.c.l.b16 %v183
    %v1133 = vunpack.c.l.b16 %v184
    %v1134 = vunpack.c.l.b16 %v185
    %v1135 = vunpack.c.l.b16 %v186
    %v1136 = vunpack.c.l.b16 %v187
    %v1137 = vunpack.c.l.b16 %v188
    %v1138 = vunpack.c.l.b16 %v189
    %v1139 = vunpack.c.l.b16 %v190
    %v1140 = vunpack.c.l.b16 %v191
    %v1141 = vunpack.c.l.b16 %v192
    %v1142 = vunpack.c.l.b16 %v193
    %v1143 = vunpack.c.l.b16 %v194
    %v1144 = vunpack.c.l.b16 %v195
    %v1145 = vunpack.c.l.b16 %v196
    %v1146 = vunpack.c.l.b16 %v197
    %v1147 = vunpack.c.l.b16 %v198
    %v1148 = vunpack.c.l.b16 %v199
    %v1149 = vunpack.c.l.b16 %v200
    %v1150 = vunpack.c.l.b16 %v201
    %v1151 = vunpack.c.l.b16 %v202
    %v1152 = vunpack.c.l.b16 %v203
    %v1153 = vunpack.c.l.b16 %v204
    %v1154 = vunpack.c.l.b16 %v205
    %v1155 = vunpack.c.l.b16 %v206
    %v1156 = vunpack.c.l.b16 %v207
    %v1157 = vunpack.c.l.b16 %v208
    %v1158 = vunpack.c.l.b16 %v209
    %v1159 = vunpack.c.l.b16 %v210
    %v1160 = vunpack.c.l.b16 %v211
    %v1161 = vunpack.c.l.b16 %v212
    %v1162 = vunpack.c.l.b16 %v213
    %v1163 = vunpack.c.l.b16 %v214
    %v1164 = vunpack.c.l.b16 %v215
    %v1165 = vunpack.c.l.b16 %v216
    %v1166 = vunpack.c.l.b16 %v217
    %v1167 = vunpack.c.l.b16 %v218
    %v1168 = vunpack.c.l.b16 %v219
    %v1169 = vunpack.c.l.b16 %v220
    %v1170 = vunpack.c.l.b16 %v221
    %v1171 = vunpack.c.l.b16 %v222
    %v1172 = vunpack.c.l.b16 %v223
    %v1173 = vunpack.c.l.b16 %v224
    %v1174 = vunpack.c.l.b16 %v225
    %v1175 = vunpack.c.l.b16 %v226
    %v1176 = vunpack.c.l.b16 %v227
    %v1177 = vunpack.c.l.b16 %v228
    %v1178 = vunpack.c.l.b16 %v229
    %v1179 = vunpack.c.l.b16 %v230
    %v1180 = vunpack.c.l.b16 %v231
    %v1181 = vunpack.c.l.b16 %v232
    %v1182 = vunpack.c.l.b16 %v233
    %v1183 = vunpack.c.l.b16 %v234
    %v1184 = vunpack.c.l.b16 %v235
    %v1185 = vunpack.c.l.b16 %v236
    %v1186 = vunpack.c.l.b16 %v237
    %v1187 = vunpack.c.l.b16 %v238
    %v1188 = vunpack.c.l.b16 %v239
    %v1189 = vunpack.c.l.b16 %v240
    %v1190 = vunpack.c.l.b16 %v241
    %v1191 = vunpack.c.l.b16 %v242
    %v1192 = vunpack.c.l.b16 %v243
    %v1193 = vunpack.c.l.b16 %v244
    %v1194 = vunpack.c.l.b16 %v245
    %v1195 = vunpack.c.l.b16 %v246
    %v1196 = vunpack.c.l.b16 %v247
    %v1197 = vunpack.c.l.b16 %v248
    %v1198 = vunpack.c.l.b16 %v249
    %v1199 = vunpack.c.l.b16 %v250
    %v1200 = vunpack.c.l.b16 %v251
    %v1201 = vunpack.c.l.b16 %v252
    %v1202 = vunpack.c.l.b16 %v253
    %v1203 = vunpack.c.l.b16 %v254
    %v1204 = vunpack.c.l.b16 %v255
    %v1205 = vunpack.c.l.b16 %v256
    %v1206 = vunpack.c.l.b16 %v257
    %v1207 = vunpack.c.l.b16 %v258
    %v1208 = vunpack.c.l.b16 %v259
    %v1209 = vunpack.c.l.b16 %v260
    %v1210 = vunpack.c.l.b16 %v261
    %v1211 = vunpack.c.l.b16 %v262
    %v1212 = vunpack.c.l.b16 %v263
    %v1213 = vunpack.c.l.b16 %v264
    %v1214 = vunpack.c.l.b16 %v265
    %v1215 = vunpack.c.l.b16 %v266
    %v1216 = vunpack.c.l.b16 %v267
    %v1217 = vunpack.c.l.b16 %v268
    %v1218 = vunpack.c.l.b16 %v269
    %v1219 = vunpack.c.l.b16 %v270
    %v1220 = vunpack.c.l.b16 %v271
    %v1221 = vunpack.c.l.b16 %v272
    %v1222 = vunpack.c.l.b16 %v273
    %v1223 = vunpack.c.l.b16 %v274
    %v1224 = vunpack.c.l.b16 %v275
    %v1225 = vunpack.c.l.b16 %v276
    %v1226 = vunpack.c.l.b16 %v277
    %v1227 = vunpack.c.l.b16 %v278
    %v1228 = vunpack.c.l.b16 %v279
    %v1229 = vunpack.c.l.b16 %v280
    %v1230 = vunpack.c.l.b16 %v281
    %v1231 = vunpack.c.l.b16 %v282
    %v1232 = vunpack.c.l.b16 %v283
    %v1233 = vunpack.c.l.b16 %v284
    %v1234 = vunpack.c.l.b16 %v285
    %v1235 = vunpack.c.l.b16 %v286
    %v1236 = vunpack.c.l.b16 %v287
    %v1237 = vunpack.c.l.b16 %v288
    %v1238 = vunpack.c.l.b16 %v289
    %v1239 = vunpack.c.l.b16 %v290
    %v1240 = vunpack.c.l.b16 %v291
    %v1241 = vunpack.c.l.b16 %v292
    %v1242 = vunpack.c.l.b16 %v293
    %v1243 = vunpack.c.l.b16 %v294
    %v1244 = vunpack.c.l.b16 %v295
    %v1245 = vunpack.c.l.b16 %v296
    %v1246 = vunpack.c.l.b16 %v297
    %v1247 = vunpack.c.l.b16 %v298
    %v1248 = vunpack.c.l.b16 %v299
    %v1249 = vunpack.c.l.b16 %v300
    %v1250 = vunpack.c.l.b16 %v301
    %v1251 = vunpack.c.l.b16 %v302
    %v1252 = vunpack.c.l.b16 %v303
    %v1253 = vunpack.c.l.b16 %v304
    %v1254 = vunpack.c.l.b16 %v305
    %v1255 = vunpack.c.l.b16 %v306
    %v1256 = vunpack.c.l.b16 %v307
    %v1257 = vunpack.c.l.b16 %v308
    %v1258 = vunpack.c.l.b16 %v309
    %v1259 = vunpack.c.l.b16 %v310
    %v1260 = vunpack.c.l.b16 %v311
    %v1261 = vunpack.c.l.b16 %v312
    %v1262 = vunpack.c.l.b16 %v313
    %v1263 = vunpack.c.l.b16 %v314
    %v1264 = vunpack.c.l.b16 %v315
    %v1265 = vunpack.c.l.b16 %v316
    %v1266 = vunpack.c.l.b16 %v317
    %v1267 = vunpack.c.l.b16 %v318
    %v1268 = vunpack.c.l.b16 %v319
    %v1269 = vunpack.c.l.b16 %v320
    %v1270 = vunpack.c.l.b16 %v321
    %v1271 = vunpack.c.l.b16 %v322
    %v1272 = vunpack.c.l.b16 %v323
    %v1273 = vunpack.c.l.b16 %v324
    %v1274 = vunpack.c.l.b16 %v325
    %v1275 = vunpack.c.l.b16 %v326
    %v1276 = vunpack.c.l.b16 %v327
    %v1277 = vunpack.c.l.b16 %v328
    %v1278 = vunpack.c.l.b16 %v329
    %v1279 = vunpack.c.l.b16 %v330
    %v1280 = vunpack.c.l.b16 %v331
    %v1281 = vunpack.c.l.b16 %v332
    %v1282 = vunpack.c.l.b16 %v333
    %v1283 = vunpack.c.l.b16 %v334
    %v1284 = vunpack.c.l.b16 %v335
    %v1285 = vunpack.c.l.b16 %v336
    %v1286 = vunpack.c.l.b16 %v337
    %v1287 = vunpack.c.l.b16 %v338
    %v1288 = vunpack.c.l.b16 %v339
    %v1289 = vunpack.c.l.b16 %v340
    %v1290 = vunpack.c.l.b16 %v341
    %v1291 = vunpack.c.l.b16 %v342
    %v1292 = vunpack.c.l.b16 %v343
    %v1293 = vunpack.c.l.b16 %v344
    %v1294 = vunpack.c.l.b16 %v345
    %v1295 = vunpack.c.l.b16 %v346
    %v1296 = vunpack.c.l.b16 %v347
    %v1297 = vunpack.c.l.b16 %v348
    %v1298 = vunpack.c.l.b16 %v349
    %v1299 = vunpack.c.l.b16 %v350
    %v1300 = vunpack.c.l.b16 %v351
    %v1301 = vunpack.c.l.b16 %v352
    %v1302 = vunpack.c.l.b16 %v353
    %v1303 = vunpack.c.l.b16 %v354
    %v1304 = vunpack.c.l.b16 %v355
    %v1305 = vunpack.c.l.b16 %v356
    %v1306 = vunpack.c.l.b16 %v357
    %v1307 = vunpack.c.l.b16 %v358
    %v1308 = vunpack.c.l.b16 %v359
    %v1309 = vunpack.c.l.b16 %v360
    %v1310 = vunpack.c.l.b16 %v361
    %v1311 = vunpack.c.l.b16 %v362
    %v1312 = vunpack.c.l.b16 %v363
    %v1313 = vunpack.c.l.b16 %v364
    %v1314 = vunpack.c.l.b16 %v365
    %v1315 = vunpack.c.l.b16 %v366
    %v1316 = vunpack.c.l.b16 %v367
    %v1317 = vunpack.c.l.b16 %v368
    %v1318 = vunpack.c.l.b16 %v369
    %v1319 = vunpack.c.l.b16 %v370
    %v1320 = vunpack.c.l.b16 %v371
    %v1321 = vunpack.c.l.b16 %v372
    %v1322 = vunpack.c.l.b16 %v373
    %v1323 = vunpack.c.l.b16 %v374
    %v1324 = vunpack.c.l.b16 %v375
    %v1325 = vunpack.c.l.b16 %v376
    %v1326 = vunpack.c.l.b16 %v377
    %v1327 = vunpack.c.l.b16 %v378
    %v1328 = vunpack.c.l.b16 %v379
    %v1329 = vunpack.c.l.b16 %v380
    %v1330 = vunpack.c.l.b16 %v381
    %v1331 = vunpack.c.l.b16 %v382
    %v1332 = vunpack.c.l.b16 %v383
    %v1333 = vunpack.c.l.b16 %v384
    %v1334 = vunpack.c.l.b16 %v385
    %v1335 = vunpack.c.l.b16 %v386
    %v1336 = vunpack.c.l.b16 %v387
    %v1337 = vunpack.c.l.b16 %v388
    %v1338 = vunpack.c.l.b16 %v389
    %v1339 = vunpack.c.l.b16 %v390
    %v1340 = vunpack.c.l.b16 %v391
    %v1341 = vunpack.c.l.b16 %v392
    %v1342 = vunpack.c.l.b16 %v393
    %v1343 = vunpack.c.l.b16 %v394
    %v1344 = vunpack.c.l.b16 %v395
    %v1345 = vunpack.c.l.b16 %v396
    %v1346 = vunpack.c.l.b16 %v397
    %v1347 = vunpack.c.l.b16 %v398
    %v1348 = vunpack.c.l.b16 %v399
    %v1349 = vunpack.c.l.b16 %v400
    %v1350 = vunpack.c.l.b16 %v401
    %v1351 = vunpack.c.l.b16 %v402
    %v1352 = vunpack.c.l.b16 %v403
    %v1353 = vunpack.c.l.b16 %v404
    %v1354 = vunpack.c.l.b16 %v405
    %v1355 = vunpack.c.l.b16 %v406
    %v1356 = vunpack.c.l.b16 %v407
    %v1357 = vunpack.c.l.b16 %v408
    %v1358 = vunpack.c.l.b16 %v409
    %v1359 = vunpack.c.l.b16 %v410
    %v1360 = vunpack.c.l.b16 %v411
    %v1361 = vunpack.c.l.b16 %v412
    %v1362 = vunpack.c.l.b16 %v413
    %v1363 = vunpack.c.l.b16 %v414
    %v1364 = vunpack.c.l.b16 %v415
    %v1365 = vunpack.c.l.b16 %v416
    %v1366 = vunpack.c.l.b16 %v417
    %v1367 = vunpack.c.l.b16 %v418
    %v1368 = vunpack.c.l.b16 %v419
    %v1369 = vpack.c.b16 %v986, %v985
    %v1370 = vpack.c.b16 %v988, %v987
    %v1371 = vpack.c.b16 %v990, %v989
    %v1372 = vpack.c.b16 %v992, %v991
    %v1373 = vpack.c.b16 %v994, %v993
    %v1374 = vpack.c.b16 %v996, %v995
    %v1375 = vpack.c.b16 %v998, %v997
    %v1376 = vpack.c.b16 %v1000, %v999
    %v1377 = vpack.c.b16 %v1002, %v1001
    %v1378 = vpack.c.b16 %v1004, %v1003
    %v1379 = vpack.c.b16 %v1006, %v1005
    %v1380 = vpack.c.b16 %v1008, %v1007
    %v1381 = vpack.c.b16 %v1010, %v1009
    %v1382 = vpack.c.b16 %v1012, %v1011
    %v1383 = vpack.c.b16 %v1014, %v1013
    %v1384 = vpack.c.b16 %v1016, %v1015
    %v1385 = vpack.c.b16 %v1018, %v1017
    %v1386 = vpack.c.b16 %v1020, %v1019
    %v1387 = vpack.c.b16 %v1022, %v1021
    %v1388 = vpack.c.b16 %v1024, %v1023
    %v1389 = vpack.c.b16 %v1026, %v1025
    %v1390 = vpack.c.b16 %v1028, %v1027
    %v1391 = vpack.c.b16 %v1030, %v1029
    %v1392 = vpack.c.b16 %v1032, %v1031
    %v1393 = vpack.c.b16 %v1034, %v1033
    %v1394 = vpack.c.b16 %v1036, %v1035
    %v1395 = vpack.c.b16 %v1038, %v1037
    %v1396 = vpack.c.b16 %v1040, %v1039
    %v1397 = vpack.c.b16 %v1042, %v1041
    %v1398 = vpack.c.b16 %v1044, %v1043
    %v1399 = vpack.c.b16 %v1046, %v1045
    %v1400 = vpack.c.b16 %v1048, %v1047
    %v1401 = vpack.c.b16 %v1050, %v1049
    %v1402 = vpack.c.b16 %v1052, %v1051
    %v1403 = vpack.c.b16 %v1054, %v1053
    %v1404 = vpack.c.b16 %v1056, %v1055
    %v1405 = vpack.c.b16 %v1058, %v1057
    %v1406 = vpack.c.b16 %v1060, %v1059
    %v1407 = vpack.c.b16 %v1062, %v1061
    %v1408 = vpack.c.b16 %v1064, %v1063
    %v1409 = vpack.c.b16 %v1066, %v1065
    %v1410 = vpack.c.b16 %v1068, %v1067
    %v1411 = vpack.c.b16 %v1070, %v1069
    %v1412 = vpack.c.b16 %v1072, %v1071
    %v1413 = vpack.c.b16 %v1074, %v1073
    %v1414 = vpack.c.b16 %v1076, %v1075
    %v1415 = vpack.c.b16 %v1078, %v1077
    %v1416 = vpack.c.b16 %v1080, %v1079
    %v1417 = vpack.c.b16 %v1082, %v1081
    %v1418 = vpack.c.b16 %v1084, %v1083
    %v1419 = vpack.c.b16 %v1086, %v1085
    %v1420 = vpack.c.b16 %v1088, %v1087
    %v1421 = vpack.c.b16 %v1090, %v1089
    %v1422 = vpack.c.b16 %v1092, %v1091
    %v1423 = vpack.c.b16 %v1094, %v1093
    %v1424 = vpack.c.b16 %v1096, %v1095
    %v1425 = vpack.c.b16 %v1098, %v1097
    %v1426 = vpack.c.b16 %v1100, %v1099
    %v1427 = vpack.c.b16 %v1102, %v1101
    %v1428 = vpack.c.b16 %v1104, %v1103
    %v1429 = vpack.c.b16 %v1106, %v1105
    %v1430 = vpack.c.b16 %v1108, %v1107
    %v1431 = vpack.c.b16 %v1110, %v1109
    %v1432 = vpack.c.b16 %v1112, %v1111
    %v1433 = vpack.c.b16 %v1114, %v1113
    %v1434 = vpack.c.b16 %v1116, %v1115
    %v1435 = vpack.c.b16 %v1118, %v1117
    %v1436 = vpack.c.b16 %v1120, %v1119
    %v1437 = vpack.c.b16 %v1122, %v1121
    %v1438 = vpack.c.b16 %v1124, %v1123
    %v1439 = vpack.c.b16 %v1126, %v1125
    %v1440 = vpack.c.b16 %v1128, %v1127
    %v1441 = vpack.c.b16 %v1130, %v1129
    %v1442 = vpack.c.b16 %v1132, %v1131
    %v1443 = vpack.c.b16 %v1134, %v1133
    %v1444 = vpack.c.b16 %v1136, %v1135
    %v1445 = vpack.c.b16 %v1138, %v1137
    %v1446 = vpack.c.b16 %v1140, %v1139
    %v1447 = vpack.c.b16 %v1142, %v1141
    %v1448 = vpack.c.b16 %v1144, %v1143
    %v1449 = vpack.c.b16 %v1146, %v1145
    %v1450 = vpack.c.b16 %v1148, %v1147
    %v1451 = vpack.c.b16 %v1150, %v1149
    %v1452 = vpack.c.b16 %v1152, %v1151
    %v1453 = vpack.c.b16 %v1154, %v1153
    %v1454 = vpack.c.b16 %v1156, %v1155
    %v1455 = vpack.c.b16 %v1158, %v1157
    %v1456 = vpack.c.b16 %v1160, %v1159
    %v1457 = vpack.c.b16 %v1162, %v1161
    %v1458 = vpack.c.b16 %v1164, %v1163
    %v1459 = vpack.c.b16 %v1166, %v1165
    %v1460 = vpack.c.b16 %v1168, %v1167
    %v1461 = vpack.c.b16 %v1170, %v1169
    %v1462 = vpack.c.b16 %v1172, %v1171
    %v1463 = vpack.c.b16 %v1174, %v1173
    %v1464 = vpack.c.b16 %v1176, %v1175
    %v1465 = vpack.c.b16 %v1178, %v1177
    %v1466 = vpack.c.b16 %v1180, %v1179
    %v1467 = vpack.c.b16 %v1182, %v1181
    %v1468 = vpack.c.b16 %v1184, %v1183
    %v1469 = vpack.c.b16 %v1186, %v1185
    %v1470 = vpack.c.b16 %v1188, %v1187
    %v1471 = vpack.c.b16 %v1190, %v1189
    %v1472 = vpack.c.b16 %v1192, %v1191
    %v1473 = vpack.c.b16 %v1194, %v1193
    %v1474 = vpack.c.b16 %v1196, %v1195
    %v1475 = vpack.c.b16 %v1198, %v1197
    %v1476 = vpack.c.b16 %v1200, %v1199
    %v1477 = vpack.c.b16 %v1202, %v1201
    %v1478 = vpack.c.b16 %v1204, %v1203
    %v1479 = vpack.c.b16 %v1206, %v1205
    %v1480 = vpack.c.b16 %v1208, %v1207
    %v1481 = vpack.c.b16 %v1210, %v1209
    %v1482 = vpack.c.b16 %v1212, %v1211
    %v1483 = vpack.c.b16 %v1214, %v1213
    %v1484 = vpack.c.b16 %v1216, %v1215
    %v1485 = vpack.c.b16 %v1218, %v1217
    %v1486 = vpack.c.b16 %v1220, %v1219
    %v1487 = vpack.c.b16 %v1222, %v1221
    %v1488 = vpack.c.b16 %v1224, %v1223
    %v1489 = vpack.c.b16 %v1226, %v1225
    %v1490 = vpack.c.b16 %v1228, %v1227
    %v1491 = vpack.c.b16 %v1230, %v1229
    %v1492 = vpack.c.b16 %v1232, %v1231
    %v1493 = vpack.c.b16 %v1234, %v1233
    %v1494 = vpack.c.b16 %v1236, %v1235
    %v1495 = vpack.c.b16 %v1238, %v1237
    %v1496 = vpack.c.b16 %v1240, %v1239
    %v1497 = vpack.c.b16 %v1242, %v1241
    %v1498 = vpack.c.b16 %v1244, %v1243
    %v1499 = vpack.c.b16 %v1246, %v1245
    %v1500 = vpack.c.b16 %v1248, %v1247
    %v1501 = vpack.c.b16 %v1250, %v1249
    %v1502 = vpack.c.b16 %v1252, %v1251
    %v1503 = vpack.c.b16 %v1254, %v1253
    %v1504 = vpack.c.b16 %v1256, %v1255
    %v1505 = vpack.c.b16 %v1258, %v1257
    %v1506 = vpack.c.b16 %v1260, %v1259
    %v1507 = vpack.c.b16 %v1262, %v1261
    %v1508 = vpack.c.b16 %v1264, %v1263
    %v1509 = vpack.c.b16 %v1266, %v1265
    %v1510 = vpack.c.b16 %v1268, %v1267
    %v1511 = vpack.c.b16 %v1270, %v1269
    %v1512 = vpack.c.b16 %v1272, %v1271
    %v1513 = vpack.c.b16 %v1274, %v1273
    %v1514 = vpack.c.b16 %v1276, %v1275
    %v1515 = vpack.c.b16 %v1278, %v1277
    %v1516 = vpack.c.b16 %v1280, %v1279
    %v1517 = vpack.c.b16 %v1282, %v1281
    %v1518 = vpack.c.b16 %v1284, %v1283
    %v1519 = vpack.c.b16 %v1286, %v1285
    %v1520 = vpack.c.b16 %v1288, %v1287
    %v1521 = vpack.c.b16 %v1290, %v1289
    %v1522 = vpack.c.b16 %v1292, %v1291
    %v1523 = vpack.c.b16 %v1294, %v1293
    %v1524 = vpack.c.b16 %v1296, %v1295
    %v1525 = vpack.c.b16 %v1298, %v1297
    %v1526 = vpack.c.b16 %v1300, %v1299
    %v1527 = vpack.c.b16 %v1302, %v1301
    %v1528 = vpack.c.b16 %v1304, %v1303
    %v1529 = vpack.c.b16 %v1306, %v1305
    %v1530 = vpack.c.b16 %v1308, %v1307
    %v1531 = vpack.c.b16 %v1310, %v1309
    %v1532 = vpack.c.b16 %v1312, %v1311
    %v1533 = vpack.c.b16 %v1314, %v1313
    %v1534 = vpack.c.b16 %v1316, %v1315
    %v1535 = vpack.c.b16 %v1318, %v1317
    %v1536 = vpack.c.b16 %v1320, %v1319
    %v1537 = vpack.c.b16 %v1322, %v1321
    %v1538 = vpack.c.b16 %v1324, %v1323
    %v1539 = vpack.c.b16 %v1326, %v1325
    %v1540 = vpack.c.b16 %v1328, %v1327
    %v1541 = vpack.c.b16 %v1330, %v1329
    %v1542 = vpack.c.b16 %v1332, %v1331
    %v1543 = vpack.c.b16 %v1334, %v1333
    %v1544 = vpack.c.b16 %v1336, %v1335
    %v1545 = vpack.c.b16 %v1338, %v1337
    %v1546 = vpack.c.b16 %v1340, %v1339
    %v1547 = vpack.c.b16 %v1342, %v1341
    %v1548 = vpack.c.b16 %v1344, %v1343
    %v1549 = vpack.c.b16 %v1346, %v1345
    %v1550 = vpack.c.b16 %v1348, %v1347
    %v1551 = vpack.c.b16 %v1350, %v1349
    %v1552 = vpack.c.b16 %v1352, %v1351
    %v1553 = vpack.c.b16 %v1354, %v1353
    %v1554 = vpack.c.b16 %v1356, %v1355
    %v1555 = vpack.c.b16 %v1358, %v1357
    %v1556 = vpack.c.b16 %v1360, %v1359
    %v1557 = vpack.c.b16 %v1362, %v1361
    %v1558 = vpack.c.b16 %v1364, %v1363
    %v1559 = vpack.c.b16 %v1366, %v1365
    %v1560 = vpack.c.b16 %v1368, %v1367
    %1753 = vmatprep.subr.bf16.mxu0 0
    %1754 = vmatpush1.bf16.msra.mxu0 %v1369
    %1755 = vmatprep.subr.bf16.mxu0 0
    %1756 = vmatpush1.bf16.msra.mxu0 %v1370
    %1757 = vmatprep.subr.bf16.mxu0 0
    %1758 = vmatpush1.bf16.msra.mxu0 %v1371
    %1759 = vmatprep.subr.bf16.mxu0 0
    %1760 = vmatpush1.bf16.msra.mxu0 %v1372
    %1761 = vmatprep.subr.bf16.mxu0 0
    %1762 = vmatpush1.bf16.msra.mxu0 %v1373
    %1763 = vmatprep.subr.bf16.mxu0 0
    %1764 = vmatpush1.bf16.msra.mxu0 %v1374
    %1765 = vmatprep.subr.bf16.mxu0 0
    %1766 = vmatpush1.bf16.msra.mxu0 %v1375
    %1767 = vmatprep.subr.bf16.mxu0 0
    %1768 = vmatpush1.bf16.msra.mxu0 %v1376
    %1769 = vmatprep.subr.bf16.mxu0 0
    %1770 = vmatpush1.bf16.msra.mxu0 %v1377
    %1771 = vmatprep.subr.bf16.mxu0 0
    %1772 = vmatpush1.bf16.msra.mxu0 %v1378
    %1773 = vmatprep.subr.bf16.mxu0 0
    %1774 = vmatpush1.bf16.msra.mxu0 %v1379
    %1775 = vmatprep.subr.bf16.mxu0 0
    %1776 = vmatpush1.bf16.msra.mxu0 %v1380
    %1777 = vmatprep.subr.bf16.mxu0 0
    %1778 = vmatpush1.bf16.msra.mxu0 %v1381
    %1779 = vmatprep.subr.bf16.mxu0 0
    %1780 = vmatpush1.bf16.msra.mxu0 %v1382
    %1781 = vmatprep.subr.bf16.mxu0 0
    %1782 = vmatpush1.bf16.msra.mxu0 %v1383
    %1783 = vmatprep.subr.bf16.mxu0 0
    %1784 = vmatpush1.bf16.msra.mxu0 %v1384
    %1785 = vmatprep.mubr.bf16.mxu0 %v467
    %1786 = vmatmul.mubr.bf16.gmra.mrb[0].mxu0 %v453
    %v1787 = vpop.f32.mrb[0].mxu0
    %v1788 = vadd.f32 %v425, %v1787
    %v1789 = vpop.f32.mrb[0].mxu0
    %v1790 = vpop.f32.mrb[0].mxu0
    %v1791 = vpop.f32.mrb[0].mxu0
    %1792 = vdwg.mxu0
    %1793 = vmatprep.subr.bf16.mxu0 0
    %1794 = vmatpush1.bf16.msra.mxu0 %v1385
    %1795 = vmatprep.subr.bf16.mxu0 0
    %1796 = vmatpush1.bf16.msra.mxu0 %v1386
    %1797 = vmatprep.subr.bf16.mxu0 0
    %1798 = vmatpush1.bf16.msra.mxu0 %v1387
    %1799 = vmatprep.subr.bf16.mxu0 0
    %1800 = vmatpush1.bf16.msra.mxu0 %v1388
    %1801 = vmatprep.subr.bf16.mxu0 0
    %1802 = vmatpush1.bf16.msra.mxu0 %v1389
    %1803 = vmatprep.subr.bf16.mxu0 0
    %1804 = vmatpush1.bf16.msra.mxu0 %v1390
    %1805 = vmatprep.subr.bf16.mxu0 0
    %1806 = vmatpush1.bf16.msra.mxu0 %v1391
    %1807 = vmatprep.subr.bf16.mxu0 0
    %1808 = vmatpush1.bf16.msra.mxu0 %v1392
    %1809 = vmatprep.subr.bf16.mxu0 0
    %1810 = vmatpush1.bf16.msra.mxu0 %v1393
    %1811 = vmatprep.subr.bf16.mxu0 0
    %1812 = vmatpush1.bf16.msra.mxu0 %v1394
    %1813 = vmatprep.subr.bf16.mxu0 0
    %1814 = vmatpush1.bf16.msra.mxu0 %v1395
    %1815 = vmatprep.subr.bf16.mxu0 0
    %1816 = vmatpush1.bf16.msra.mxu0 %v1396
    %1817 = vmatprep.subr.bf16.mxu0 0
    %1818 = vmatpush1.bf16.msra.mxu0 %v1397
    %1819 = vmatprep.subr.bf16.mxu0 0
    %1820 = vmatpush1.bf16.msra.mxu0 %v1398
    %1821 = vmatprep.subr.bf16.mxu0 0
    %1822 = vmatpush1.bf16.msra.mxu0 %v1399
    %1823 = vmatprep.subr.bf16.mxu0 0
    %1824 = vmatpush1.bf16.msra.mxu0 %v1400
    %1825 = vmatprep.mubr.bf16.mxu0 %v477
    %1826 = vmatmul.mubr.bf16.gmra.mrb[0].mxu0 %v475
    %v1827 = vpop.f32.mrb[0].mxu0
    %v1828 = vadd.f32 %v1788, %v1827
    %v1829 = vpop.f32.mrb[0].mxu0
    %v1830 = vpop.f32.mrb[0].mxu0
    %v1831 = vpop.f32.mrb[0].mxu0
    %1832 = vdwg.mxu0
    %1833 = vmatprep.subr.bf16.mxu0 0
    %1834 = vmatpush1.bf16.msra.mxu0 %v1401
    %1835 = vmatprep.subr.bf16.mxu0 0
    %1836 = vmatpush1.bf16.msra.mxu0 %v1402
    %1837 = vmatprep.subr.bf16.mxu0 0
    %1838 = vmatpush1.bf16.msra.mxu0 %v1403
    %1839 = vmatprep.subr.bf16.mxu0 0
    %1840 = vmatpush1.bf16.msra.mxu0 %v1404
    %1841 = vmatprep.subr.bf16.mxu0 0
    %1842 = vmatpush1.bf16.msra.mxu0 %v1405
    %1843 = vmatprep.subr.bf16.mxu0 0
    %1844 = vmatpush1.bf16.msra.mxu0 %v1406
    %1845 = vmatprep.subr.bf16.mxu0 0
    %1846 = vmatpush1.bf16.msra.mxu0 %v1407
    %1847 = vmatprep.subr.bf16.mxu0 0
    %1848 = vmatpush1.bf16.msra.mxu0 %v1408
    %1849 = vmatprep.subr.bf16.mxu0 0
    %1850 = vmatpush1.bf16.msra.mxu0 %v1409
    %1851 = vmatprep.subr.bf16.mxu0 0
    %1852 = vmatpush1.bf16.msra.mxu0 %v1410
    %1853 = vmatprep.subr.bf16.mxu0 0
    %1854 = vmatpush1.bf16.msra.mxu0 %v1411
    %1855 = vmatprep.subr.bf16.mxu0 0
    %1856 = vmatpush1.bf16.msra.mxu0 %v1412
    %1857 = vmatprep.subr.bf16.mxu0 0
    %1858 = vmatpush1.bf16.msra.mxu0 %v1413
    %1859 = vmatprep.subr.bf16.mxu0 0
    %1860 = vmatpush1.bf16.msra.mxu0 %v1414
    %1861 = vmatprep.subr.bf16.mxu0 0
    %1862 = vmatpush1.bf16.msra.mxu0 %v1415
    %1863 = vmatprep.subr.bf16.mxu0 0
    %1864 = vmatpush1.bf16.msra.mxu0 %v1416
    %1865 = vmatprep.mubr.bf16.mxu0 %v474
    %1866 = vmatmul.mubr.bf16.gmra.mrb[0].mxu0 %v460
    %v1867 = vpop.f32.mrb[0].mxu0
    %v1868 = vadd.f32 %v1828, %v1867
    %v1869 = vpop.f32.mrb[0].mxu0
    %v1870 = vpop.f32.mrb[0].mxu0
    %v1871 = vpop.f32.mrb[0].mxu0
    %1872 = vdwg.mxu0
    %1873 = vmatprep.subr.bf16.mxu0 0
    %1874 = vmatpush1.bf16.msra.mxu0 %v1417
    %1875 = vmatprep.subr.bf16.mxu0 0
    %1876 = vmatpush1.bf16.msra.mxu0 %v1418
    %1877 = vmatprep.subr.bf16.mxu0 0
    %1878 = vmatpush1.bf16.msra.mxu0 %v1419
    %1879 = vmatprep.subr.bf16.mxu0 0
    %1880 = vmatpush1.bf16.msra.mxu0 %v1420
    %1881 = vmatprep.subr.bf16.mxu0 0
    %1882 = vmatpush1.bf16.msra.mxu0 %v1421
    %1883 = vmatprep.subr.bf16.mxu0 0
    %1884 = vmatpush1.bf16.msra.mxu0 %v1422
    %1885 = vmatprep.subr.bf16.mxu0 0
    %1886 = vmatpush1.bf16.msra.mxu0 %v1423
    %1887 = vmatprep.subr.bf16.mxu0 0
    %1888 = vmatpush1.bf16.msra.mxu0 %v1424
    %1889 = vmatprep.subr.bf16.mxu0 0
    %1890 = vmatpush1.bf16.msra.mxu0 %v1425
    %1891 = vmatprep.subr.bf16.mxu0 0
    %1892 = vmatpush1.bf16.msra.mxu0 %v1426
    %1893 = vmatprep.subr.bf16.mxu0 0
    %1894 = vmatpush1.bf16.msra.mxu0 %v1427
    %1895 = vmatprep.subr.bf16.mxu0 0
    %1896 = vmatpush1.bf16.msra.mxu0 %v1428
    %1897 = vmatprep.subr.bf16.mxu0 0
    %1898 = vmatpush1.bf16.msra.mxu0 %v1429
    %1899 = vmatprep.subr.bf16.mxu0 0
    %1900 = vmatpush1.bf16.msra.mxu0 %v1430
    %1901 = vmatprep.subr.bf16.mxu0 0
    %1902 = vmatpush1.bf16.msra.mxu0 %v1431
    %1903 = vmatprep.subr.bf16.mxu0 0
    %1904 = vmatpush1.bf16.msra.mxu0 %v1432
    %1905 = vmatprep.mubr.bf16.mxu0 %v478
    %1906 = vmatmul.mubr.bf16.gmra.mrb[0].mxu0 %v476
    %v1907 = vpop.f32.mrb[0].mxu0
    %v1908 = vadd.f32 %v1868, %v1907
    %v1909 = vpop.f32.mrb[0].mxu0
    %v1910 = vpop.f32.mrb[0].mxu0
    %v1911 = vpop.f32.mrb[0].mxu0
    %1912 = vdwg.mxu0
    %1913 = vmatprep.subr.bf16.mxu0 0
    %1914 = vmatpush1.bf16.msra.mxu0 %v1433
    %1915 = vmatprep.subr.bf16.mxu0 0
    %1916 = vmatpush1.bf16.msra.mxu0 %v1434
    %1917 = vmatprep.subr.bf16.mxu0 0
    %1918 = vmatpush1.bf16.msra.mxu0 %v1435
    %1919 = vmatprep.subr.bf16.mxu0 0
    %1920 = vmatpush1.bf16.msra.mxu0 %v1436
    %1921 = vmatprep.subr.bf16.mxu0 0
    %1922 = vmatpush1.bf16.msra.mxu0 %v1437
    %1923 = vmatprep.subr.bf16.mxu0 0
    %1924 = vmatpush1.bf16.msra.mxu0 %v1438
    %1925 = vmatprep.subr.bf16.mxu0 0
    %1926 = vmatpush1.bf16.msra.mxu0 %v1439
    %1927 = vmatprep.subr.bf16.mxu0 0
    %1928 = vmatpush1.bf16.msra.mxu0 %v1440
    %1929 = vmatprep.subr.bf16.mxu0 0
    %1930 = vmatpush1.bf16.msra.mxu0 %v1441
    %1931 = vmatprep.subr.bf16.mxu0 0
    %1932 = vmatpush1.bf16.msra.mxu0 %v1442
    %1933 = vmatprep.subr.bf16.mxu0 0
    %1934 = vmatpush1.bf16.msra.mxu0 %v1443
    %1935 = vmatprep.subr.bf16.mxu0 0
    %1936 = vmatpush1.bf16.msra.mxu0 %v1444
    %1937 = vmatprep.subr.bf16.mxu0 0
    %1938 = vmatpush1.bf16.msra.mxu0 %v1445
    %1939 = vmatprep.subr.bf16.mxu0 0
    %1940 = vmatpush1.bf16.msra.mxu0 %v1446
    %1941 = vmatprep.subr.bf16.mxu0 0
    %1942 = vmatpush1.bf16.msra.mxu0 %v1447
    %1943 = vmatprep.subr.bf16.mxu0 0
    %1944 = vmatpush1.bf16.msra.mxu0 %v1448
    %1945 = vmatprep.mubr.bf16.mxu0 %v516
    %1946 = vmatmul.mubr.bf16.gmra.mrb[0].mxu0 %v502
    %v1947 = vpop.f32.mrb[0].mxu0
    %v1948 = vadd.f32 %v1908, %v1947
    %v1949 = vpop.f32.mrb[0].mxu0
    %v1950 = vpop.f32.mrb[0].mxu0
    %v1951 = vpop.f32.mrb[0].mxu0
    %1952 = vdwg.mxu0
    %1953 = vmatprep.subr.bf16.mxu0 0
    %1954 = vmatpush1.bf16.msra.mxu0 %v1449
    %1955 = vmatprep.subr.bf16.mxu0 0
    %1956 = vmatpush1.bf16.msra.mxu0 %v1450
    %1957 = vmatprep.subr.bf16.mxu0 0
    %1958 = vmatpush1.bf16.msra.mxu0 %v1451
    %1959 = vmatprep.subr.bf16.mxu0 0
    %1960 = vmatpush1.bf16.msra.mxu0 %v1452
    %1961 = vmatprep.subr.bf16.mxu0 0
    %1962 = vmatpush1.bf16.msra.mxu0 %v1453
    %1963 = vmatprep.subr.bf16.mxu0 0
    %1964 = vmatpush1.bf16.msra.mxu0 %v1454
    %1965 = vmatprep.subr.bf16.mxu0 0
    %1966 = vmatpush1.bf16.msra.mxu0 %v1455
    %1967 = vmatprep.subr.bf16.mxu0 0
    %1968 = vmatpush1.bf16.msra.mxu0 %v1456
    %1969 = vmatprep.subr.bf16.mxu0 0
    %1970 = vmatpush1.bf16.msra.mxu0 %v1457
    %1971 = vmatprep.subr.bf16.mxu0 0
    %1972 = vmatpush1.bf16.msra.mxu0 %v1458
    %1973 = vmatprep.subr.bf16.mxu0 0
    %1974 = vmatpush1.bf16.msra.mxu0 %v1459
    %1975 = vmatprep.subr.bf16.mxu0 0
    %1976 = vmatpush1.bf16.msra.mxu0 %v1460
    %1977 = vmatprep.subr.bf16.mxu0 0
    %1978 = vmatpush1.bf16.msra.mxu0 %v1461
    %1979 = vmatprep.subr.bf16.mxu0 0
    %1980 = vmatpush1.bf16.msra.mxu0 %v1462
    %1981 = vmatprep.subr.bf16.mxu0 0
    %1982 = vmatpush1.bf16.msra.mxu0 %v1463
    %1983 = vmatprep.subr.bf16.mxu0 0
    %1984 = vmatpush1.bf16.msra.mxu0 %v1464
    %1985 = vmatprep.mubr.bf16.mxu0 %v526
    %1986 = vmatmul.mubr.bf16.gmra.mrb[0].mxu0 %v524
    %v1987 = vpop.f32.mrb[0].mxu0
    %v1988 = vadd.f32 %v1948, %v1987
    %v1989 = vpop.f32.mrb[0].mxu0
    %v1990 = vpop.f32.mrb[0].mxu0
    %v1991 = vpop.f32.mrb[0].mxu0
    %1992 = vdwg.mxu0
    %1993 = vmatprep.subr.bf16.mxu0 0
    %1994 = vmatpush1.bf16.msra.mxu0 %v1465
    %1995 = vmatprep.subr.bf16.mxu0 0
    %1996 = vmatpush1.bf16.msra.mxu0 %v1466
    %1997 = vmatprep.subr.bf16.mxu0 0
    %1998 = vmatpush1.bf16.msra.mxu0 %v1467
    %1999 = vmatprep.subr.bf16.mxu0 0
    %2000 = vmatpush1.bf16.msra.mxu0 %v1468
    %2001 = vmatprep.subr.bf16.mxu0 0
    %2002 = vmatpush1.bf16.msra.mxu0 %v1469
    %2003 = vmatprep.subr.bf16.mxu0 0
    %2004 = vmatpush1.bf16.msra.mxu0 %v1470
    %2005 = vmatprep.subr.bf16.mxu0 0
    %2006 = vmatpush1.bf16.msra.mxu0 %v1471
    %2007 = vmatprep.subr.bf16.mxu0 0
    %2008 = vmatpush1.bf16.msra.mxu0 %v1472
    %2009 = vmatprep.subr.bf16.mxu0 0
    %2010 = vmatpush1.bf16.msra.mxu0 %v1473
    %2011 = vmatprep.subr.bf16.mxu0 0
    %2012 = vmatpush1.bf16.msra.mxu0 %v1474
    %2013 = vmatprep.subr.bf16.mxu0 0
    %2014 = vmatpush1.bf16.msra.mxu0 %v1475
    %2015 = vmatprep.subr.bf16.mxu0 0
    %2016 = vmatpush1.bf16.msra.mxu0 %v1476
    %2017 = vmatprep.subr.bf16.mxu0 0
    %2018 = vmatpush1.bf16.msra.mxu0 %v1477
    %2019 = vmatprep.subr.bf16.mxu0 0
    %2020 = vmatpush1.bf16.msra.mxu0 %v1478
    %2021 = vmatprep.subr.bf16.mxu0 0
    %2022 = vmatpush1.bf16.msra.mxu0 %v1479
    %2023 = vmatprep.subr.bf16.mxu0 0
    %2024 = vmatpush1.bf16.msra.mxu0 %v1480
    %2025 = vmatprep.mubr.bf16.mxu0 %v523
    %2026 = vmatmul.mubr.bf16.gmra.mrb[0].mxu0 %v509
    %v2027 = vpop.f32.mrb[0].mxu0
    %v2028 = vadd.f32 %v1988, %v2027
    %v2029 = vpop.f32.mrb[0].mxu0
    %v2030 = vpop.f32.mrb[0].mxu0
    %v2031 = vpop.f32.mrb[0].mxu0
    %2032 = vdwg.mxu0
    %2033 = vmatprep.subr.bf16.mxu0 0
    %2034 = vmatpush1.bf16.msra.mxu0 %v1481
    %2035 = vmatprep.subr.bf16.mxu0 0
    %2036 = vmatpush1.bf16.msra.mxu0 %v1482
    %2037 = vmatprep.subr.bf16.mxu0 0
    %2038 = vmatpush1.bf16.msra.mxu0 %v1483
    %2039 = vmatprep.subr.bf16.mxu0 0
    %2040 = vmatpush1.bf16.msra.mxu0 %v1484
    %2041 = vmatprep.subr.bf16.mxu0 0
    %2042 = vmatpush1.bf16.msra.mxu0 %v1485
    %2043 = vmatprep.subr.bf16.mxu0 0
    %2044 = vmatpush1.bf16.msra.mxu0 %v1486
    %2045 = vmatprep.subr.bf16.mxu0 0
    %2046 = vmatpush1.bf16.msra.mxu0 %v1487
    %2047 = vmatprep.subr.bf16.mxu0 0
    %2048 = vmatpush1.bf16.msra.mxu0 %v1488
    %2049 = vmatprep.subr.bf16.mxu0 0
    %2050 = vmatpush1.bf16.msra.mxu0 %v1489
    %2051 = vmatprep.subr.bf16.mxu0 0
    %2052 = vmatpush1.bf16.msra.mxu0 %v1490
    %2053 = vmatprep.subr.bf16.mxu0 0
    %2054 = vmatpush1.bf16.msra.mxu0 %v1491
    %2055 = vmatprep.subr.bf16.mxu0 0
    %2056 = vmatpush1.bf16.msra.mxu0 %v1492
    %2057 = vmatprep.subr.bf16.mxu0 0
    %2058 = vmatpush1.bf16.msra.mxu0 %v1493
    %2059 = vmatprep.subr.bf16.mxu0 0
    %2060 = vmatpush1.bf16.msra.mxu0 %v1494
    %2061 = vmatprep.subr.bf16.mxu0 0
    %2062 = vmatpush1.bf16.msra.mxu0 %v1495
    %2063 = vmatprep.subr.bf16.mxu0 0
    %2064 = vmatpush1.bf16.msra.mxu0 %v1496
    %2065 = vmatprep.mubr.bf16.mxu0 %v527
    %2066 = vmatmul.mubr.bf16.gmra.mrb[0].mxu0 %v525
    %v2067 = vpop.f32.mrb[0].mxu0
    %v2068 = vadd.f32 %v2028, %v2067
    %v2069 = vpop.f32.mrb[0].mxu0
    %v2070 = vpop.f32.mrb[0].mxu0
    %v2071 = vpop.f32.mrb[0].mxu0
    %2072 = vdwg.mxu0
    %2073 = vmatprep.subr.bf16.mxu0 0
    %2074 = vmatpush1.bf16.msra.mxu0 %v1497
    %2075 = vmatprep.subr.bf16.mxu0 0
    %2076 = vmatpush1.bf16.msra.mxu0 %v1498
    %2077 = vmatprep.subr.bf16.mxu0 0
    %2078 = vmatpush1.bf16.msra.mxu0 %v1499
    %2079 = vmatprep.subr.bf16.mxu0 0
    %2080 = vmatpush1.bf16.msra.mxu0 %v1500
    %2081 = vmatprep.subr.bf16.mxu0 0
    %2082 = vmatpush1.bf16.msra.mxu0 %v1501
    %2083 = vmatprep.subr.bf16.mxu0 0
    %2084 = vmatpush1.bf16.msra.mxu0 %v1502
    %2085 = vmatprep.subr.bf16.mxu0 0
    %2086 = vmatpush1.bf16.msra.mxu0 %v1503
    %2087 = vmatprep.subr.bf16.mxu0 0
    %2088 = vmatpush1.bf16.msra.mxu0 %v1504
    %2089 = vmatprep.subr.bf16.mxu0 0
    %2090 = vmatpush1.bf16.msra.mxu0 %v1505
    %2091 = vmatprep.subr.bf16.mxu0 0
    %2092 = vmatpush1.bf16.msra.mxu0 %v1506
    %2093 = vmatprep.subr.bf16.mxu0 0
    %2094 = vmatpush1.bf16.msra.mxu0 %v1507
    %2095 = vmatprep.subr.bf16.mxu0 0
    %2096 = vmatpush1.bf16.msra.mxu0 %v1508
    %2097 = vmatprep.subr.bf16.mxu0 0
    %2098 = vmatpush1.bf16.msra.mxu0 %v1509
    %2099 = vmatprep.subr.bf16.mxu0 0
    %2100 = vmatpush1.bf16.msra.mxu0 %v1510
    %2101 = vmatprep.subr.bf16.mxu0 0
    %2102 = vmatpush1.bf16.msra.mxu0 %v1511
    %2103 = vmatprep.subr.bf16.mxu0 0
    %2104 = vmatpush1.bf16.msra.mxu0 %v1512
    %2105 = vmatprep.mubr.bf16.mxu0 %v565
    %2106 = vmatmul.mubr.bf16.gmra.mrb[0].mxu0 %v551
    %v2107 = vpop.f32.mrb[0].mxu0
    %v2108 = vadd.f32 %v2068, %v2107
    %v2109 = vpop.f32.mrb[0].mxu0
    %v2110 = vpop.f32.mrb[0].mxu0
    %v2111 = vpop.f32.mrb[0].mxu0
    %2112 = vdwg.mxu0
    %2113 = vmatprep.subr.bf16.mxu0 0
    %2114 = vmatpush1.bf16.msra.mxu0 %v1513
    %2115 = vmatprep.subr.bf16.mxu0 0
    %2116 = vmatpush1.bf16.msra.mxu0 %v1514
    %2117 = vmatprep.subr.bf16.mxu0 0
    %2118 = vmatpush1.bf16.msra.mxu0 %v1515
    %2119 = vmatprep.subr.bf16.mxu0 0
    %2120 = vmatpush1.bf16.msra.mxu0 %v1516
    %2121 = vmatprep.subr.bf16.mxu0 0
    %2122 = vmatpush1.bf16.msra.mxu0 %v1517
    %2123 = vmatprep.subr.bf16.mxu0 0
    %2124 = vmatpush1.bf16.msra.mxu0 %v1518
    %2125 = vmatprep.subr.bf16.mxu0 0
    %2126 = vmatpush1.bf16.msra.mxu0 %v1519
    %2127 = vmatprep.subr.bf16.mxu0 0
    %2128 = vmatpush1.bf16.msra.mxu0 %v1520
    %2129 = vmatprep.subr.bf16.mxu0 0
    %2130 = vmatpush1.bf16.msra.mxu0 %v1521
    %2131 = vmatprep.subr.bf16.mxu0 0
    %2132 = vmatpush1.bf16.msra.mxu0 %v1522
    %2133 = vmatprep.subr.bf16.mxu0 0
    %2134 = vmatpush1.bf16.msra.mxu0 %v1523
    %2135 = vmatprep.subr.bf16.mxu0 0
    %2136 = vmatpush1.bf16.msra.mxu0 %v1524
    %2137 = vmatprep.subr.bf16.mxu0 0
    %2138 = vmatpush1.bf16.msra.mxu0 %v1525
    %2139 = vmatprep.subr.bf16.mxu0 0
    %2140 = vmatpush1.bf16.msra.mxu0 %v1526
    %2141 = vmatprep.subr.bf16.mxu0 0
    %2142 = vmatpush1.bf16.msra.mxu0 %v1527
    %2143 = vmatprep.subr.bf16.mxu0 0
    %2144 = vmatpush1.bf16.msra.mxu0 %v1528
    %2145 = vmatprep.mubr.bf16.mxu0 %v575
    %2146 = vmatmul.mubr.bf16.gmra.mrb[0].mxu0 %v573
    %v2147 = vpop.f32.mrb[0].mxu0
    %v2148 = vadd.f32 %v2108, %v2147
    %v2149 = vpop.f32.mrb[0].mxu0
    %v2150 = vpop.f32.mrb[0].mxu0
    %v2151 = vpop.f32.mrb[0].mxu0
    %2152 = vdwg.mxu0
    %2153 = vmatprep.subr.bf16.mxu0 0
    %2154 = vmatpush1.bf16.msra.mxu0 %v1529
    %2155 = vmatprep.subr.bf16.mxu0 0
    %2156 = vmatpush1.bf16.msra.mxu0 %v1530
    %2157 = vmatprep.subr.bf16.mxu0 0
    %2158 = vmatpush1.bf16.msra.mxu0 %v1531
    %2159 = vmatprep.subr.bf16.mxu0 0
    %2160 = vmatpush1.bf16.msra.mxu0 %v1532
    %2161 = vmatprep.subr.bf16.mxu0 0
    %2162 = vmatpush1.bf16.msra.mxu0 %v1533
    %2163 = vmatprep.subr.bf16.mxu0 0
    %2164 = vmatpush1.bf16.msra.mxu0 %v1534
    %2165 = vmatprep.subr.bf16.mxu0 0
    %2166 = vmatpush1.bf16.msra.mxu0 %v1535
    %2167 = vmatprep.subr.bf16.mxu0 0
    %2168 = vmatpush1.bf16.msra.mxu0 %v1536
    %2169 = vmatprep.subr.bf16.mxu0 0
    %2170 = vmatpush1.bf16.msra.mxu0 %v1537
    %2171 = vmatprep.subr.bf16.mxu0 0
    %2172 = vmatpush1.bf16.msra.mxu0 %v1538
    %2173 = vmatprep.subr.bf16.mxu0 0
    %2174 = vmatpush1.bf16.msra.mxu0 %v1539
    %2175 = vmatprep.subr.bf16.mxu0 0
    %2176 = vmatpush1.bf16.msra.mxu0 %v1540
    %2177 = vmatprep.subr.bf16.mxu0 0
    %2178 = vmatpush1.bf16.msra.mxu0 %v1541
    %2179 = vmatprep.subr.bf16.mxu0 0
    %2180 = vmatpush1.bf16.msra.mxu0 %v1542
    %2181 = vmatprep.subr.bf16.mxu0 0
    %2182 = vmatpush1.bf16.msra.mxu0 %v1543
    %2183 = vmatprep.subr.bf16.mxu0 0
    %2184 = vmatpush1.bf16.msra.mxu0 %v1544
    %2185 = vmatprep.mubr.bf16.mxu0 %v572
    %2186 = vmatmul.mubr.bf16.gmra.mrb[0].mxu0 %v558
    %v2187 = vpop.f32.mrb[0].mxu0
    %v2188 = vadd.f32 %v2148, %v2187
    %v2189 = vpop.f32.mrb[0].mxu0
    %v2190 = vpop.f32.mrb[0].mxu0
    %v2191 = vpop.f32.mrb[0].mxu0
    %2192 = vdwg.mxu0
    %2193 = vmatprep.subr.bf16.mxu0 0
    %2194 = vmatpush1.bf16.msra.mxu0 %v1545
    %2195 = vmatprep.subr.bf16.mxu0 0
    %2196 = vmatpush1.bf16.msra.mxu0 %v1546
    %2197 = vmatprep.subr.bf16.mxu0 0
    %2198 = vmatpush1.bf16.msra.mxu0 %v1547
    %2199 = vmatprep.subr.bf16.mxu0 0
    %2200 = vmatpush1.bf16.msra.mxu0 %v1548
    %2201 = vmatprep.subr.bf16.mxu0 0
    %2202 = vmatpush1.bf16.msra.mxu0 %v1549
    %2203 = vmatprep.subr.bf16.mxu0 0
    %2204 = vmatpush1.bf16.msra.mxu0 %v1550
    %2205 = vmatprep.subr.bf16.mxu0 0
    %2206 = vmatpush1.bf16.msra.mxu0 %v1551
    %2207 = vmatprep.subr.bf16.mxu0 0
    %2208 = vmatpush1.bf16.msra.mxu0 %v1552
    %2209 = vmatprep.subr.bf16.mxu0 0
    %2210 = vmatpush1.bf16.msra.mxu0 %v1553
    %2211 = vmatprep.subr.bf16.mxu0 0
    %2212 = vmatpush1.bf16.msra.mxu0 %v1554
    %2213 = vmatprep.subr.bf16.mxu0 0
    %2214 = vmatpush1.bf16.msra.mxu0 %v1555
    %2215 = vmatprep.subr.bf16.mxu0 0
    %2216 = vmatpush1.bf16.msra.mxu0 %v1556
    %2217 = vmatprep.subr.bf16.mxu0 0
    %2218 = vmatpush1.bf16.msra.mxu0 %v1557
    %2219 = vmatprep.subr.bf16.mxu0 0
    %2220 = vmatpush1.bf16.msra.mxu0 %v1558
    %2221 = vmatprep.subr.bf16.mxu0 0
    %2222 = vmatpush1.bf16.msra.mxu0 %v1559
    %2223 = vmatprep.subr.bf16.mxu0 0
    %2224 = vmatpush1.bf16.msra.mxu0 %v1560
    %2225 = vmatprep.mubr.bf16.mxu0 %v576
    %2226 = vmatmul.mubr.bf16.gmra.mrb[0].mxu0 %v574
    %v2227 = vpop.f32.mrb[0].mxu0
    %v2228 = vadd.f32 %v2188, %v2227
    %v2229 = vpop.f32.mrb[0].mxu0
    %v2230 = vpop.f32.mrb[0].mxu0
    %v2231 = vpop.f32.mrb[0].mxu0
    %2232 = vdwg.mxu0
    %v2233 = vxor.u32 %v2228, 2147483648
    %v2234 = vmul.f32 %v2233, 1.442695
    %v2235 = vpow.pop %v2234
    %v2236 = vadd.f32 %v2235, 1.0
    %v2237 = vrcp.pop %v2236
    %v2238 = vmul.f32 1.0, %v2237
    %vm2239 = vcmp.gt.f32.partialorder %v2238, 0.5
    %v2240 = vsel %vm2239, 1, 0
    %v2241 = vcvt.s32.f32 %v2240
    %2243 = vrot.lane.b32.xlu0 %v2238, 126
    %v2244 = vpop.permute.xlu0 %2243
    %v2246 = vmin.f32 %v2238, %v2244
    %v2247 = vmax.f32 %v2238, %v2244
    %v2248 = vadd.f32 %v2246, %v2247
    %v2249 = vmul.f32 %v2248, 0.5
    %v2250 = vsub.f32 %v2246, %v2249
    %v2251 = vmul.f32 %v2250, 1.5
    %v2252 = vadd.f32 %v2251, %v2249
    %v2253 = vmax.f32 %v2252, 0.0
    %v2254 = vsub.f32 %v2247, %v2249
    %v2255 = vmul.f32 %v2254, 1.5
    %v2256 = vadd.f32 %v2255, %v2249
    %v2257 = vmin.f32 %v2256, 1.0
    %v2258 = vmul.f32 %v2253, 32.0
    %v2259 = vfloor.f32 %v2258
    %v2262 = vunpack.c.l.s4 1966171168
    %v2263 = vunpack.c.0.s8 %v2262
    %v2264 = vlaneseq
    %v2265 = vshrl.u32 %v2264, 7
    %v2266 = vsub.s32 %v2263, %v2265
    %v2267 = vrot.slane %v2259, %v2266
    %v2268 = vcombine.high %v2267, %v2267
    %v2270 = vunpack.c.l.s4 1966171168
    %v2271 = vunpack.c.0.s8 %v2270
    %v2272 = vlaneseq
    %v2273 = vshrl.u32 %v2272, 7
    %v2274 = vsub.s32 %v2271, %v2273
    %v2275 = vrot.slane %v2267, %v2274
    %v2277 = vunpack.c.l.s4 1966171168
    %v2278 = vunpack.c.0.s8 %v2277
    %v2279 = vlaneseq
    %v2280 = vshrl.u32 %v2279, 7
    %v2281 = vsub.s32 %v2278, %v2280
    %v2282 = vrot.slane %v2268, %v2281
    %v2285 = vmul.f32 %v2257, 32.0
    %v2286 = vfloor.f32 %v2285
    %v2289 = vunpack.c.l.s4 1966171168
    %v2290 = vunpack.c.0.s8 %v2289
    %v2291 = vlaneseq
    %v2292 = vshrl.u32 %v2291, 7
    %v2293 = vsub.s32 %v2290, %v2292
    %v2294 = vrot.slane %v2286, %v2293
    %v2295 = vcombine.high %v2294, %v2294
    %v2297 = vunpack.c.l.s4 1966171168
    %v2298 = vunpack.c.0.s8 %v2297
    %v2299 = vlaneseq
    %v2300 = vshrl.u32 %v2299, 7
    %v2301 = vsub.s32 %v2298, %v2300
    %v2302 = vrot.slane %v2294, %v2301
    %v2304 = vunpack.c.l.s4 1966171168
    %v2305 = vunpack.c.0.s8 %v2304
    %v2306 = vlaneseq
    %v2307 = vshrl.u32 %v2306, 7
    %v2308 = vsub.s32 %v2305, %v2307
    %v2309 = vrot.slane %v2295, %v2308
    %v2312 = vlaneseq
    %v2313 = vshrl.u32 %v2312, 7
    %v2314 = vadd.s32 %v2313, 8
    %v2315 = vcvt.s32.f32 %v2313
    %v2316 = vcvt.s32.f32 %v2314
    %v2317 = vlaneseq
    %v2318 = vand.u32 %v2317, 127
    %v2319 = vcvt.s32.f32 %v2318
    %v2320 = vsub.f32 %v2302, %v2275
    %v2321 = vsub.f32 %v2309, %v2282
    %v2322 = vrcp.pop 16.0
    %v2323 = vmul.f32 %v2320, %v2322
    %v2324 = vmul.f32 %v2321, %v2322
    %v2325 = vmax.f32 %v2323, 1.0
    %v2326 = vmax.f32 %v2324, 1.0
    %v2327 = vadd.f32 %v2315, 0.5
    %v2328 = vadd.f32 %v2316, 0.5
    %v2331 = vlaneseq
    %v2332 = vshrl.u32 %v2331, 7
    %v2333 = vsub.s32 0, %v2332
    %v2334 = vrot.slane %v2323, %v2333
    %v2335 = vlaneseq
    %v2336 = vshrl.u32 %v2335, 7
    %v2337 = vsub.s32 0, %v2336
    %v2338 = vrot.slane %v2324, %v2337
    %2339 = vset.pattern.permute.xlu0 2
    %2340 = vperm.xlu0 %2339, %v2334
    %v2341 = vpop.permute.xlu0 %2340
    %2343 = vset.pattern.permute.xlu0 2
    %2344 = vperm.xlu0 %2343, %v2338
    %v2345 = vpop.permute.xlu0 %2344
    %v2347 = vmul.f32 %v2327, %v2341
    %v2348 = vmul.f32 %v2328, %v2341
    %v2349 = vmul.f32 %v2327, %v2345
    %v2350 = vmul.f32 %v2328, %v2345
    %v2351 = vlaneseq
    %v2352 = vshrl.u32 %v2351, 7
    %v2353 = vsub.s32 0, %v2352
    %v2354 = vrot.slane %v2275, %v2353
    %v2355 = vlaneseq
    %v2356 = vshrl.u32 %v2355, 7
    %v2357 = vsub.s32 0, %v2356
    %v2358 = vrot.slane %v2282, %v2357
    %2359 = vset.pattern.permute.xlu0 2
    %2360 = vperm.xlu0 %2359, %v2354
    %v2361 = vpop.permute.xlu0 %2360
    %2363 = vset.pattern.permute.xlu0 2
    %2364 = vperm.xlu0 %2363, %v2358
    %v2365 = vpop.permute.xlu0 %2364
    %v2367 = vadd.f32 %v2361, %v2347
    %v2368 = vadd.f32 %v2361, %v2348
    %v2369 = vadd.f32 %v2365, %v2349
    %v2370 = vadd.f32 %v2365, %v2350
    %v2371 = vadd.f32 %v2319, 0.5
    %v2372 = vsub.f32 %v2371, %v2367
    %v2373 = vsub.f32 %v2371, %v2368
    %v2374 = vsub.f32 %v2371, %v2369
    %v2375 = vsub.f32 %v2371, %v2370
    %v2378 = vlaneseq
    %v2379 = vshrl.u32 %v2378, 7
    %v2380 = vsub.s32 0, %v2379
    %v2381 = vrot.slane %v2325, %v2380
    %v2382 = vlaneseq
    %v2383 = vshrl.u32 %v2382, 7
    %v2384 = vsub.s32 0, %v2383
    %v2385 = vrot.slane %v2326, %v2384
    %2386 = vset.pattern.permute.xlu0 2
    %2387 = vperm.xlu0 %2386, %v2381
    %v2388 = vpop.permute.xlu0 %2387
    %2390 = vset.pattern.permute.xlu0 2
    %2391 = vperm.xlu0 %2390, %v2385
    %v2392 = vpop.permute.xlu0 %2391
    %v2394 = vrcp.pop %v2388
    %v2395 = vmul.f32 %v2372, %v2394
    %v2396 = vmul.f32 %v2373, %v2394
    %v2397 = vrcp.pop %v2392
    %v2398 = vmul.f32 %v2374, %v2397
    %v2399 = vmul.f32 %v2375, %v2397
    %v2400 = vand.u32 2147483647, %v2395
    %v2401 = vand.u32 2147483647, %v2396
    %v2402 = vand.u32 2147483647, %v2398
    %v2403 = vand.u32 2147483647, %v2399
    %v2404 = vsub.f32 1.0, %v2400
    %v2405 = vsub.f32 1.0, %v2401
    %v2406 = vsub.f32 1.0, %v2402
    %v2407 = vsub.f32 1.0, %v2403
    %v2408 = vmax.f32 %v2404, 0.0
    %v2409 = vmax.f32 %v2405, 0.0
    %v2410 = vmax.f32 %v2406, 0.0
    %v2411 = vmax.f32 %v2407, 0.0
    %vm2412 = vcmp.ge.f32.partialorder %v2319, %v2361
    %vm2413 = vcmp.ge.f32.partialorder %v2319, %v2365
    %v2414 = vlaneseq
    %v2415 = vshrl.u32 %v2414, 7
    %v2416 = vsub.s32 0, %v2415
    %v2417 = vrot.slane %v2302, %v2416
    %v2418 = vlaneseq
    %v2419 = vshrl.u32 %v2418, 7
    %v2420 = vsub.s32 0, %v2419
    %v2421 = vrot.slane %v2309, %v2420
    %2422 = vset.pattern.permute.xlu0 2
    %2423 = vperm.xlu0 %2422, %v2417
    %v2424 = vpop.permute.xlu0 %2423
    %2426 = vset.pattern.permute.xlu0 2
    %2427 = vperm.xlu0 %2426, %v2421
    %v2428 = vpop.permute.xlu0 %2427
    %vm2430 = vcmp.lt.f32.partialorder %v2319, %v2424
    %vm2431 = vcmp.lt.f32.partialorder %v2319, %v2428
    %vm2432 = vmand %vm2412, %vm2430
    %vm2433 = vmand %vm2413, %vm2431
    %v2434 = vsel %vm2432, 1, 0
    %v2435 = vsel %vm2433, 1, 0
    %v2436 = vcvt.s32.f32 %v2434
    %v2437 = vcvt.s32.f32 %v2435
    %v2438 = vmul.f32 %v2408, %v2436
    %v2439 = vmul.f32 %v2409, %v2436
    %v2440 = vmul.f32 %v2410, %v2437
    %v2441 = vmul.f32 %v2411, %v2437
    %vm2442 = vcmask 261120
    %v2443 = vsel %vm2442, %v2438, 0.0
    %2444 = vadd.xlane.f32.xlu0 %v2443
    %v2445 = vpop.xlane.xlu0 %2444
    %v2446 = vsel %vm2442, %v2439, 0.0
    %2447 = vadd.xlane.f32.xlu0 %v2446
    %v2448 = vpop.xlane.xlu0 %2447
    %v2449 = vsel %vm2442, %v2440, 0.0
    %2450 = vadd.xlane.f32.xlu0 %v2449
    %v2451 = vpop.xlane.xlu0 %2450
    %v2452 = vsel %vm2442, %v2441, 0.0
    %2453 = vadd.xlane.f32.xlu0 %v2452
    %v2454 = vpop.xlane.xlu0 %2453
    %v2455 = vmax.f32 %v2445, 1e-12
    %v2456 = vmax.f32 %v2448, 1e-12
    %v2457 = vmax.f32 %v2451, 1e-12
    %v2458 = vmax.f32 %v2454, 1e-12
    %v2459 = vrcp.pop %v2455
    %v2460 = vmul.f32 %v2438, %v2459
    %v2461 = vrcp.pop %v2456
    %v2462 = vmul.f32 %v2439, %v2461
    %v2463 = vrcp.pop %v2457
    %v2464 = vmul.f32 %v2440, %v2463
    %v2465 = vrcp.pop %v2458
    %v2466 = vmul.f32 %v2441, %v2465
    %v2467 = vadd.s32 %v2313, 16
    %v2468 = vadd.s32 %v2313, 24
    %v2469 = vcvt.s32.f32 %v2467
    %v2470 = vcvt.s32.f32 %v2468
    %2471 = vset.pattern.permute.xlu0 1
    %2472 = vperm.xlu0 %2471, %v2334
    %v2473 = vpop.permute.xlu0 %2472
    %2475 = vset.pattern.permute.xlu0 1
    %2476 = vperm.xlu0 %2475, %v2338
    %v2477 = vpop.permute.xlu0 %2476
    %v2479 = vmul.f32 %v2371, %v2473
    %v2480 = vmul.f32 %v2371, %v2477
    %2481 = vset.pattern.permute.xlu0 1
    %2482 = vperm.xlu0 %2481, %v2354
    %v2483 = vpop.permute.xlu0 %2482
    %2485 = vset.pattern.permute.xlu0 1
    %2486 = vperm.xlu0 %2485, %v2358
    %v2487 = vpop.permute.xlu0 %2486
    %v2489 = vadd.f32 %v2483, %v2479
    %v2490 = vadd.f32 %v2487, %v2480
    %v2491 = vadd.f32 %v2469, 0.5
    %v2492 = vadd.f32 %v2470, 0.5
    %v2493 = vsub.f32 %v2327, %v2489
    %v2494 = vsub.f32 %v2328, %v2489
    %v2495 = vsub.f32 %v2491, %v2489
    %v2496 = vsub.f32 %v2492, %v2489
    %v2497 = vsub.f32 %v2327, %v2490
    %v2498 = vsub.f32 %v2328, %v2490
    %v2499 = vsub.f32 %v2491, %v2490
    %v2500 = vsub.f32 %v2492, %v2490
    %2501 = vset.pattern.permute.xlu0 1
    %2502 = vperm.xlu0 %2501, %v2381
    %v2503 = vpop.permute.xlu0 %2502
    %2505 = vset.pattern.permute.xlu0 1
    %2506 = vperm.xlu0 %2505, %v2385
    %v2507 = vpop.permute.xlu0 %2506
    %v2509 = vrcp.pop %v2503
    %v2510 = vmul.f32 %v2493, %v2509
    %v2511 = vmul.f32 %v2494, %v2509
    %v2512 = vmul.f32 %v2495, %v2509
    %v2513 = vmul.f32 %v2496, %v2509
    %v2514 = vrcp.pop %v2507
    %v2515 = vmul.f32 %v2497, %v2514
    %v2516 = vmul.f32 %v2498, %v2514
    %v2517 = vmul.f32 %v2499, %v2514
    %v2518 = vmul.f32 %v2500, %v2514
    %v2519 = vand.u32 2147483647, %v2510
    %v2520 = vand.u32 2147483647, %v2511
    %v2521 = vand.u32 2147483647, %v2512
    %v2522 = vand.u32 2147483647, %v2513
    %v2523 = vand.u32 2147483647, %v2515
    %v2524 = vand.u32 2147483647, %v2516
    %v2525 = vand.u32 2147483647, %v2517
    %v2526 = vand.u32 2147483647, %v2518
    %v2527 = vsub.f32 1.0, %v2519
    %v2528 = vsub.f32 1.0, %v2520
    %v2529 = vsub.f32 1.0, %v2521
    %v2530 = vsub.f32 1.0, %v2522
    %v2531 = vsub.f32 1.0, %v2523
    %v2532 = vsub.f32 1.0, %v2524
    %v2533 = vsub.f32 1.0, %v2525
    %v2534 = vsub.f32 1.0, %v2526
    %v2535 = vmax.f32 %v2527, 0.0
    %v2536 = vmax.f32 %v2528, 0.0
    %v2537 = vmax.f32 %v2529, 0.0
    %v2538 = vmax.f32 %v2530, 0.0
    %v2539 = vmax.f32 %v2531, 0.0
    %v2540 = vmax.f32 %v2532, 0.0
    %v2541 = vmax.f32 %v2533, 0.0
    %v2542 = vmax.f32 %v2534, 0.0
    %vm2543 = vcmp.ge.f32.partialorder %v2315, %v2483
    %vm2544 = vcmp.ge.f32.partialorder %v2316, %v2483
    %vm2545 = vcmp.ge.f32.partialorder %v2469, %v2483
    %vm2546 = vcmp.ge.f32.partialorder %v2470, %v2483
    %vm2547 = vcmp.ge.f32.partialorder %v2315, %v2487
    %vm2548 = vcmp.ge.f32.partialorder %v2316, %v2487
    %vm2549 = vcmp.ge.f32.partialorder %v2469, %v2487
    %vm2550 = vcmp.ge.f32.partialorder %v2470, %v2487
    %2551 = vset.pattern.permute.xlu0 1
    %2552 = vperm.xlu0 %2551, %v2417
    %v2553 = vpop.permute.xlu0 %2552
    %2555 = vset.pattern.permute.xlu0 1
    %2556 = vperm.xlu0 %2555, %v2421
    %v2557 = vpop.permute.xlu0 %2556
    %vm2559 = vcmp.lt.f32.partialorder %v2315, %v2553
    %vm2560 = vcmp.lt.f32.partialorder %v2316, %v2553
    %vm2561 = vcmp.lt.f32.partialorder %v2469, %v2553
    %vm2562 = vcmp.lt.f32.partialorder %v2470, %v2553
    %vm2563 = vcmp.lt.f32.partialorder %v2315, %v2557
    %vm2564 = vcmp.lt.f32.partialorder %v2316, %v2557
    %vm2565 = vcmp.lt.f32.partialorder %v2469, %v2557
    %vm2566 = vcmp.lt.f32.partialorder %v2470, %v2557
    %vm2567 = vmand %vm2543, %vm2559
    %vm2568 = vmand %vm2544, %vm2560
    %vm2569 = vmand %vm2545, %vm2561
    %vm2570 = vmand %vm2546, %vm2562
    %vm2571 = vmand %vm2547, %vm2563
    %vm2572 = vmand %vm2548, %vm2564
    %vm2573 = vmand %vm2549, %vm2565
    %vm2574 = vmand %vm2550, %vm2566
    %v2575 = vsel %vm2567, 1, 0
    %v2576 = vsel %vm2568, 1, 0
    %v2577 = vsel %vm2569, 1, 0
    %v2578 = vsel %vm2570, 1, 0
    %v2579 = vsel %vm2571, 1, 0
    %v2580 = vsel %vm2572, 1, 0
    %v2581 = vsel %vm2573, 1, 0
    %v2582 = vsel %vm2574, 1, 0
    %v2583 = vcvt.s32.f32 %v2575
    %v2584 = vcvt.s32.f32 %v2576
    %v2585 = vcvt.s32.f32 %v2577
    %v2586 = vcvt.s32.f32 %v2578
    %v2587 = vcvt.s32.f32 %v2579
    %v2588 = vcvt.s32.f32 %v2580
    %v2589 = vcvt.s32.f32 %v2581
    %v2590 = vcvt.s32.f32 %v2582
    %v2591 = vmul.f32 %v2535, %v2583
    %v2592 = vmul.f32 %v2536, %v2584
    %v2593 = vmul.f32 %v2537, %v2585
    %v2594 = vmul.f32 %v2538, %v2586
    %v2595 = vmul.f32 %v2539, %v2587
    %v2596 = vmul.f32 %v2540, %v2588
    %v2597 = vmul.f32 %v2541, %v2589
    %v2598 = vmul.f32 %v2542, %v2590
    %vm2599 = vcmask 130048
    %v2600 = vsel %vm2599, %v2591, 0.0
    %v2601 = vsel %vm2599, %v2592, 0.0
    %v2602 = vadd.f32 %v2600, %v2601
    %v2603 = vsel %vm2599, %v2593, 0.0
    %v2604 = vadd.f32 %v2602, %v2603
    %v2605 = vsel %vm2599, %v2594, 0.0
    %v2606 = vadd.f32 %v2604, %v2605
    %v2607 = vrot.slane %v2606, 4
    %v2608 = vadd.f32 %v2606, %v2607
    %v2609 = vrot.slane %v2608, 2
    %v2610 = vadd.f32 %v2608, %v2609
    %v2611 = vrot.slane %v2610, 1
    %v2612 = vadd.f32 %v2610, %v2611
    %v2613 = vsel %vm2599, %v2595, 0.0
    %v2614 = vsel %vm2599, %v2596, 0.0
    %v2615 = vadd.f32 %v2613, %v2614
    %v2616 = vsel %vm2599, %v2597, 0.0
    %v2617 = vadd.f32 %v2615, %v2616
    %v2618 = vsel %vm2599, %v2598, 0.0
    %v2619 = vadd.f32 %v2617, %v2618
    %v2620 = vrot.slane %v2619, 4
    %v2621 = vadd.f32 %v2619, %v2620
    %v2622 = vrot.slane %v2621, 2
    %v2623 = vadd.f32 %v2621, %v2622
    %v2624 = vrot.slane %v2623, 1
    %v2625 = vadd.f32 %v2623, %v2624
    %v2626 = vmax.f32 %v2612, 1e-12
    %v2627 = vmax.f32 %v2625, 1e-12
    %v2628 = vrcp.pop %v2626
    %v2629 = vmul.f32 %v2591, %v2628
    %v2630 = vmul.f32 %v2592, %v2628
    %v2631 = vmul.f32 %v2593, %v2628
    %v2632 = vmul.f32 %v2594, %v2628
    %v2633 = vrcp.pop %v2627
    %v2634 = vmul.f32 %v2595, %v2633
    %v2635 = vmul.f32 %v2596, %v2633
    %v2636 = vmul.f32 %v2597, %v2633
    %v2637 = vmul.f32 %v2598, %v2633
    %v2640 = vunpack.c.l.s4 1966171168
    %v2641 = vunpack.c.0.s8 %v2640
    %v2642 = vlaneseq
    %v2643 = vshrl.u32 %v2642, 7
    %v2644 = vsub.s32 %v2641, %v2643
    %v2645 = vrot.slane %v2241, %v2644
    %v2646 = vcombine.high %v2645, %v2645
    %v2648 = vunpack.c.l.s4 1966171168
    %v2649 = vunpack.c.0.s8 %v2648
    %v2650 = vlaneseq
    %v2651 = vshrl.u32 %v2650, 7
    %v2652 = vsub.s32 %v2649, %v2651
    %v2653 = vrot.slane %v2645, %v2652
    %v2655 = vunpack.c.l.s4 1966171168
    %v2656 = vunpack.c.0.s8 %v2655
    %v2657 = vlaneseq
    %v2658 = vshrl.u32 %v2657, 7
    %v2659 = vsub.s32 %v2656, %v2658
    %v2660 = vrot.slane %v2646, %v2659
    %v2661 = vlaneseq
    %v2662 = vshrl.u32 %v2661, 7
    %v2663 = vsub.s32 0, %v2662
    %v2664 = vrot.slane %v2653, %v2663
    %v2665 = vlaneseq
    %v2666 = vshrl.u32 %v2665, 7
    %v2667 = vsub.s32 0, %v2666
    %v2668 = vrot.slane %v2660, %v2667
    %2669 = vset.pattern.permute.xlu0 0
    %2670 = vperm.xlu0 %2669, %v2664
    %v2671 = vpop.permute.xlu0 %2670
    %2673 = vset.pattern.permute.xlu0 0
    %2674 = vperm.xlu0 %2673, %v2668
    %v2675 = vpop.permute.xlu0 %2674
    %v2677 = vmul.f32 %v2460, %v2671
    %v2678 = vmul.f32 %v2462, %v2671
    %v2679 = vmul.f32 %v2464, %v2675
    %v2680 = vmul.f32 %v2466, %v2675
    %v2681 = vld [vmem:[%s1] sm:$0xf]
    %v2682 = vld [vmem:[%s1 + $0x4] sm:$0xf]
    %v2683 = vld [vmem:[%s1 + $0x8] sm:$0xf]
    %v2684 = vld [vmem:[%s1 + $0xc] sm:$0xf]
    %v2685 = vld [vmem:[%s1 + $0x10] sm:$0xf]
    %v2686 = vld [vmem:[%s1 + $0x14] sm:$0xf]
    %v2687 = vld [vmem:[%s1 + $0x18] sm:$0xf]
    %v2688 = vld [vmem:[%s1 + $0x1c] sm:$0xf]
    %v2689 = vld [vmem:[%s1 + $0x20] sm:$0xf]
    %v2690 = vld [vmem:[%s1 + $0x24] sm:$0xf]
    %v2691 = vld [vmem:[%s1 + $0x28] sm:$0xf]
    %v2692 = vld [vmem:[%s1 + $0x2c] sm:$0xf]
    %v2693 = vld [vmem:[%s1 + $0x30] sm:$0xf]
    %v2694 = vld [vmem:[%s1 + $0x34] sm:$0xf]
    %v2695 = vld [vmem:[%s1 + $0x38] sm:$0xf]
    %v2696 = vld [vmem:[%s1 + $0x3c] sm:$0xf]
    %v2697 = vld [vmem:[%s1 + $0x40] sm:$0xf]
    %v2698 = vld [vmem:[%s1 + $0x44] sm:$0xf]
    %v2699 = vld [vmem:[%s1 + $0x48] sm:$0xf]
    %v2700 = vld [vmem:[%s1 + $0x4c] sm:$0xf]
    %v2701 = vld [vmem:[%s1 + $0x50] sm:$0xf]
    %v2702 = vld [vmem:[%s1 + $0x54] sm:$0xf]
    %v2703 = vld [vmem:[%s1 + $0x58] sm:$0xf]
    %v2704 = vld [vmem:[%s1 + $0x5c] sm:$0xf]
    %v2705 = vpack.c.bf16 %v2630, %v2629
    %v2706 = vpack.c.bf16 %v2632, %v2631
    %v2707 = vpack.c.bf16 %v2635, %v2634
    %v2708 = vpack.c.bf16 %v2637, %v2636
    %v2713 = vunpack.c.l.b16 %v2681
    %v2714 = vunpack.c.l.b16 %v2682
    %v2715 = vunpack.c.l.b16 %v2683
    %v2716 = vunpack.c.l.b16 %v2684
    %v2717 = vpack.c.b16 %v2714, %v2713
    %v2718 = vpack.c.b16 %v2716, %v2715
    %v2720 = vsel %vm2442, %v2717, 0
    %v2723 = vsel %vm2442, %v2718, 0
    %2725 = vmatprep.subr.bf16.mxu0 0
    %2726 = vmatpush1.bf16.msra.mxu0 %v2705
    %2727 = vmatprep.subr.bf16.mxu0 0
    %2728 = vmatpush1.bf16.msra.mxu0 %v2706
    %2729 = vmatprep.subr.bf16.mxu0 0
    %2730 = vmatpush1.bf16.msra.mxu0 0
    %2731 = vmatprep.subr.bf16.mxu0 0
    %2732 = vmatpush1.bf16.msra.mxu0 0
    %2733 = vmatprep.subr.bf16.mxu0 0
    %2734 = vmatpush1.bf16.msra.mxu0 0
    %2735 = vmatprep.subr.bf16.mxu0 0
    %2736 = vmatpush1.bf16.msra.mxu0 0
    %2737 = vmatprep.subr.bf16.mxu0 0
    %2738 = vmatpush1.bf16.msra.mxu0 0
    %2739 = vmatprep.subr.bf16.mxu0 0
    %2740 = vmatpush1.bf16.msra.mxu0 0
    %2741 = vmatprep.subr.bf16.mxu0 0
    %2742 = vmatpush1.bf16.msra.mxu0 0
    %2743 = vmatprep.subr.bf16.mxu0 0
    %2744 = vmatpush1.bf16.msra.mxu0 0
    %2745 = vmatprep.subr.bf16.mxu0 0
    %2746 = vmatpush1.bf16.msra.mxu0 0
    %2747 = vmatprep.subr.bf16.mxu0 0
    %2748 = vmatpush1.bf16.msra.mxu0 0
    %2749 = vmatprep.subr.bf16.mxu0 0
    %2750 = vmatpush1.bf16.msra.mxu0 0
    %2751 = vmatprep.subr.bf16.mxu0 0
    %2752 = vmatpush1.bf16.msra.mxu0 0
    %2753 = vmatprep.subr.bf16.mxu0 0
    %2754 = vmatpush1.bf16.msra.mxu0 0
    %2755 = vmatprep.subr.bf16.mxu0 0
    %2756 = vmatpush1.bf16.msra.mxu0 0
    %2757 = vmatprep.mubr.bf16.mxu0 0
    %2758 = vmatmul.mubr.bf16.gmra.mrb[0].mxu0 %v2720
    %v2759 = vpop.f32.mrb[0].mxu0
    %v2760 = vadd.f32 0.0, %v2759
    %v2761 = vpop.f32.mrb[0].mxu0
    %v2762 = vpop.f32.mrb[0].mxu0
    %v2763 = vadd.f32 0.0, %v2762
    %v2764 = vpop.f32.mrb[0].mxu0
    %2765 = vmatprep.mubr.bf16.mxu0 0
    %2766 = vmatmul.mubr.bf16.gmra.mrb[0].mxu0 %v2723
    %v2767 = vpop.f32.mrb[0].mxu0
    %v2768 = vadd.f32 0.0, %v2767
    %v2769 = vpop.f32.mrb[0].mxu0
    %v2770 = vpop.f32.mrb[0].mxu0
    %v2771 = vadd.f32 0.0, %v2770
    %v2772 = vpop.f32.mrb[0].mxu0
    %2773 = vdwg.mxu0
    %v2778 = vunpack.c.l.b16 %v2685
    %v2779 = vunpack.c.l.b16 %v2686
    %v2780 = vunpack.c.l.b16 %v2687
    %v2781 = vunpack.c.l.b16 %v2688
    %v2782 = vpack.c.b16 %v2779, %v2778
    %v2783 = vpack.c.b16 %v2781, %v2780
    %v2785 = vsel %vm2442, %v2782, 0
    %v2788 = vsel %vm2442, %v2783, 0
    %2790 = vmatprep.subr.bf16.mxu0 0
    %2791 = vmatpush1.bf16.msra.mxu0 %v2705
    %2792 = vmatprep.subr.bf16.mxu0 0
    %2793 = vmatpush1.bf16.msra.mxu0 %v2706
    %2794 = vmatprep.subr.bf16.mxu0 0
    %2795 = vmatpush1.bf16.msra.mxu0 0
    %2796 = vmatprep.subr.bf16.mxu0 0
    %2797 = vmatpush1.bf16.msra.mxu0 0
    %2798 = vmatprep.subr.bf16.mxu0 0
    %2799 = vmatpush1.bf16.msra.mxu0 0
    %2800 = vmatprep.subr.bf16.mxu0 0
    %2801 = vmatpush1.bf16.msra.mxu0 0
    %2802 = vmatprep.subr.bf16.mxu0 0
    %2803 = vmatpush1.bf16.msra.mxu0 0
    %2804 = vmatprep.subr.bf16.mxu0 0
    %2805 = vmatpush1.bf16.msra.mxu0 0
    %2806 = vmatprep.subr.bf16.mxu0 0
    %2807 = vmatpush1.bf16.msra.mxu0 0
    %2808 = vmatprep.subr.bf16.mxu0 0
    %2809 = vmatpush1.bf16.msra.mxu0 0
    %2810 = vmatprep.subr.bf16.mxu0 0
    %2811 = vmatpush1.bf16.msra.mxu0 0
    %2812 = vmatprep.subr.bf16.mxu0 0
    %2813 = vmatpush1.bf16.msra.mxu0 0
    %2814 = vmatprep.subr.bf16.mxu0 0
    %2815 = vmatpush1.bf16.msra.mxu0 0
    %2816 = vmatprep.subr.bf16.mxu0 0
    %2817 = vmatpush1.bf16.msra.mxu0 0
    %2818 = vmatprep.subr.bf16.mxu0 0
    %2819 = vmatpush1.bf16.msra.mxu0 0
    %2820 = vmatprep.subr.bf16.mxu0 0
    %2821 = vmatpush1.bf16.msra.mxu0 0
    %2822 = vmatprep.mubr.bf16.mxu0 0
    %2823 = vmatmul.mubr.bf16.gmra.mrb[0].mxu0 %v2785
    %v2824 = vpop.f32.mrb[0].mxu0
    %v2825 = vadd.f32 0.0, %v2824
    %v2826 = vpop.f32.mrb[0].mxu0
    %v2827 = vpop.f32.mrb[0].mxu0
    %v2828 = vadd.f32 0.0, %v2827
    %v2829 = vpop.f32.mrb[0].mxu0
    %2830 = vmatprep.mubr.bf16.mxu0 0
    %2831 = vmatmul.mubr.bf16.gmra.mrb[0].mxu0 %v2788
    %v2832 = vpop.f32.mrb[0].mxu0
    %v2833 = vadd.f32 0.0, %v2832
    %v2834 = vpop.f32.mrb[0].mxu0
    %v2835 = vpop.f32.mrb[0].mxu0
    %v2836 = vadd.f32 0.0, %v2835
    %v2837 = vpop.f32.mrb[0].mxu0
    %2838 = vdwg.mxu0
    %v2843 = vunpack.c.l.b16 %v2689
    %v2844 = vunpack.c.l.b16 %v2690
    %v2845 = vunpack.c.l.b16 %v2691
    %v2846 = vunpack.c.l.b16 %v2692
    %v2847 = vpack.c.b16 %v2844, %v2843
    %v2848 = vpack.c.b16 %v2846, %v2845
    %v2850 = vsel %vm2442, %v2847, 0
    %v2853 = vsel %vm2442, %v2848, 0
    %2855 = vmatprep.subr.bf16.mxu0 0
    %2856 = vmatpush1.bf16.msra.mxu0 %v2705
    %2857 = vmatprep.subr.bf16.mxu0 0
    %2858 = vmatpush1.bf16.msra.mxu0 %v2706
    %2859 = vmatprep.subr.bf16.mxu0 0
    %2860 = vmatpush1.bf16.msra.mxu0 0
    %2861 = vmatprep.subr.bf16.mxu0 0
    %2862 = vmatpush1.bf16.msra.mxu0 0
    %2863 = vmatprep.subr.bf16.mxu0 0
    %2864 = vmatpush1.bf16.msra.mxu0 0
    %2865 = vmatprep.subr.bf16.mxu0 0
    %2866 = vmatpush1.bf16.msra.mxu0 0
    %2867 = vmatprep.subr.bf16.mxu0 0
    %2868 = vmatpush1.bf16.msra.mxu0 0
    %2869 = vmatprep.subr.bf16.mxu0 0
    %2870 = vmatpush1.bf16.msra.mxu0 0
    %2871 = vmatprep.subr.bf16.mxu0 0
    %2872 = vmatpush1.bf16.msra.mxu0 0
    %2873 = vmatprep.subr.bf16.mxu0 0
    %2874 = vmatpush1.bf16.msra.mxu0 0
    %2875 = vmatprep.subr.bf16.mxu0 0
    %2876 = vmatpush1.bf16.msra.mxu0 0
    %2877 = vmatprep.subr.bf16.mxu0 0
    %2878 = vmatpush1.bf16.msra.mxu0 0
    %2879 = vmatprep.subr.bf16.mxu0 0
    %2880 = vmatpush1.bf16.msra.mxu0 0
    %2881 = vmatprep.subr.bf16.mxu0 0
    %2882 = vmatpush1.bf16.msra.mxu0 0
    %2883 = vmatprep.subr.bf16.mxu0 0
    %2884 = vmatpush1.bf16.msra.mxu0 0
    %2885 = vmatprep.subr.bf16.mxu0 0
    %2886 = vmatpush1.bf16.msra.mxu0 0
    %2887 = vmatprep.mubr.bf16.mxu0 0
    %2888 = vmatmul.mubr.bf16.gmra.mrb[0].mxu0 %v2850
    %v2889 = vpop.f32.mrb[0].mxu0
    %v2890 = vadd.f32 0.0, %v2889
    %v2891 = vpop.f32.mrb[0].mxu0
    %v2892 = vpop.f32.mrb[0].mxu0
    %v2893 = vadd.f32 0.0, %v2892
    %v2894 = vpop.f32.mrb[0].mxu0
    %2895 = vmatprep.mubr.bf16.mxu0 0
    %2896 = vmatmul.mubr.bf16.gmra.mrb[0].mxu0 %v2853
    %v2897 = vpop.f32.mrb[0].mxu0
    %v2898 = vadd.f32 0.0, %v2897
    %v2899 = vpop.f32.mrb[0].mxu0
    %v2900 = vpop.f32.mrb[0].mxu0
    %v2901 = vadd.f32 0.0, %v2900
    %v2902 = vpop.f32.mrb[0].mxu0
    %2903 = vdwg.mxu0
    %v2908 = vunpack.c.l.b16 %v2693
    %v2909 = vunpack.c.l.b16 %v2694
    %v2910 = vunpack.c.l.b16 %v2695
    %v2911 = vunpack.c.l.b16 %v2696
    %v2912 = vpack.c.b16 %v2909, %v2908
    %v2913 = vpack.c.b16 %v2911, %v2910
    %v2915 = vsel %vm2442, %v2912, 0
    %v2918 = vsel %vm2442, %v2913, 0
    %2920 = vmatprep.subr.bf16.mxu0 0
    %2921 = vmatpush1.bf16.msra.mxu0 %v2707
    %2922 = vmatprep.subr.bf16.mxu0 0
    %2923 = vmatpush1.bf16.msra.mxu0 %v2708
    %2924 = vmatprep.subr.bf16.mxu0 0
    %2925 = vmatpush1.bf16.msra.mxu0 0
    %2926 = vmatprep.subr.bf16.mxu0 0
    %2927 = vmatpush1.bf16.msra.mxu0 0
    %2928 = vmatprep.subr.bf16.mxu0 0
    %2929 = vmatpush1.bf16.msra.mxu0 0
    %2930 = vmatprep.subr.bf16.mxu0 0
    %2931 = vmatpush1.bf16.msra.mxu0 0
    %2932 = vmatprep.subr.bf16.mxu0 0
    %2933 = vmatpush1.bf16.msra.mxu0 0
    %2934 = vmatprep.subr.bf16.mxu0 0
    %2935 = vmatpush1.bf16.msra.mxu0 0
    %2936 = vmatprep.subr.bf16.mxu0 0
    %2937 = vmatpush1.bf16.msra.mxu0 0
    %2938 = vmatprep.subr.bf16.mxu0 0
    %2939 = vmatpush1.bf16.msra.mxu0 0
    %2940 = vmatprep.subr.bf16.mxu0 0
    %2941 = vmatpush1.bf16.msra.mxu0 0
    %2942 = vmatprep.subr.bf16.mxu0 0
    %2943 = vmatpush1.bf16.msra.mxu0 0
    %2944 = vmatprep.subr.bf16.mxu0 0
    %2945 = vmatpush1.bf16.msra.mxu0 0
    %2946 = vmatprep.subr.bf16.mxu0 0
    %2947 = vmatpush1.bf16.msra.mxu0 0
    %2948 = vmatprep.subr.bf16.mxu0 0
    %2949 = vmatpush1.bf16.msra.mxu0 0
    %2950 = vmatprep.subr.bf16.mxu0 0
    %2951 = vmatpush1.bf16.msra.mxu0 0
    %2952 = vmatprep.mubr.bf16.mxu0 0
    %2953 = vmatmul.mubr.bf16.gmra.mrb[0].mxu0 %v2915
    %v2954 = vpop.f32.mrb[0].mxu0
    %v2955 = vadd.f32 0.0, %v2954
    %v2956 = vpop.f32.mrb[0].mxu0
    %v2957 = vpop.f32.mrb[0].mxu0
    %v2958 = vadd.f32 0.0, %v2957
    %v2959 = vpop.f32.mrb[0].mxu0
    %2960 = vmatprep.mubr.bf16.mxu0 0
    %2961 = vmatmul.mubr.bf16.gmra.mrb[0].mxu0 %v2918
    %v2962 = vpop.f32.mrb[0].mxu0
    %v2963 = vadd.f32 0.0, %v2962
    %v2964 = vpop.f32.mrb[0].mxu0
    %v2965 = vpop.f32.mrb[0].mxu0
    %v2966 = vadd.f32 0.0, %v2965
    %v2967 = vpop.f32.mrb[0].mxu0
    %2968 = vdwg.mxu0
    %v2973 = vunpack.c.l.b16 %v2697
    %v2974 = vunpack.c.l.b16 %v2698
    %v2975 = vunpack.c.l.b16 %v2699
    %v2976 = vunpack.c.l.b16 %v2700
    %v2977 = vpack.c.b16 %v2974, %v2973
    %v2978 = vpack.c.b16 %v2976, %v2975
    %v2980 = vsel %vm2442, %v2977, 0
    %v2983 = vsel %vm2442, %v2978, 0
    %2985 = vmatprep.subr.bf16.mxu0 0
    %2986 = vmatpush1.bf16.msra.mxu0 %v2707
    %2987 = vmatprep.subr.bf16.mxu0 0
    %2988 = vmatpush1.bf16.msra.mxu0 %v2708
    %2989 = vmatprep.subr.bf16.mxu0 0
    %2990 = vmatpush1.bf16.msra.mxu0 0
    %2991 = vmatprep.subr.bf16.mxu0 0
    %2992 = vmatpush1.bf16.msra.mxu0 0
    %2993 = vmatprep.subr.bf16.mxu0 0
    %2994 = vmatpush1.bf16.msra.mxu0 0
    %2995 = vmatprep.subr.bf16.mxu0 0
    %2996 = vmatpush1.bf16.msra.mxu0 0
    %2997 = vmatprep.subr.bf16.mxu0 0
    %2998 = vmatpush1.bf16.msra.mxu0 0
    %2999 = vmatprep.subr.bf16.mxu0 0
    %3000 = vmatpush1.bf16.msra.mxu0 0
    %3001 = vmatprep.subr.bf16.mxu0 0
    %3002 = vmatpush1.bf16.msra.mxu0 0
    %3003 = vmatprep.subr.bf16.mxu0 0
    %3004 = vmatpush1.bf16.msra.mxu0 0
    %3005 = vmatprep.subr.bf16.mxu0 0
    %3006 = vmatpush1.bf16.msra.mxu0 0
    %3007 = vmatprep.subr.bf16.mxu0 0
    %3008 = vmatpush1.bf16.msra.mxu0 0
    %3009 = vmatprep.subr.bf16.mxu0 0
    %3010 = vmatpush1.bf16.msra.mxu0 0
    %3011 = vmatprep.subr.bf16.mxu0 0
    %3012 = vmatpush1.bf16.msra.mxu0 0
    %3013 = vmatprep.subr.bf16.mxu0 0
    %3014 = vmatpush1.bf16.msra.mxu0 0
    %3015 = vmatprep.subr.bf16.mxu0 0
    %3016 = vmatpush1.bf16.msra.mxu0 0
    %3017 = vmatprep.mubr.bf16.mxu0 0
    %3018 = vmatmul.mubr.bf16.gmra.mrb[0].mxu0 %v2980
    %v3019 = vpop.f32.mrb[0].mxu0
    %v3020 = vadd.f32 0.0, %v3019
    %v3021 = vpop.f32.mrb[0].mxu0
    %v3022 = vpop.f32.mrb[0].mxu0
    %v3023 = vadd.f32 0.0, %v3022
    %v3024 = vpop.f32.mrb[0].mxu0
    %3025 = vmatprep.mubr.bf16.mxu0 0
    %3026 = vmatmul.mubr.bf16.gmra.mrb[0].mxu0 %v2983
    %v3027 = vpop.f32.mrb[0].mxu0
    %v3028 = vadd.f32 0.0, %v3027
    %v3029 = vpop.f32.mrb[0].mxu0
    %v3030 = vpop.f32.mrb[0].mxu0
    %v3031 = vadd.f32 0.0, %v3030
    %v3032 = vpop.f32.mrb[0].mxu0
    %3033 = vdwg.mxu0
    %v3038 = vunpack.c.l.b16 %v2701
    %v3039 = vunpack.c.l.b16 %v2702
    %v3040 = vunpack.c.l.b16 %v2703
    %v3041 = vunpack.c.l.b16 %v2704
    %v3042 = vpack.c.b16 %v3039, %v3038
    %v3043 = vpack.c.b16 %v3041, %v3040
    %v3045 = vsel %vm2442, %v3042, 0
    %v3048 = vsel %vm2442, %v3043, 0
    %3050 = vmatprep.subr.bf16.mxu0 0
    %3051 = vmatpush1.bf16.msra.mxu0 %v2707
    %3052 = vmatprep.subr.bf16.mxu0 0
    %3053 = vmatpush1.bf16.msra.mxu0 %v2708
    %3054 = vmatprep.subr.bf16.mxu0 0
    %3055 = vmatpush1.bf16.msra.mxu0 0
    %3056 = vmatprep.subr.bf16.mxu0 0
    %3057 = vmatpush1.bf16.msra.mxu0 0
    %3058 = vmatprep.subr.bf16.mxu0 0
    %3059 = vmatpush1.bf16.msra.mxu0 0
    %3060 = vmatprep.subr.bf16.mxu0 0
    %3061 = vmatpush1.bf16.msra.mxu0 0
    %3062 = vmatprep.subr.bf16.mxu0 0
    %3063 = vmatpush1.bf16.msra.mxu0 0
    %3064 = vmatprep.subr.bf16.mxu0 0
    %3065 = vmatpush1.bf16.msra.mxu0 0
    %3066 = vmatprep.subr.bf16.mxu0 0
    %3067 = vmatpush1.bf16.msra.mxu0 0
    %3068 = vmatprep.subr.bf16.mxu0 0
    %3069 = vmatpush1.bf16.msra.mxu0 0
    %3070 = vmatprep.subr.bf16.mxu0 0
    %3071 = vmatpush1.bf16.msra.mxu0 0
    %3072 = vmatprep.subr.bf16.mxu0 0
    %3073 = vmatpush1.bf16.msra.mxu0 0
    %3074 = vmatprep.subr.bf16.mxu0 0
    %3075 = vmatpush1.bf16.msra.mxu0 0
    %3076 = vmatprep.subr.bf16.mxu0 0
    %3077 = vmatpush1.bf16.msra.mxu0 0
    %3078 = vmatprep.subr.bf16.mxu0 0
    %3079 = vmatpush1.bf16.msra.mxu0 0
    %3080 = vmatprep.subr.bf16.mxu0 0
    %3081 = vmatpush1.bf16.msra.mxu0 0
    %3082 = vmatprep.mubr.bf16.mxu0 0
    %3083 = vmatmul.mubr.bf16.gmra.mrb[0].mxu0 %v3045
    %v3084 = vpop.f32.mrb[0].mxu0
    %v3085 = vadd.f32 0.0, %v3084
    %v3086 = vpop.f32.mrb[0].mxu0
    %v3087 = vpop.f32.mrb[0].mxu0
    %v3088 = vadd.f32 0.0, %v3087
    %v3089 = vpop.f32.mrb[0].mxu0
    %3090 = vmatprep.mubr.bf16.mxu0 0
    %3091 = vmatmul.mubr.bf16.gmra.mrb[0].mxu0 %v3048
    %v3092 = vpop.f32.mrb[0].mxu0
    %v3093 = vadd.f32 0.0, %v3092
    %v3094 = vpop.f32.mrb[0].mxu0
    %v3095 = vpop.f32.mrb[0].mxu0
    %v3096 = vadd.f32 0.0, %v3095
    %v3097 = vpop.f32.mrb[0].mxu0
    %3098 = vdwg.mxu0
    %v3099 = vpack.c.bf16 %v2678, %v2677
    %v3100 = vpack.c.bf16 %v2680, %v2679
    %v3101 = vpack.c.bf16 %v2763, %v2760
    %v3102 = vpack.c.bf16 %v2771, %v2768
    %v3103 = vpack.c.bf16 %v2828, %v2825
    %v3104 = vpack.c.bf16 %v2836, %v2833
    %v3105 = vpack.c.bf16 %v2893, %v2890
    %v3106 = vpack.c.bf16 %v2901, %v2898
    %v3107 = vpack.c.bf16 %v2958, %v2955
    %v3108 = vpack.c.bf16 %v2966, %v2963
    %v3109 = vpack.c.bf16 %v3023, %v3020
    %v3110 = vpack.c.bf16 %v3031, %v3028
    %v3111 = vpack.c.bf16 %v3088, %v3085
    %v3112 = vpack.c.bf16 %v3096, %v3093
    %v3114 = vsel %vm2442, %v3099, 0
    %3116 = vmatprep.subr.bf16.mxu0 0
    %3117 = vmatpush1.bf16.msra.mxu0 %v3101
    %3118 = vmatprep.subr.bf16.mxu0 0
    %3119 = vmatpush1.bf16.msra.mxu0 %v3102
    %3120 = vmatprep.subr.bf16.mxu0 0
    %3121 = vmatpush1.bf16.msra.mxu0 0
    %3122 = vmatprep.subr.bf16.mxu0 0
    %3123 = vmatpush1.bf16.msra.mxu0 0
    %3124 = vmatprep.subr.bf16.mxu0 0
    %3125 = vmatpush1.bf16.msra.mxu0 0
    %3126 = vmatprep.subr.bf16.mxu0 0
    %3127 = vmatpush1.bf16.msra.mxu0 0
    %3128 = vmatprep.subr.bf16.mxu0 0
    %3129 = vmatpush1.bf16.msra.mxu0 0
    %3130 = vmatprep.subr.bf16.mxu0 0
    %3131 = vmatpush1.bf16.msra.mxu0 0
    %3132 = vmatprep.subr.bf16.mxu0 0
    %3133 = vmatpush1.bf16.msra.mxu0 0
    %3134 = vmatprep.subr.bf16.mxu0 0
    %3135 = vmatpush1.bf16.msra.mxu0 0
    %3136 = vmatprep.subr.bf16.mxu0 0
    %3137 = vmatpush1.bf16.msra.mxu0 0
    %3138 = vmatprep.subr.bf16.mxu0 0
    %3139 = vmatpush1.bf16.msra.mxu0 0
    %3140 = vmatprep.subr.bf16.mxu0 0
    %3141 = vmatpush1.bf16.msra.mxu0 0
    %3142 = vmatprep.subr.bf16.mxu0 0
    %3143 = vmatpush1.bf16.msra.mxu0 0
    %3144 = vmatprep.subr.bf16.mxu0 0
    %3145 = vmatpush1.bf16.msra.mxu0 0
    %3146 = vmatprep.subr.bf16.mxu0 0
    %3147 = vmatpush1.bf16.msra.mxu0 0
    %3148 = vmatprep.mubr.bf16.mxu0 0
    %3149 = vmatmul.mubr.bf16.gmra.mrb[0].mxu0 %v3114
    %v3150 = vpop.f32.mrb[0].mxu0
    %v3151 = vadd.f32 0.0, %v3150
    %v3152 = vpop.f32.mrb[0].mxu0
    %v3153 = vpop.f32.mrb[0].mxu0
    %v3154 = vadd.f32 0.0, %v3153
    %v3155 = vpop.f32.mrb[0].mxu0
    %3156 = vdwg.mxu0
    %3157 = vmatprep.subr.bf16.mxu0 0
    %3158 = vmatpush1.bf16.msra.mxu0 %v3103
    %3159 = vmatprep.subr.bf16.mxu0 0
    %3160 = vmatpush1.bf16.msra.mxu0 %v3104
    %3161 = vmatprep.subr.bf16.mxu0 0
    %3162 = vmatpush1.bf16.msra.mxu0 0
    %3163 = vmatprep.subr.bf16.mxu0 0
    %3164 = vmatpush1.bf16.msra.mxu0 0
    %3165 = vmatprep.subr.bf16.mxu0 0
    %3166 = vmatpush1.bf16.msra.mxu0 0
    %3167 = vmatprep.subr.bf16.mxu0 0
    %3168 = vmatpush1.bf16.msra.mxu0 0
    %3169 = vmatprep.subr.bf16.mxu0 0
    %3170 = vmatpush1.bf16.msra.mxu0 0
    %3171 = vmatprep.subr.bf16.mxu0 0
    %3172 = vmatpush1.bf16.msra.mxu0 0
    %3173 = vmatprep.subr.bf16.mxu0 0
    %3174 = vmatpush1.bf16.msra.mxu0 0
    %3175 = vmatprep.subr.bf16.mxu0 0
    %3176 = vmatpush1.bf16.msra.mxu0 0
    %3177 = vmatprep.subr.bf16.mxu0 0
    %3178 = vmatpush1.bf16.msra.mxu0 0
    %3179 = vmatprep.subr.bf16.mxu0 0
    %3180 = vmatpush1.bf16.msra.mxu0 0
    %3181 = vmatprep.subr.bf16.mxu0 0
    %3182 = vmatpush1.bf16.msra.mxu0 0
    %3183 = vmatprep.subr.bf16.mxu0 0
    %3184 = vmatpush1.bf16.msra.mxu0 0
    %3185 = vmatprep.subr.bf16.mxu0 0
    %3186 = vmatpush1.bf16.msra.mxu0 0
    %3187 = vmatprep.subr.bf16.mxu0 0
    %3188 = vmatpush1.bf16.msra.mxu0 0
    %3189 = vmatprep.mubr.bf16.mxu0 0
    %3190 = vmatmul.mubr.bf16.gmra.mrb[0].mxu0 %v3114
    %v3191 = vpop.f32.mrb[0].mxu0
    %v3192 = vadd.f32 0.0, %v3191
    %v3193 = vpop.f32.mrb[0].mxu0
    %v3194 = vpop.f32.mrb[0].mxu0
    %v3195 = vadd.f32 0.0, %v3194
    %v3196 = vpop.f32.mrb[0].mxu0
    %3197 = vdwg.mxu0
    %3198 = vmatprep.subr.bf16.mxu0 0
    %3199 = vmatpush1.bf16.msra.mxu0 %v3105
    %3200 = vmatprep.subr.bf16.mxu0 0
    %3201 = vmatpush1.bf16.msra.mxu0 %v3106
    %3202 = vmatprep.subr.bf16.mxu0 0
    %3203 = vmatpush1.bf16.msra.mxu0 0
    %3204 = vmatprep.subr.bf16.mxu0 0
    %3205 = vmatpush1.bf16.msra.mxu0 0
    %3206 = vmatprep.subr.bf16.mxu0 0
    %3207 = vmatpush1.bf16.msra.mxu0 0
    %3208 = vmatprep.subr.bf16.mxu0 0
    %3209 = vmatpush1.bf16.msra.mxu0 0
    %3210 = vmatprep.subr.bf16.mxu0 0
    %3211 = vmatpush1.bf16.msra.mxu0 0
    %3212 = vmatprep.subr.bf16.mxu0 0
    %3213 = vmatpush1.bf16.msra.mxu0 0
    %3214 = vmatprep.subr.bf16.mxu0 0
    %3215 = vmatpush1.bf16.msra.mxu0 0
    %3216 = vmatprep.subr.bf16.mxu0 0
    %3217 = vmatpush1.bf16.msra.mxu0 0
    %3218 = vmatprep.subr.bf16.mxu0 0
    %3219 = vmatpush1.bf16.msra.mxu0 0
    %3220 = vmatprep.subr.bf16.mxu0 0
    %3221 = vmatpush1.bf16.msra.mxu0 0
    %3222 = vmatprep.subr.bf16.mxu0 0
    %3223 = vmatpush1.bf16.msra.mxu0 0
    %3224 = vmatprep.subr.bf16.mxu0 0
    %3225 = vmatpush1.bf16.msra.mxu0 0
    %3226 = vmatprep.subr.bf16.mxu0 0
    %3227 = vmatpush1.bf16.msra.mxu0 0
    %3228 = vmatprep.subr.bf16.mxu0 0
    %3229 = vmatpush1.bf16.msra.mxu0 0
    %3230 = vmatprep.mubr.bf16.mxu0 0
    %3231 = vmatmul.mubr.bf16.gmra.mrb[0].mxu0 %v3114
    %v3232 = vpop.f32.mrb[0].mxu0
    %v3233 = vadd.f32 0.0, %v3232
    %v3234 = vpop.f32.mrb[0].mxu0
    %v3235 = vpop.f32.mrb[0].mxu0
    %v3236 = vadd.f32 0.0, %v3235
    %v3237 = vpop.f32.mrb[0].mxu0
    %3238 = vdwg.mxu0
    %v3240 = vsel %vm2442, %v3100, 0
    %3242 = vmatprep.subr.bf16.mxu0 0
    %3243 = vmatpush1.bf16.msra.mxu0 %v3107
    %3244 = vmatprep.subr.bf16.mxu0 0
    %3245 = vmatpush1.bf16.msra.mxu0 %v3108
    %3246 = vmatprep.subr.bf16.mxu0 0
    %3247 = vmatpush1.bf16.msra.mxu0 0
    %3248 = vmatprep.subr.bf16.mxu0 0
    %3249 = vmatpush1.bf16.msra.mxu0 0
    %3250 = vmatprep.subr.bf16.mxu0 0
    %3251 = vmatpush1.bf16.msra.mxu0 0
    %3252 = vmatprep.subr.bf16.mxu0 0
    %3253 = vmatpush1.bf16.msra.mxu0 0
    %3254 = vmatprep.subr.bf16.mxu0 0
    %3255 = vmatpush1.bf16.msra.mxu0 0
    %3256 = vmatprep.subr.bf16.mxu0 0
    %3257 = vmatpush1.bf16.msra.mxu0 0
    %3258 = vmatprep.subr.bf16.mxu0 0
    %3259 = vmatpush1.bf16.msra.mxu0 0
    %3260 = vmatprep.subr.bf16.mxu0 0
    %3261 = vmatpush1.bf16.msra.mxu0 0
    %3262 = vmatprep.subr.bf16.mxu0 0
    %3263 = vmatpush1.bf16.msra.mxu0 0
    %3264 = vmatprep.subr.bf16.mxu0 0
    %3265 = vmatpush1.bf16.msra.mxu0 0
    %3266 = vmatprep.subr.bf16.mxu0 0
    %3267 = vmatpush1.bf16.msra.mxu0 0
    %3268 = vmatprep.subr.bf16.mxu0 0
    %3269 = vmatpush1.bf16.msra.mxu0 0
    %3270 = vmatprep.subr.bf16.mxu0 0
    %3271 = vmatpush1.bf16.msra.mxu0 0
    %3272 = vmatprep.subr.bf16.mxu0 0
    %3273 = vmatpush1.bf16.msra.mxu0 0
    %3274 = vmatprep.mubr.bf16.mxu0 0
    %3275 = vmatmul.mubr.bf16.gmra.mrb[0].mxu0 %v3240
    %v3276 = vpop.f32.mrb[0].mxu0
    %v3277 = vadd.f32 0.0, %v3276
    %v3278 = vpop.f32.mrb[0].mxu0
    %v3279 = vpop.f32.mrb[0].mxu0
    %v3280 = vadd.f32 0.0, %v3279
    %v3281 = vpop.f32.mrb[0].mxu0
    %3282 = vdwg.mxu0
    %3283 = vmatprep.subr.bf16.mxu0 0
    %3284 = vmatpush1.bf16.msra.mxu0 %v3109
    %3285 = vmatprep.subr.bf16.mxu0 0
    %3286 = vmatpush1.bf16.msra.mxu0 %v3110
    %3287 = vmatprep.subr.bf16.mxu0 0
    %3288 = vmatpush1.bf16.msra.mxu0 0
    %3289 = vmatprep.subr.bf16.mxu0 0
    %3290 = vmatpush1.bf16.msra.mxu0 0
    %3291 = vmatprep.subr.bf16.mxu0 0
    %3292 = vmatpush1.bf16.msra.mxu0 0
    %3293 = vmatprep.subr.bf16.mxu0 0
    %3294 = vmatpush1.bf16.msra.mxu0 0
    %3295 = vmatprep.subr.bf16.mxu0 0
    %3296 = vmatpush1.bf16.msra.mxu0 0
    %3297 = vmatprep.subr.bf16.mxu0 0
    %3298 = vmatpush1.bf16.msra.mxu0 0
    %3299 = vmatprep.subr.bf16.mxu0 0
    %3300 = vmatpush1.bf16.msra.mxu0 0
    %3301 = vmatprep.subr.bf16.mxu0 0
    %3302 = vmatpush1.bf16.msra.mxu0 0
    %3303 = vmatprep.subr.bf16.mxu0 0
    %3304 = vmatpush1.bf16.msra.mxu0 0
    %3305 = vmatprep.subr.bf16.mxu0 0
    %3306 = vmatpush1.bf16.msra.mxu0 0
    %3307 = vmatprep.subr.bf16.mxu0 0
    %3308 = vmatpush1.bf16.msra.mxu0 0
    %3309 = vmatprep.subr.bf16.mxu0 0
    %3310 = vmatpush1.bf16.msra.mxu0 0
    %3311 = vmatprep.subr.bf16.mxu0 0
    %3312 = vmatpush1.bf16.msra.mxu0 0
    %3313 = vmatprep.subr.bf16.mxu0 0
    %3314 = vmatpush1.bf16.msra.mxu0 0
    %3315 = vmatprep.mubr.bf16.mxu0 0
    %3316 = vmatmul.mubr.bf16.gmra.mrb[0].mxu0 %v3240
    %v3317 = vpop.f32.mrb[0].mxu0
    %v3318 = vadd.f32 0.0, %v3317
    %v3319 = vpop.f32.mrb[0].mxu0
    %v3320 = vpop.f32.mrb[0].mxu0
    %v3321 = vadd.f32 0.0, %v3320
    %v3322 = vpop.f32.mrb[0].mxu0
    %3323 = vdwg.mxu0
    %3324 = vmatprep.subr.bf16.mxu0 0
    %3325 = vmatpush1.bf16.msra.mxu0 %v3111
    %3326 = vmatprep.subr.bf16.mxu0 0
    %3327 = vmatpush1.bf16.msra.mxu0 %v3112
    %3328 = vmatprep.subr.bf16.mxu0 0
    %3329 = vmatpush1.bf16.msra.mxu0 0
    %3330 = vmatprep.subr.bf16.mxu0 0
    %3331 = vmatpush1.bf16.msra.mxu0 0
    %3332 = vmatprep.subr.bf16.mxu0 0
    %3333 = vmatpush1.bf16.msra.mxu0 0
    %3334 = vmatprep.subr.bf16.mxu0 0
    %3335 = vmatpush1.bf16.msra.mxu0 0
    %3336 = vmatprep.subr.bf16.mxu0 0
    %3337 = vmatpush1.bf16.msra.mxu0 0
    %3338 = vmatprep.subr.bf16.mxu0 0
    %3339 = vmatpush1.bf16.msra.mxu0 0
    %3340 = vmatprep.subr.bf16.mxu0 0
    %3341 = vmatpush1.bf16.msra.mxu0 0
    %3342 = vmatprep.subr.bf16.mxu0 0
    %3343 = vmatpush1.bf16.msra.mxu0 0
    %3344 = vmatprep.subr.bf16.mxu0 0
    %3345 = vmatpush1.bf16.msra.mxu0 0
    %3346 = vmatprep.subr.bf16.mxu0 0
    %3347 = vmatpush1.bf16.msra.mxu0 0
    %3348 = vmatprep.subr.bf16.mxu0 0
    %3349 = vmatpush1.bf16.msra.mxu0 0
    %3350 = vmatprep.subr.bf16.mxu0 0
    %3351 = vmatpush1.bf16.msra.mxu0 0
    %3352 = vmatprep.subr.bf16.mxu0 0
    %3353 = vmatpush1.bf16.msra.mxu0 0
    %3354 = vmatprep.subr.bf16.mxu0 0
    %3355 = vmatpush1.bf16.msra.mxu0 0
    %3356 = vmatprep.mubr.bf16.mxu0 0
    %3357 = vmatmul.mubr.bf16.gmra.mrb[0].mxu0 %v3240
    %v3358 = vpop.f32.mrb[0].mxu0
    %v3359 = vadd.f32 0.0, %v3358
    %v3360 = vpop.f32.mrb[0].mxu0
    %v3361 = vpop.f32.mrb[0].mxu0
    %v3362 = vadd.f32 0.0, %v3361
    %v3363 = vpop.f32.mrb[0].mxu0
    %3364 = vdwg.mxu0
    %3365 = vst.msk [vmem:[#allocation5] sm:$0xff] %vm2599, %v3151
    %3366 = vst.msk [vmem:[#allocation5 + $0x8] sm:$0xff] %vm2599, %v3154
    %3367 = vst.msk [vmem:[#allocation5 + $0x10] sm:$0xff] %vm2599, %v3192
    %3368 = vst.msk [vmem:[#allocation5 + $0x18] sm:$0xff] %vm2599, %v3195
    %3369 = vst.msk [vmem:[#allocation5 + $0x20] sm:$0xff] %vm2599, %v3233
    %3370 = vst.msk [vmem:[#allocation5 + $0x28] sm:$0xff] %vm2599, %v3236
    %3371 = vst.msk [vmem:[#allocation5 + $0x30] sm:$0xff] %vm2599, %v3277
    %3372 = vst.msk [vmem:[#allocation5 + $0x38] sm:$0xff] %vm2599, %v3280
    %3373 = vst.msk [vmem:[#allocation5 + $0x40] sm:$0xff] %vm2599, %v3318
    %3374 = vst.msk [vmem:[#allocation5 + $0x48] sm:$0xff] %vm2599, %v3321
    %3375 = vst.msk [vmem:[#allocation5 + $0x50] sm:$0xff] %vm2599, %v3359
    %3376 = vst.msk [vmem:[#allocation5 + $0x58] sm:$0xff] %vm2599, %v3362
    // Predicated region
    $region22: #{a_call__.1} parent=1 // pred_check
      _
    $region23: #{a_call__.1} parent=1 // pred_check_branch
      %3378 = sbr.rel (0) target = $region25
    $region24: #{a_call__.1} parent=1 // pred_region
      %s3380 = ssub.s32 1536, 1536
      %3381 = vsyncadd [#allocation4], %s3380
      %s3382 = sshll.u32 [#allocation5], 4
      %s3383 = int_to_ptr.vmem [resolvable:$true] %s3382
      %3388 = dma.vmem_to_hbm [thread:$0]  %s3383, 1536, %s4, [#allocation4], 128, 128, 8
    $region25: #{a_call__.1} parent=1 // pred_fallthru
      _
    // Predicated region
    $region26: #{a_call__.1} parent=1 // pred_check
      _
    $region27: #{a_call__.1} parent=1 // pred_check_branch
      %3390 = sbr.rel (0) target = $region29
    $region28: #{a_call__.1} parent=1 // pred_region
      %3391 = dma.done [#allocation4], 1536
    $region29: #{a_call__.1} parent=1 // pred_fallthru
      _
    %3392 = vsyncpa [#allocation3], 1
    %3393 = vsyncpa [#allocation4], 1

</llo_original>
